<compile_context>
chip_gen: v7x
topology: tpu7x:2x2x1
jax: 0.10.0
libtpu: 0.0.40
codegen_flags: <defaults>
</compile_context>

<pallas_src>
import jax
import jax.numpy as jnp
from jax import lax
from jax.experimental import pallas as pl
from jax.experimental.pallas import tpu as pltpu


def binarize(x):
    return jnp.tanh(2.0 * x)


# -----------------------------------------------------------------------------
# Kernel
# -----------------------------------------------------------------------------
def bitmixer_kernel(x_ref, w1_ref, b1_ref, w2_ref, b2_ref,
                    w3_ref, b3_ref, w4_ref, b4_ref, o_ref):
    # x block: (Bt, L, E) f32.
    # w1: (H, L) bf16, b1: (H, 1) f32   -- token mix, stage 1
    # w2: (L, H) bf16, b2: (L, 1) f32   -- token mix, stage 2
    # w3: (E, H) bf16, b3: (1, H) f32   -- channel mix, stage 1
    # w4: (H, E) bf16, b4: (1, E) f32   -- channel mix, stage 2
    # All weights/biases already binarized (tanh(2*.)) in the wrapper.
    f32, bf16 = jnp.float32, jnp.bfloat16
    Bt, L, E = x_ref.shape

    x = x_ref[...]                                   # (Bt, L, E) f32
    xb = x.astype(bf16)

    # ---- token mixing on a (L, Bt*E) slab: wide-N dots, no HBM transpose ----
    if Bt == 1:
        xw = xb.reshape(L, E)
    else:
        # In-VMEM swizzle (b l e -> l (b e)); XLU has slack.
        xw = jnp.transpose(xb, (1, 0, 2)).reshape(L, Bt * E)

    z = jnp.dot(w1_ref[...], xw,
                preferred_element_type=f32) + b1_ref[...]            # (H, Bt*E)
    z = binarize(z)
    z = jnp.dot(w2_ref[...], z.astype(bf16),
                preferred_element_type=f32) + b2_ref[...]            # (L, Bt*E)
    z = binarize(z)
    if Bt == 1:
        zt = z.reshape(1, L, E)
    else:
        zt = jnp.transpose(z.reshape(L, Bt, E), (1, 0, 2))           # (Bt, L, E)
    u = binarize(zt + x)                                             # (Bt, L, E) f32

    # ---- channel mixing on the flattened (Bt*L, E) slab: wide-M dots ----
    uf = u.reshape(Bt * L, E)
    z = jnp.dot(uf.astype(bf16), w3_ref[...],
                preferred_element_type=f32) + b3_ref[...]            # (Bt*L, H)
    z = binarize(z)
    z = jnp.dot(z.astype(bf16), w4_ref[...],
                preferred_element_type=f32) + b4_ref[...]            # (Bt*L, E)
    out = binarize(z + uf)                                           # (Bt*L, E)
    o_ref[...] = out.reshape(Bt, L, E).astype(o_ref.dtype)


# -----------------------------------------------------------------------------
# Wrapper
# -----------------------------------------------------------------------------
def prepare_params(raw_params):
    """Binarize weights/biases once (f32 tanh), lay out for NN matmuls, cast
    weights to bf16 for the MXU. Raw params are in PyTorch (out, in) layout."""
    w1, b1, w2, b2, w3, b3, w4, b4 = raw_params
    f32, bf16 = jnp.float32, jnp.bfloat16
    bz = lambda t: binarize(t.astype(f32))
    H = w1.shape[0]
    L = w2.shape[0]
    E = w4.shape[0]
    return (
        bz(w1).astype(bf16),   bz(b1).reshape(H, 1),    # (H, L), (H, 1)
        bz(w2).astype(bf16),   bz(b2).reshape(L, 1),    # (L, H), (L, 1)
        bz(w3).T.astype(bf16), bz(b3).reshape(1, H),    # (E, H), (1, H)
        bz(w4).T.astype(bf16), bz(b4).reshape(1, E),    # (H, E), (1, E)
    )


def _pick_block_batch(B, max_block=8):
    """Largest divisor of B that is <= max_block while keeping grid length >= 2
    when possible (so both v7x TensorCores get work)."""
    target = max(1, min(max_block, B // 2)) if B >= 2 else 1
    for bt in range(target, 0, -1):
        if B % bt == 0:
            return bt
    return 1


def bitmixer_block(x, params, *, max_block_batch=8):
    B, L, E = x.shape
    H = 3 * E
    w1b, b1b, w2b, b2b, w3b, b3b, w4b, b4b = params

    Bt = _pick_block_batch(B, max_block_batch)
    grid = B // Bt

    cost = pl.CostEstimate(
        flops=8 * B * L * E * H,
        transcendentals=B * (H * E + L * H + 3 * L * E),
        bytes_accessed=(2 * B * L * E * 4                        # x + out (f32)
                        + 2 * (H * L + L * H + E * H + H * E)    # bf16 weights
                        + 4 * (2 * H + L + E)),                  # f32 biases
    )

    def build(single_buffer_weights):
        def resident(a):
            # Grid-invariant operand: fetched once, kept resident.
            kwargs = {}
            if single_buffer_weights:
                kwargs["pipeline_mode"] = pl.Buffered(1)
            return pl.BlockSpec(a.shape, lambda i: (0, 0), **kwargs)

        return pl.pallas_call(
            bitmixer_kernel,
            out_shape=jax.ShapeDtypeStruct((B, L, E), x.dtype),
            grid_spec=pltpu.PrefetchScalarGridSpec(
                num_scalar_prefetch=0,
                grid=(grid,),
                in_specs=[
                    pl.BlockSpec((Bt, L, E), lambda i: (i, 0, 0)),   # x
                    resident(w1b), resident(b1b),
                    resident(w2b), resident(b2b),
                    resident(w3b), resident(b3b),
                    resident(w4b), resident(b4b),
                ],
                out_specs=pl.BlockSpec((Bt, L, E), lambda i: (i, 0, 0)),
            ),
            compiler_params=pltpu.CompilerParams(
                dimension_semantics=("parallel",),
                vmem_limit_bytes=32 * 1024 * 1024,
            ),
            cost_estimate=cost,
        )

    args = (x, w1b, b1b, w2b, b2b, w3b, b3b, w4b, b4b)
    try:
        return build(single_buffer_weights=True)(*args)
    except Exception:
        # Fallback if this Pallas build rejects single-buffered BlockSpecs.
        return build(single_buffer_weights=False)(*args)


# -----------------------------------------------------------------------------
# References (plain JAX, mirror the PyTorch forward exactly)
# -----------------------------------------------------------------------------
def bitmixer_reference(x, raw_params, mxu_dtype=jnp.float32):
    """Reference from raw PyTorch-layout weights.

    mxu_dtype=jnp.float32  -> exact f32 semantics of the original module.
    mxu_dtype=jnp.bfloat16 -> same bf16 MXU-operand casts as the kernel (tight check)."""
    w1, b1, w2, b2, w3, b3, w4, b4 = raw_params
    f32 = jnp.float32

    def bw(w):  # binarize in f32, then cast for the MXU
        return binarize(w.astype(f32)).astype(mxu_dtype)

    def dot(a, b):  # (B, M, K) @ (K, N) -> (B, M, N), f32 accumulation
        return lax.dot_general(a.astype(mxu_dtype), b,
                               (((a.ndim - 1,), (0,)), ((), ())),
                               preferred_element_type=f32)

    z = jnp.swapaxes(x, 1, 2)                                   # (B, E, L)
    z = dot(z, bw(w1).T) + binarize(b1.astype(f32))
    z = binarize(z)
    z = dot(z, bw(w2).T) + binarize(b2.astype(f32))
    z = binarize(z)
    u = binarize(jnp.swapaxes(z, 1, 2) + x)                     # (B, L, E)
    z = dot(u, bw(w3).T) + binarize(b3.astype(f32))
    z = binarize(z)
    z = dot(z, bw(w4).T) + binarize(b4.astype(f32))
    return binarize(z + u)


def init_linear(kw, kb, in_features, out_features):
    """Deterministic init matching nn.Linear's U(-1/sqrt(in), 1/sqrt(in))."""
    bound = 1.0 / jnp.sqrt(jnp.float32(in_features))
    w = jax.random.uniform(kw, (out_features, in_features), jnp.float32,
                           -bound, bound)   # PyTorch layout (out, in)
    b = jax.random.uniform(kb, (out_features,), jnp.float32, -bound, bound)
    return w, b


if __name__ == "__main__":
    key = jax.random.PRNGKey(0)
    B, L, E = 2, 128, 128           # batch, sequence_length, embedding_dimension
    H = 3 * E

    keys = jax.random.split(key, 9)
    w1, b1 = init_linear(keys[0], keys[1], L, H)   # linear_1: L  -> 3E
    w2, b2 = init_linear(keys[2], keys[3], H, L)   # linear_2: 3E -> L
    w3, b3 = init_linear(keys[4], keys[5], E, H)   # linear_3: E  -> 3E
    w4, b4 = init_linear(keys[6], keys[7], H, E)   # linear_4: 3E -> E
    raw_params = (w1, b1, w2, b2, w3, b3, w4, b4)

    x = jax.random.normal(keys[8], (B, L, E), jnp.float32)

    params = prepare_params(raw_params)
    out = jax.block_until_ready(bitmixer_block(x, params))
    assert out.shape == (B, L, E)
    assert bool(jnp.all(jnp.isfinite(out)))
    assert float(jnp.max(jnp.abs(out))) <= 1.0 + 1e-6   # tanh-bounded outputs

    # Tight check: identical math (pre-binarized bf16 weights, bf16 MXU operands,
    # f32 accumulation, f32 tanh) expressed in plain JAX.
    ref_bf16 = bitmixer_reference(x, raw_params, mxu_dtype=jnp.bfloat16)
    err_tight = float(jnp.max(jnp.abs(out - ref_bf16)))
    assert err_tight < 6e-3, f"mismatch vs bf16-matched reference: {err_tight}"

    # Loose sanity vs the exact-f32 module: bf16 MXU quantization is amplified by
    # the tanh(2x) chain, so only mean / loose-max bounds are meaningful here.  A
    # real semantics bug (wrong layout, wrong bias, missing residual) would give
    # O(1) mean error and is still caught.
    ref_f32 = bitmixer_reference(x, raw_params, mxu_dtype=jnp.float32)
    diff = jnp.abs(out - ref_f32)
    mean_err = float(jnp.mean(diff))
    max_err = float(jnp.max(diff))
    assert mean_err < 3e-2, f"mean diff vs f32 module reference too large: {mean_err}"
    assert max_err < 0.5, f"max diff vs f32 module reference too large: {max_err}"

    print("KERNEL_OK")
</pallas_src>

<mosaic_0001>
module attributes {stable_mosaic.version = 11 : i64} {
  func.func @bitmixer_kernel(%arg0: i32, %arg1: memref<1x128x128xf32, #tpu.memory_space<vmem>>, %arg2: memref<384x128xbf16, #tpu.memory_space<vmem>>, %arg3: memref<384x1xf32, #tpu.memory_space<vmem>>, %arg4: memref<128x384xbf16, #tpu.memory_space<vmem>>, %arg5: memref<128x1xf32, #tpu.memory_space<vmem>>, %arg6: memref<128x384xbf16, #tpu.memory_space<vmem>>, %arg7: memref<1x384xf32, #tpu.memory_space<vmem>>, %arg8: memref<384x128xbf16, #tpu.memory_space<vmem>>, %arg9: memref<1x128xf32, #tpu.memory_space<vmem>>, %arg10: memref<1x128x128xf32, #tpu.memory_space<vmem>>) attributes {dimension_semantics = [#tpu.dimension_semantics<parallel>], iteration_bounds = array<i64: 2>, scalar_prefetch = 0 : i64, scratch_operands = 0 : i64, tpu.core_type = #tpu.core_type<tc>, window_params = [{transform_indices = @transform_0, window_bounds = array<i64: 1, 128, 128>}, {pipeline_mode = #tpu.pipeline_mode<synchronous>, transform_indices = @transform_1, window_bounds = array<i64: 384, 128>}, {pipeline_mode = #tpu.pipeline_mode<synchronous>, transform_indices = @transform_2, window_bounds = array<i64: 384, 1>}, {pipeline_mode = #tpu.pipeline_mode<synchronous>, transform_indices = @transform_3, window_bounds = array<i64: 128, 384>}, {pipeline_mode = #tpu.pipeline_mode<synchronous>, transform_indices = @transform_4, window_bounds = array<i64: 128, 1>}, {pipeline_mode = #tpu.pipeline_mode<synchronous>, transform_indices = @transform_5, window_bounds = array<i64: 128, 384>}, {pipeline_mode = #tpu.pipeline_mode<synchronous>, transform_indices = @transform_6, window_bounds = array<i64: 1, 384>}, {pipeline_mode = #tpu.pipeline_mode<synchronous>, transform_indices = @transform_7, window_bounds = array<i64: 384, 128>}, {pipeline_mode = #tpu.pipeline_mode<synchronous>, transform_indices = @transform_8, window_bounds = array<i64: 1, 128>}, {transform_indices = @transform_9, window_bounds = array<i64: 1, 128, 128>}]} {
    %c0 = arith.constant 0 : index
    %c0_0 = arith.constant 0 : index
    %c0_1 = arith.constant 0 : index
    %0 = vector.load %arg1[%c0, %c0_0, %c0_1] : memref<1x128x128xf32, #tpu.memory_space<vmem>>, vector<1x128x128xf32>
    %1 = arith.truncf %0 : vector<1x128x128xf32> to vector<1x128x128xbf16>
    %2 = vector.shape_cast %1 : vector<1x128x128xbf16> to vector<128x128xbf16>
    %c0_2 = arith.constant 0 : index
    %c0_3 = arith.constant 0 : index
    %3 = vector.load %arg2[%c0_2, %c0_3] : memref<384x128xbf16, #tpu.memory_space<vmem>>, vector<384x128xbf16>
    %cst = arith.constant dense<0.000000e+00> : vector<384x128xf32>
    %4 = tpu.matmul %3, %2, %cst {dimension_numbers = #tpu.dot_dimension_numbers<[1], [0], [0], [1], [0, 0, 1, 1], [], []>} : vector<384x128xbf16>, vector<128x128xbf16>, vector<384x128xf32> -> vector<384x128xf32>
    %c0_4 = arith.constant 0 : index
    %c0_5 = arith.constant 0 : index
    %5 = vector.load %arg3[%c0_4, %c0_5] : memref<384x1xf32, #tpu.memory_space<vmem>>, vector<384x1xf32>
    %6 = vector.broadcast %5 : vector<384x1xf32> to vector<384x128xf32>
    %7 = arith.addf %4, %6 : vector<384x128xf32>
    %cst_6 = arith.constant 2.000000e+00 : f32
    %8 = vector.broadcast %cst_6 : f32 to vector<384x128xf32>
    %9 = arith.mulf %8, %7 : vector<384x128xf32>
    %10 = math.tanh %9 : vector<384x128xf32>
    %c0_7 = arith.constant 0 : index
    %c0_8 = arith.constant 0 : index
    %11 = vector.load %arg4[%c0_7, %c0_8] : memref<128x384xbf16, #tpu.memory_space<vmem>>, vector<128x384xbf16>
    %12 = arith.truncf %10 : vector<384x128xf32> to vector<384x128xbf16>
    %cst_9 = arith.constant dense<0.000000e+00> : vector<128x128xf32>
    %13 = tpu.matmul %11, %12, %cst_9 {dimension_numbers = #tpu.dot_dimension_numbers<[1], [0], [0], [1], [0, 0, 1, 1], [], []>} : vector<128x384xbf16>, vector<384x128xbf16>, vector<128x128xf32> -> vector<128x128xf32>
    %c0_10 = arith.constant 0 : index
    %c0_11 = arith.constant 0 : index
    %14 = vector.load %arg5[%c0_10, %c0_11] : memref<128x1xf32, #tpu.memory_space<vmem>>, vector<128x1xf32>
    %15 = vector.broadcast %14 : vector<128x1xf32> to vector<128x128xf32>
    %16 = arith.addf %13, %15 : vector<128x128xf32>
    %cst_12 = arith.constant 2.000000e+00 : f32
    %17 = vector.broadcast %cst_12 : f32 to vector<128x128xf32>
    %18 = arith.mulf %17, %16 : vector<128x128xf32>
    %19 = math.tanh %18 : vector<128x128xf32>
    %20 = vector.shape_cast %19 : vector<128x128xf32> to vector<1x128x128xf32>
    %21 = arith.addf %20, %0 : vector<1x128x128xf32>
    %cst_13 = arith.constant 2.000000e+00 : f32
    %22 = vector.broadcast %cst_13 : f32 to vector<1x128x128xf32>
    %23 = arith.mulf %22, %21 : vector<1x128x128xf32>
    %24 = math.tanh %23 : vector<1x128x128xf32>
    %25 = vector.shape_cast %24 : vector<1x128x128xf32> to vector<128x128xf32>
    %26 = arith.truncf %25 : vector<128x128xf32> to vector<128x128xbf16>
    %c0_14 = arith.constant 0 : index
    %c0_15 = arith.constant 0 : index
    %27 = vector.load %arg6[%c0_14, %c0_15] : memref<128x384xbf16, #tpu.memory_space<vmem>>, vector<128x384xbf16>
    %cst_16 = arith.constant dense<0.000000e+00> : vector<128x384xf32>
    %28 = tpu.matmul %26, %27, %cst_16 {dimension_numbers = #tpu.dot_dimension_numbers<[1], [0], [0], [1], [0, 0, 1, 1], [], []>} : vector<128x128xbf16>, vector<128x384xbf16>, vector<128x384xf32> -> vector<128x384xf32>
    %c0_17 = arith.constant 0 : index
    %c0_18 = arith.constant 0 : index
    %29 = vector.load %arg7[%c0_17, %c0_18] : memref<1x384xf32, #tpu.memory_space<vmem>>, vector<1x384xf32>
    %30 = vector.broadcast %29 : vector<1x384xf32> to vector<128x384xf32>
    %31 = arith.addf %28, %30 : vector<128x384xf32>
    %cst_19 = arith.constant 2.000000e+00 : f32
    %32 = vector.broadcast %cst_19 : f32 to vector<128x384xf32>
    %33 = arith.mulf %32, %31 : vector<128x384xf32>
    %34 = math.tanh %33 : vector<128x384xf32>
    %35 = arith.truncf %34 : vector<128x384xf32> to vector<128x384xbf16>
    %c0_20 = arith.constant 0 : index
    %c0_21 = arith.constant 0 : index
    %36 = vector.load %arg8[%c0_20, %c0_21] : memref<384x128xbf16, #tpu.memory_space<vmem>>, vector<384x128xbf16>
    %cst_22 = arith.constant dense<0.000000e+00> : vector<128x128xf32>
    %37 = tpu.matmul %35, %36, %cst_22 {dimension_numbers = #tpu.dot_dimension_numbers<[1], [0], [0], [1], [0, 0, 1, 1], [], []>} : vector<128x384xbf16>, vector<384x128xbf16>, vector<128x128xf32> -> vector<128x128xf32>
    %c0_23 = arith.constant 0 : index
    %c0_24 = arith.constant 0 : index
    %38 = vector.load %arg9[%c0_23, %c0_24] : memref<1x128xf32, #tpu.memory_space<vmem>>, vector<1x128xf32>
    %39 = vector.broadcast %38 : vector<1x128xf32> to vector<128x128xf32>
    %40 = arith.addf %37, %39 : vector<128x128xf32>
    %41 = arith.addf %40, %25 : vector<128x128xf32>
    %cst_25 = arith.constant 2.000000e+00 : f32
    %42 = vector.broadcast %cst_25 : f32 to vector<128x128xf32>
    %43 = arith.mulf %42, %41 : vector<128x128xf32>
    %44 = math.tanh %43 : vector<128x128xf32>
    %45 = vector.shape_cast %44 : vector<128x128xf32> to vector<1x128x128xf32>
    %c0_26 = arith.constant 0 : index
    %c0_27 = arith.constant 0 : index
    %c0_28 = arith.constant 0 : index
    %46 = vector.load %arg10[%c0_26, %c0_27, %c0_28] : memref<1x128x128xf32, #tpu.memory_space<vmem>>, vector<1x128x128xf32>
    tpu.vector_store %arg10[%c0_26, %c0_27, %c0_28], %45 {strides = array<i32>} : memref<1x128x128xf32, #tpu.memory_space<vmem>>, vector<1x128x128xf32>,
    return
  }
  func.func @transform_0(%arg0: i32) -> (i32, i32, i32) {
    %c0_i32 = arith.constant 0 : i32
    %c0_i32_0 = arith.constant 0 : i32
    %c0_i32_1 = arith.constant 0 : i32
    return %arg0, %c0_i32, %c0_i32_0 : i32, i32, i32
  }
  func.func @transform_1(%arg0: i32) -> (i32, i32) {
    %c0_i32 = arith.constant 0 : i32
    %c0_i32_0 = arith.constant 0 : i32
    %c0_i32_1 = arith.constant 0 : i32
    return %c0_i32, %c0_i32_0 : i32, i32
  }
  func.func @transform_2(%arg0: i32) -> (i32, i32) {
    %c0_i32 = arith.constant 0 : i32
    %c0_i32_0 = arith.constant 0 : i32
    %c0_i32_1 = arith.constant 0 : i32
    return %c0_i32, %c0_i32_0 : i32, i32
  }
  func.func @transform_3(%arg0: i32) -> (i32, i32) {
    %c0_i32 = arith.constant 0 : i32
    %c0_i32_0 = arith.constant 0 : i32
    %c0_i32_1 = arith.constant 0 : i32
    return %c0_i32, %c0_i32_0 : i32, i32
  }
  func.func @transform_4(%arg0: i32) -> (i32, i32) {
    %c0_i32 = arith.constant 0 : i32
    %c0_i32_0 = arith.constant 0 : i32
    %c0_i32_1 = arith.constant 0 : i32
    return %c0_i32, %c0_i32_0 : i32, i32
  }
  func.func @transform_5(%arg0: i32) -> (i32, i32) {
    %c0_i32 = arith.constant 0 : i32
    %c0_i32_0 = arith.constant 0 : i32
    %c0_i32_1 = arith.constant 0 : i32
    return %c0_i32, %c0_i32_0 : i32, i32
  }
  func.func @transform_6(%arg0: i32) -> (i32, i32) {
    %c0_i32 = arith.constant 0 : i32
    %c0_i32_0 = arith.constant 0 : i32
    %c0_i32_1 = arith.constant 0 : i32
    return %c0_i32, %c0_i32_0 : i32, i32
  }
  func.func @transform_7(%arg0: i32) -> (i32, i32) {
    %c0_i32 = arith.constant 0 : i32
    %c0_i32_0 = arith.constant 0 : i32
    %c0_i32_1 = arith.constant 0 : i32
    return %c0_i32, %c0_i32_0 : i32, i32
  }
  func.func @transform_8(%arg0: i32) -> (i32, i32) {
    %c0_i32 = arith.constant 0 : i32
    %c0_i32_0 = arith.constant 0 : i32
    %c0_i32_1 = arith.constant 0 : i32
    return %c0_i32, %c0_i32_0 : i32, i32
  }
  func.func @transform_9(%arg0: i32) -> (i32, i32, i32) {
    %c0_i32 = arith.constant 0 : i32
    %c0_i32_0 = arith.constant 0 : i32
    %c0_i32_1 = arith.constant 0 : i32
    return %arg0, %c0_i32, %c0_i32_0 : i32, i32, i32
  }
}

module attributes {stable_mosaic.version = 11 : i64} {
  func.func @bitmixer_kernel(%arg0: i32, %arg1: memref<1x128x128xf32, #tpu.memory_space<vmem>>, %arg2: memref<384x128xbf16, #tpu.memory_space<vmem>>, %arg3: memref<384x1xf32, #tpu.memory_space<vmem>>, %arg4: memref<128x384xbf16, #tpu.memory_space<vmem>>, %arg5: memref<128x1xf32, #tpu.memory_space<vmem>>, %arg6: memref<128x384xbf16, #tpu.memory_space<vmem>>, %arg7: memref<1x384xf32, #tpu.memory_space<vmem>>, %arg8: memref<384x128xbf16, #tpu.memory_space<vmem>>, %arg9: memref<1x128xf32, #tpu.memory_space<vmem>>, %arg10: memref<1x128x128xf32, #tpu.memory_space<vmem>>) attributes {dimension_semantics = [#tpu.dimension_semantics<parallel>], iteration_bounds = array<i64: 2>, scalar_prefetch = 0 : i64, scratch_operands = 0 : i64, tpu.core_type = #tpu.core_type<tc>, window_params = [{transform_indices = @transform_0, window_bounds = array<i64: 1, 128, 128>}, {pipeline_mode = #tpu.pipeline_mode<synchronous>, transform_indices = @transform_1, window_bounds = array<i64: 384, 128>}, {pipeline_mode = #tpu.pipeline_mode<synchronous>, transform_indices = @transform_2, window_bounds = array<i64: 384, 1>}, {pipeline_mode = #tpu.pipeline_mode<synchronous>, transform_indices = @transform_3, window_bounds = array<i64: 128, 384>}, {pipeline_mode = #tpu.pipeline_mode<synchronous>, transform_indices = @transform_4, window_bounds = array<i64: 128, 1>}, {pipeline_mode = #tpu.pipeline_mode<synchronous>, transform_indices = @transform_5, window_bounds = array<i64: 128, 384>}, {pipeline_mode = #tpu.pipeline_mode<synchronous>, transform_indices = @transform_6, window_bounds = array<i64: 1, 384>}, {pipeline_mode = #tpu.pipeline_mode<synchronous>, transform_indices = @transform_7, window_bounds = array<i64: 384, 128>}, {pipeline_mode = #tpu.pipeline_mode<synchronous>, transform_indices = @transform_8, window_bounds = array<i64: 1, 128>}, {transform_indices = @transform_9, window_bounds = array<i64: 1, 128, 128>}]} {
    %c0 = arith.constant 0 : index
    %c0_0 = arith.constant 0 : index
    %c0_1 = arith.constant 0 : index
    %0 = vector.load %arg1[%c0, %c0_0, %c0_1] : memref<1x128x128xf32, #tpu.memory_space<vmem>>, vector<1x128x128xf32>
    %1 = arith.truncf %0 : vector<1x128x128xf32> to vector<1x128x128xbf16>
    %2 = vector.shape_cast %1 : vector<1x128x128xbf16> to vector<128x128xbf16>
    %c0_2 = arith.constant 0 : index
    %c0_3 = arith.constant 0 : index
    %3 = vector.load %arg2[%c0_2, %c0_3] : memref<384x128xbf16, #tpu.memory_space<vmem>>, vector<384x128xbf16>
    %cst = arith.constant dense<0.000000e+00> : vector<384x128xf32>
    %4 = tpu.matmul %3, %2, %cst {dimension_numbers = #tpu.dot_dimension_numbers<[1], [0], [0], [1], [0, 0, 1, 1], [], []>} : vector<384x128xbf16>, vector<128x128xbf16>, vector<384x128xf32> -> vector<384x128xf32>
    %c0_4 = arith.constant 0 : index
    %c0_5 = arith.constant 0 : index
    %5 = vector.load %arg3[%c0_4, %c0_5] : memref<384x1xf32, #tpu.memory_space<vmem>>, vector<384x1xf32>
    %6 = vector.broadcast %5 : vector<384x1xf32> to vector<384x128xf32>
    %7 = arith.addf %4, %6 : vector<384x128xf32>
    %cst_6 = arith.constant 2.000000e+00 : f32
    %8 = vector.broadcast %cst_6 : f32 to vector<384x128xf32>
    %9 = arith.mulf %8, %7 : vector<384x128xf32>
    %10 = math.tanh %9 : vector<384x128xf32>
    %c0_7 = arith.constant 0 : index
    %c0_8 = arith.constant 0 : index
    %11 = vector.load %arg4[%c0_7, %c0_8] : memref<128x384xbf16, #tpu.memory_space<vmem>>, vector<128x384xbf16>
    %12 = arith.truncf %10 : vector<384x128xf32> to vector<384x128xbf16>
    %cst_9 = arith.constant dense<0.000000e+00> : vector<128x128xf32>
    %13 = tpu.matmul %11, %12, %cst_9 {dimension_numbers = #tpu.dot_dimension_numbers<[1], [0], [0], [1], [0, 0, 1, 1], [], []>} : vector<128x384xbf16>, vector<384x128xbf16>, vector<128x128xf32> -> vector<128x128xf32>
    %c0_10 = arith.constant 0 : index
    %c0_11 = arith.constant 0 : index
    %14 = vector.load %arg5[%c0_10, %c0_11] : memref<128x1xf32, #tpu.memory_space<vmem>>, vector<128x1xf32>
    %15 = vector.broadcast %14 : vector<128x1xf32> to vector<128x128xf32>
    %16 = arith.addf %13, %15 : vector<128x128xf32>
    %cst_12 = arith.constant 2.000000e+00 : f32
    %17 = vector.broadcast %cst_12 : f32 to vector<128x128xf32>
    %18 = arith.mulf %17, %16 : vector<128x128xf32>
    %19 = math.tanh %18 : vector<128x128xf32>
    %20 = vector.shape_cast %19 : vector<128x128xf32> to vector<1x128x128xf32>
    %21 = arith.addf %20, %0 : vector<1x128x128xf32>
    %cst_13 = arith.constant 2.000000e+00 : f32
    %22 = vector.broadcast %cst_13 : f32 to vector<1x128x128xf32>
    %23 = arith.mulf %22, %21 : vector<1x128x128xf32>
    %24 = math.tanh %23 : vector<1x128x128xf32>
    %25 = vector.shape_cast %24 : vector<1x128x128xf32> to vector<128x128xf32>
    %26 = arith.truncf %25 : vector<128x128xf32> to vector<128x128xbf16>
    %c0_14 = arith.constant 0 : index
    %c0_15 = arith.constant 0 : index
    %27 = vector.load %arg6[%c0_14, %c0_15] : memref<128x384xbf16, #tpu.memory_space<vmem>>, vector<128x384xbf16>
    %cst_16 = arith.constant dense<0.000000e+00> : vector<128x384xf32>
    %28 = tpu.matmul %26, %27, %cst_16 {dimension_numbers = #tpu.dot_dimension_numbers<[1], [0], [0], [1], [0, 0, 1, 1], [], []>} : vector<128x128xbf16>, vector<128x384xbf16>, vector<128x384xf32> -> vector<128x384xf32>
    %c0_17 = arith.constant 0 : index
    %c0_18 = arith.constant 0 : index
    %29 = vector.load %arg7[%c0_17, %c0_18] : memref<1x384xf32, #tpu.memory_space<vmem>>, vector<1x384xf32>
    %30 = vector.broadcast %29 : vector<1x384xf32> to vector<128x384xf32>
    %31 = arith.addf %28, %30 : vector<128x384xf32>
    %cst_19 = arith.constant 2.000000e+00 : f32
    %32 = vector.broadcast %cst_19 : f32 to vector<128x384xf32>
    %33 = arith.mulf %32, %31 : vector<128x384xf32>
    %34 = math.tanh %33 : vector<128x384xf32>
    %35 = arith.truncf %34 : vector<128x384xf32> to vector<128x384xbf16>
    %c0_20 = arith.constant 0 : index
    %c0_21 = arith.constant 0 : index
    %36 = vector.load %arg8[%c0_20, %c0_21] : memref<384x128xbf16, #tpu.memory_space<vmem>>, vector<384x128xbf16>
    %cst_22 = arith.constant dense<0.000000e+00> : vector<128x128xf32>
    %37 = tpu.matmul %35, %36, %cst_22 {dimension_numbers = #tpu.dot_dimension_numbers<[1], [0], [0], [1], [0, 0, 1, 1], [], []>} : vector<128x384xbf16>, vector<384x128xbf16>, vector<128x128xf32> -> vector<128x128xf32>
    %c0_23 = arith.constant 0 : index
    %c0_24 = arith.constant 0 : index
    %38 = vector.load %arg9[%c0_23, %c0_24] : memref<1x128xf32, #tpu.memory_space<vmem>>, vector<1x128xf32>
    %39 = vector.broadcast %38 : vector<1x128xf32> to vector<128x128xf32>
    %40 = arith.addf %37, %39 : vector<128x128xf32>
    %41 = arith.addf %40, %25 : vector<128x128xf32>
    %cst_25 = arith.constant 2.000000e+00 : f32
    %42 = vector.broadcast %cst_25 : f32 to vector<128x128xf32>
    %43 = arith.mulf %42, %41 : vector<128x128xf32>
    %44 = math.tanh %43 : vector<128x128xf32>
    %45 = vector.shape_cast %44 : vector<128x128xf32> to vector<1x128x128xf32>
    %c0_26 = arith.constant 0 : index
    %c0_27 = arith.constant 0 : index
    %c0_28 = arith.constant 0 : index
    %46 = vector.load %arg10[%c0_26, %c0_27, %c0_28] : memref<1x128x128xf32, #tpu.memory_space<vmem>>, vector<1x128x128xf32>
    tpu.vector_store %arg10[%c0_26, %c0_27, %c0_28], %45 {strides = array<i32>} : memref<1x128x128xf32, #tpu.memory_space<vmem>>, vector<1x128x128xf32>,
    return
  }
  func.func @transform_0(%arg0: i32) -> (i32, i32, i32) {
    %c0_i32 = arith.constant 0 : i32
    %c0_i32_0 = arith.constant 0 : i32
    %c0_i32_1 = arith.constant 0 : i32
    return %arg0, %c0_i32, %c0_i32_0 : i32, i32, i32
  }
  func.func @transform_1(%arg0: i32) -> (i32, i32) {
    %c0_i32 = arith.constant 0 : i32
    %c0_i32_0 = arith.constant 0 : i32
    %c0_i32_1 = arith.constant 0 : i32
    return %c0_i32, %c0_i32_0 : i32, i32
  }
  func.func @transform_2(%arg0: i32) -> (i32, i32) {
    %c0_i32 = arith.constant 0 : i32
    %c0_i32_0 = arith.constant 0 : i32
    %c0_i32_1 = arith.constant 0 : i32
    return %c0_i32, %c0_i32_0 : i32, i32
  }
  func.func @transform_3(%arg0: i32) -> (i32, i32) {
    %c0_i32 = arith.constant 0 : i32
    %c0_i32_0 = arith.constant 0 : i32
    %c0_i32_1 = arith.constant 0 : i32
    return %c0_i32, %c0_i32_0 : i32, i32
  }
  func.func @transform_4(%arg0: i32) -> (i32, i32) {
    %c0_i32 = arith.constant 0 : i32
    %c0_i32_0 = arith.constant 0 : i32
    %c0_i32_1 = arith.constant 0 : i32
    return %c0_i32, %c0_i32_0 : i32, i32
  }
  func.func @transform_5(%arg0: i32) -> (i32, i32) {
    %c0_i32 = arith.constant 0 : i32
    %c0_i32_0 = arith.constant 0 : i32
    %c0_i32_1 = arith.constant 0 : i32
    return %c0_i32, %c0_i32_0 : i32, i32
  }
  func.func @transform_6(%arg0: i32) -> (i32, i32) {
    %c0_i32 = arith.constant 0 : i32
    %c0_i32_0 = arith.constant 0 : i32
    %c0_i32_1 = arith.constant 0 : i32
    return %c0_i32, %c0_i32_0 : i32, i32
  }
  func.func @transform_7(%arg0: i32) -> (i32, i32) {
    %c0_i32 = arith.constant 0 : i32
    %c0_i32_0 = arith.constant 0 : i32
    %c0_i32_1 = arith.constant 0 : i32
    return %c0_i32, %c0_i32_0 : i32, i32
  }
  func.func @transform_8(%arg0: i32) -> (i32, i32) {
    %c0_i32 = arith.constant 0 : i32
    %c0_i32_0 = arith.constant 0 : i32
    %c0_i32_1 = arith.constant 0 : i32
    return %c0_i32, %c0_i32_0 : i32, i32
  }
  func.func @transform_9(%arg0: i32) -> (i32, i32, i32) {
    %c0_i32 = arith.constant 0 : i32
    %c0_i32_0 = arith.constant 0 : i32
    %c0_i32_1 = arith.constant 0 : i32
    return %arg0, %c0_i32, %c0_i32_0 : i32, i32, i32
  }
}

</mosaic_0001>

<llo_original>
// kernel: tpu_custom_call.1
$region0: #{tpu_custom_call.1}
  #allocation0 [shape = 'u32[]', space=smem, size = 0x4, offset = 0x4, fixed_abs, tag = 'smem constant byte address 0x4 - core index']
  #allocation1 [shape = 'u32[144,128]{1,0:T(1,128)}', space=vmem, size = 0x12000, scoped, tag = 'internal scratch']
  %s0 = inlined_call_operand.vmem [shape: f32[2,128,128], index: 0, kind: input, shape index: {}]
  %s1 = inlined_call_operand.vmem [shape: bf16[384,128], index: 1, kind: input, shape index: {}]
  %s2 = inlined_call_operand.vmem [shape: f32[384,1], index: 2, kind: input, shape index: {}]
  %s3 = inlined_call_operand.hbm [shape: bf16[128,384], index: 3, kind: input, shape index: {}]
  %s4 = inlined_call_operand.vmem [shape: f32[128,1], index: 4, kind: input, shape index: {}]
  %s5 = inlined_call_operand.hbm [shape: bf16[128,384], index: 5, kind: input, shape index: {}]
  %s6 = inlined_call_operand.vmem [shape: f32[1,384], index: 6, kind: input, shape index: {}]
  %s7 = inlined_call_operand.hbm [shape: bf16[384,128], index: 7, kind: input, shape index: {}]
  %s8 = inlined_call_operand.vmem [shape: f32[1,128], index: 8, kind: input, shape index: {}]
  %s9 = inlined_call_operand.hbm [shape: f32[2,128,128], index: 9, kind: output, shape index: {}]
  %s10 = sld [smem:[#allocation0]]
  $region81: #{tpu_custom_call.1} parent=0
    _
  %s12 = ssub.s32 1, %s10
  %s13 = scalar_select 0, %s12, %s10
  $region1: #{tpu_custom_call.1} parent=0
    #allocation2 [shape = 'u8[98304]{0}', space=vmem, size = 0x18000, scoped, tag = 'input window, operand 3, single buffered']
    #allocation3 [shape = 's32[2]{0}', space=sflag, size = 0x8, scoped, tag = 'scoped memory for tpu_custom_call.1']
    #allocation4 [shape = 's32[2]{0}', space=sflag, size = 0x8, scoped, tag = 'scoped memory for tpu_custom_call.1']
    #allocation5 [shape = 'u8[98304]{0}', space=vmem, size = 0x18000, scoped, tag = 'input window, operand 5, single buffered']
    #allocation6 [shape = 's32[1]{0}', space=sflag, size = 0x4, scoped, tag = 'scoped memory for tpu_custom_call.1']
    #allocation7 [shape = 'u8[98304]{0}', space=vmem, size = 0x18000, scoped, tag = 'input window, operand 7, single buffered']
    #allocation8 [shape = 'u8[131072]{0}', space=vmem, size = 0x20000, scoped, tag = 'output window, operand 0']
    %14 = vsyncpa [#allocation3], 0
    %15 = vsyncpa [#allocation6], 0
    %16 = vsyncpa [#allocation4], 0
    %s17 = scalar_lea.sflag [#allocation4], 1
    %18 = vsyncpa %s17, 0
    loop: start=0, step=1, limit=4
    $region2: #{tpu_custom_call.1} parent=1 // loop_pre_header
      _
    $region3: #{tpu_custom_call.1} parent=1 // loop_header
      %s20 = sphi 0, %s24
      %p21 = scmp.ge.s32.totalorder %s20, 4
      %s30 = sphi 0, %s32
      %s33 = sphi 0, %s30
      %s34 = sphi 0, %s33
      %s50 = sphi 0, %s34
      %s54 = sphi 0, %s54
      %s56 = sphi 0, %s54
      %s57 = sphi 0, %s56
      %s71 = sphi 0, %s57
      %s75 = sphi 0, %s75
      %s77 = sphi 0, %s75
      %s78 = sphi 0, %s77
      %s92 = sphi 0, %s78
      %s96 = sphi 0, %s96
      %s98 = sphi 0, %s96
      %s99 = sphi 0, %s98
      %s113 = sphi 0, %s99
      %s117 = sphi 0, %s117
      %s119 = sphi 0, %s117
      %s120 = sphi 0, %s119
      %s134 = sphi 0, %s120
      %s138 = sphi 0, %s138
      %s140 = sphi 0, %s138
      %s141 = sphi 0, %s140
      %s155 = sphi 0, %s141
      %s159 = sphi 0, %s159
      %s161 = sphi 0, %s159
      %s162 = sphi 0, %s161
      %s176 = sphi 0, %s162
      %s180 = sphi 0, %s180
      %s182 = sphi 0, %s180
      %s183 = sphi 0, %s182
      %s197 = sphi 0, %s183
      %s201 = sphi 0, %s201
      %s203 = sphi 0, %s201
      %s204 = sphi 0, %s203
      %s218 = sphi 0, %s204
      %s224 = sphi 0, %s226
      %s227 = sphi 0, %s224
      %s228 = sphi 0, %s227
      %s244 = sphi 0, %s228
    $region4: #{tpu_custom_call.1} parent=1 // loop_header_branch
      %23 = sbr.rel (%p21) target = $region8
    $region5: #{tpu_custom_call.1} parent=1 // loop_body
      %s25 = ssub.s32 %s20, 1
      %s26 = ssub.s32 %s20, 2
      %s27 = sadd.s32 %s20, 1
      %s28 = ssub.s32 %s20, %s27
      %p29 = scmp.eq.s32.totalorder %s28, 0
      %s31 = sadd.s32 %s30, 1
      %s32 = scalar_select %p29, %s30, %s31
      %p35 = pneg %p29
      %p36 = scmp.eq.s32.totalorder %s20, 1
      %p37 = por %p35, %p36
      %p38 = scmp.ne.s32.totalorder %s30, %s33
      %p39 = scmp.eq.s32.totalorder %s20, 0
      %p40 = por %p38, %p39
      %p41 = scmp.ne.s32.totalorder %s30, %s33
      %p42 = scmp.eq.s32.totalorder %s25, 1
      %p43 = por %p41, %p42
      %p44 = scmp.ne.s32.totalorder %s33, %s34
      %p45 = scmp.eq.s32.totalorder %s25, 0
      %p46 = por %p44, %p45
      %p47 = scmp.ne.s32.totalorder %s33, %s34
      %p48 = scmp.eq.s32.totalorder %s26, 1
      %p49 = por %p47, %p48
      %p51 = scmp.ne.s32.totalorder %s34, %s50
      %p52 = scmp.eq.s32.totalorder %s26, 0
      %p53 = por %p51, %p52
      %s55 = sadd.s32 %s54, 1
      %p58 = scmp.eq.s32.totalorder %s20, 1
      %p59 = scmp.ne.s32.totalorder %s54, %s56
      %p60 = scmp.eq.s32.totalorder %s20, 0
      %p61 = por %p59, %p60
      %p62 = scmp.ne.s32.totalorder %s54, %s56
      %p63 = scmp.eq.s32.totalorder %s25, 1
      %p64 = por %p62, %p63
      %p65 = scmp.ne.s32.totalorder %s56, %s57
      %p66 = scmp.eq.s32.totalorder %s25, 0
      %p67 = por %p65, %p66
      %p68 = scmp.ne.s32.totalorder %s56, %s57
      %p69 = scmp.eq.s32.totalorder %s26, 1
      %p70 = por %p68, %p69
      %p72 = scmp.ne.s32.totalorder %s57, %s71
      %p73 = scmp.eq.s32.totalorder %s26, 0
      %p74 = por %p72, %p73
      %s76 = sadd.s32 %s75, 1
      %p79 = scmp.eq.s32.totalorder %s20, 1
      %p80 = scmp.ne.s32.totalorder %s75, %s77
      %p81 = scmp.eq.s32.totalorder %s20, 0
      %p82 = por %p80, %p81
      %p83 = scmp.ne.s32.totalorder %s75, %s77
      %p84 = scmp.eq.s32.totalorder %s25, 1
      %p85 = por %p83, %p84
      %p86 = scmp.ne.s32.totalorder %s77, %s78
      %p87 = scmp.eq.s32.totalorder %s25, 0
      %p88 = por %p86, %p87
      %p89 = scmp.ne.s32.totalorder %s77, %s78
      %p90 = scmp.eq.s32.totalorder %s26, 1
      %p91 = por %p89, %p90
      %p93 = scmp.ne.s32.totalorder %s78, %s92
      %p94 = scmp.eq.s32.totalorder %s26, 0
      %p95 = por %p93, %p94
      %s97 = sadd.s32 %s96, 1
      %p100 = scmp.eq.s32.totalorder %s20, 1
      %p101 = scmp.ne.s32.totalorder %s96, %s98
      %p102 = scmp.eq.s32.totalorder %s20, 0
      %p103 = por %p101, %p102
      %p104 = scmp.ne.s32.totalorder %s96, %s98
      %p105 = scmp.eq.s32.totalorder %s25, 1
      %p106 = por %p104, %p105
      %p107 = scmp.ne.s32.totalorder %s98, %s99
      %p108 = scmp.eq.s32.totalorder %s25, 0
      %p109 = por %p107, %p108
      %p110 = scmp.ne.s32.totalorder %s98, %s99
      %p111 = scmp.eq.s32.totalorder %s26, 1
      %p112 = por %p110, %p111
      %p114 = scmp.ne.s32.totalorder %s99, %s113
      %p115 = scmp.eq.s32.totalorder %s26, 0
      %p116 = por %p114, %p115
      %s118 = sadd.s32 %s117, 1
      %p121 = scmp.eq.s32.totalorder %s20, 1
      %p122 = scmp.ne.s32.totalorder %s117, %s119
      %p123 = scmp.eq.s32.totalorder %s20, 0
      %p124 = por %p122, %p123
      %p125 = scmp.ne.s32.totalorder %s117, %s119
      %p126 = scmp.eq.s32.totalorder %s25, 1
      %p127 = por %p125, %p126
      %p128 = scmp.ne.s32.totalorder %s119, %s120
      %p129 = scmp.eq.s32.totalorder %s25, 0
      %p130 = por %p128, %p129
      %p131 = scmp.ne.s32.totalorder %s119, %s120
      %p132 = scmp.eq.s32.totalorder %s26, 1
      %p133 = por %p131, %p132
      %p135 = scmp.ne.s32.totalorder %s120, %s134
      %p136 = scmp.eq.s32.totalorder %s26, 0
      %p137 = por %p135, %p136
      %s139 = sadd.s32 %s138, 1
      %p142 = scmp.eq.s32.totalorder %s20, 1
      %p143 = scmp.ne.s32.totalorder %s138, %s140
      %p144 = scmp.eq.s32.totalorder %s20, 0
      %p145 = por %p143, %p144
      %p146 = scmp.ne.s32.totalorder %s138, %s140
      %p147 = scmp.eq.s32.totalorder %s25, 1
      %p148 = por %p146, %p147
      %p149 = scmp.ne.s32.totalorder %s140, %s141
      %p150 = scmp.eq.s32.totalorder %s25, 0
      %p151 = por %p149, %p150
      %p152 = scmp.ne.s32.totalorder %s140, %s141
      %p153 = scmp.eq.s32.totalorder %s26, 1
      %p154 = por %p152, %p153
      %p156 = scmp.ne.s32.totalorder %s141, %s155
      %p157 = scmp.eq.s32.totalorder %s26, 0
      %p158 = por %p156, %p157
      %s160 = sadd.s32 %s159, 1
      %p163 = scmp.eq.s32.totalorder %s20, 1
      %p164 = scmp.ne.s32.totalorder %s159, %s161
      %p165 = scmp.eq.s32.totalorder %s20, 0
      %p166 = por %p164, %p165
      %p167 = scmp.ne.s32.totalorder %s159, %s161
      %p168 = scmp.eq.s32.totalorder %s25, 1
      %p169 = por %p167, %p168
      %p170 = scmp.ne.s32.totalorder %s161, %s162
      %p171 = scmp.eq.s32.totalorder %s25, 0
      %p172 = por %p170, %p171
      %p173 = scmp.ne.s32.totalorder %s161, %s162
      %p174 = scmp.eq.s32.totalorder %s26, 1
      %p175 = por %p173, %p174
      %p177 = scmp.ne.s32.totalorder %s162, %s176
      %p178 = scmp.eq.s32.totalorder %s26, 0
      %p179 = por %p177, %p178
      %s181 = sadd.s32 %s180, 1
      %p184 = scmp.eq.s32.totalorder %s20, 1
      %p185 = scmp.ne.s32.totalorder %s180, %s182
      %p186 = scmp.eq.s32.totalorder %s20, 0
      %p187 = por %p185, %p186
      %p188 = scmp.ne.s32.totalorder %s180, %s182
      %p189 = scmp.eq.s32.totalorder %s25, 1
      %p190 = por %p188, %p189
      %p191 = scmp.ne.s32.totalorder %s182, %s183
      %p192 = scmp.eq.s32.totalorder %s25, 0
      %p193 = por %p191, %p192
      %p194 = scmp.ne.s32.totalorder %s182, %s183
      %p195 = scmp.eq.s32.totalorder %s26, 1
      %p196 = por %p194, %p195
      %p198 = scmp.ne.s32.totalorder %s183, %s197
      %p199 = scmp.eq.s32.totalorder %s26, 0
      %p200 = por %p198, %p199
      %s202 = sadd.s32 %s201, 1
      %p205 = scmp.eq.s32.totalorder %s20, 1
      %p206 = scmp.ne.s32.totalorder %s201, %s203
      %p207 = scmp.eq.s32.totalorder %s20, 0
      %p208 = por %p206, %p207
      %p209 = scmp.ne.s32.totalorder %s201, %s203
      %p210 = scmp.eq.s32.totalorder %s25, 1
      %p211 = por %p209, %p210
      %p212 = scmp.ne.s32.totalorder %s203, %s204
      %p213 = scmp.eq.s32.totalorder %s25, 0
      %p214 = por %p212, %p213
      %p215 = scmp.ne.s32.totalorder %s203, %s204
      %p216 = scmp.eq.s32.totalorder %s26, 1
      %p217 = por %p215, %p216
      %p219 = scmp.ne.s32.totalorder %s204, %s218
      %p220 = scmp.eq.s32.totalorder %s26, 0
      %p221 = por %p219, %p220
      %s222 = ssub.s32 %s20, %s27
      %p223 = scmp.eq.s32.totalorder %s222, 0
      %s225 = sadd.s32 %s224, 1
      %s226 = scalar_select %p223, %s224, %s225
      %p229 = pneg %p223
      %p230 = scmp.eq.s32.totalorder %s20, 1
      %p231 = por %p229, %p230
      %p232 = scmp.ne.s32.totalorder %s224, %s227
      %p233 = scmp.eq.s32.totalorder %s20, 0
      %p234 = por %p232, %p233
      %p235 = scmp.ne.s32.totalorder %s224, %s227
      %p236 = scmp.eq.s32.totalorder %s25, 1
      %p237 = por %p235, %p236
      %p238 = scmp.ne.s32.totalorder %s227, %s228
      %p239 = scmp.eq.s32.totalorder %s25, 0
      %p240 = por %p238, %p239
      %p241 = scmp.ne.s32.totalorder %s227, %s228
      %p242 = scmp.eq.s32.totalorder %s26, 1
      %p243 = por %p241, %p242
      %p245 = scmp.ne.s32.totalorder %s228, %s244
      %p246 = scmp.eq.s32.totalorder %s26, 0
      %p247 = por %p245, %p246
      %p248 = scmp.le.s32.totalorder 1, %s20
      %p249 = scmp.lt.s32.totalorder %s20, 3
      %p250 = pnand %p248, %p249
      %p251 = pneg %p250
      // Predicated region
      $region9: #{tpu_custom_call.1} parent=5 // pred_check
        _
      $region10: #{tpu_custom_call.1} parent=5 // pred_check_branch
        %253 = sbr.rel (%p250) target = $region12
      $region11: #{tpu_custom_call.1} parent=5 // pred_region
        %s254 = ssub.s32 %s20, 1
        // Predicated region
        $region13: #{tpu_custom_call.1} parent=11 // pred_check
          %p255 = pneg %p67
        $region14: #{tpu_custom_call.1} parent=11 // pred_check_branch
          %257 = sbr.rel (%p255) target = $region16
        $region15: #{tpu_custom_call.1} parent=11 // pred_region
          _
        $region16: #{tpu_custom_call.1} parent=11 // pred_fallthru
          _
        // Predicated region
        $region17: #{tpu_custom_call.1} parent=11 // pred_check
          %p258 = pneg %p88
        $region18: #{tpu_custom_call.1} parent=11 // pred_check_branch
          %260 = sbr.rel (%p258) target = $region20
        $region19: #{tpu_custom_call.1} parent=11 // pred_region
          _
        $region20: #{tpu_custom_call.1} parent=11 // pred_fallthru
          _
        // Predicated region
        $region21: #{tpu_custom_call.1} parent=11 // pred_check
          %p261 = pneg %p109
        $region22: #{tpu_custom_call.1} parent=11 // pred_check_branch
          %263 = sbr.rel (%p261) target = $region24
        $region23: #{tpu_custom_call.1} parent=11 // pred_region
          %s265 = ssub.s32 3072, 3072
          %266 = vsyncadd [#allocation3], %s265
          %s267 = sshll.u32 [#allocation2], 4
          %s268 = int_to_ptr.vmem [resolvable:$true] %s267
          %273 = dma.hbm_to_vmem [thread:$0]  %s3, 3072, %s268, [#allocation3], 192, 192, 12
        $region24: #{tpu_custom_call.1} parent=11 // pred_fallthru
          _
        // Predicated region
        $region25: #{tpu_custom_call.1} parent=11 // pred_check
          %p274 = pneg %p130
        $region26: #{tpu_custom_call.1} parent=11 // pred_check_branch
          %276 = sbr.rel (%p274) target = $region28
        $region27: #{tpu_custom_call.1} parent=11 // pred_region
          _
        $region28: #{tpu_custom_call.1} parent=11 // pred_fallthru
          _
        // Predicated region
        $region29: #{tpu_custom_call.1} parent=11 // pred_check
          %p277 = pneg %p151
        $region30: #{tpu_custom_call.1} parent=11 // pred_check_branch
          %279 = sbr.rel (%p277) target = $region32
        $region31: #{tpu_custom_call.1} parent=11 // pred_region
          %s281 = ssub.s32 3072, 3072
          %282 = vsyncadd [#allocation6], %s281
          %s283 = sshll.u32 [#allocation5], 4
          %s284 = int_to_ptr.vmem [resolvable:$true] %s283
          %289 = dma.hbm_to_vmem [thread:$0]  %s5, 3072, %s284, [#allocation6], 192, 192, 12
        $region32: #{tpu_custom_call.1} parent=11 // pred_fallthru
          _
        // Predicated region
        $region33: #{tpu_custom_call.1} parent=11 // pred_check
          %p290 = pneg %p172
        $region34: #{tpu_custom_call.1} parent=11 // pred_check_branch
          %292 = sbr.rel (%p290) target = $region36
        $region35: #{tpu_custom_call.1} parent=11 // pred_region
          _
        $region36: #{tpu_custom_call.1} parent=11 // pred_fallthru
          _
        // Predicated region
        $region37: #{tpu_custom_call.1} parent=11 // pred_check
          %p293 = pneg %p193
        $region38: #{tpu_custom_call.1} parent=11 // pred_check_branch
          %295 = sbr.rel (%p293) target = $region40
        $region39: #{tpu_custom_call.1} parent=11 // pred_region
          %s297 = ssub.s32 3072, 3072
          %298 = vsyncadd [#allocation6], %s297
          %s299 = sshll.u32 [#allocation7], 4
          %s300 = int_to_ptr.vmem [resolvable:$true] %s299
          %305 = dma.hbm_to_vmem [thread:$0]  %s7, 3072, %s300, [#allocation6], 64, 64, 4
        $region40: #{tpu_custom_call.1} parent=11 // pred_fallthru
          _
        // Predicated region
        $region41: #{tpu_custom_call.1} parent=11 // pred_check
          %p306 = pneg %p214
        $region42: #{tpu_custom_call.1} parent=11 // pred_check_branch
          %308 = sbr.rel (%p306) target = $region44
        $region43: #{tpu_custom_call.1} parent=11 // pred_region
          _
        $region44: #{tpu_custom_call.1} parent=11 // pred_fallthru
          _
      $region12: #{tpu_custom_call.1} parent=5 // pred_fallthru
        _
      %p309 = scmp.lt.s32.totalorder %s20, 2
      // Predicated region
      $region45: #{tpu_custom_call.1} parent=5 // pred_check
        %p310 = pneg %p309
      $region46: #{tpu_custom_call.1} parent=5 // pred_check_branch
        %312 = sbr.rel (%p310) target = $region48
      $region47: #{tpu_custom_call.1} parent=5 // pred_region
        // Predicated region
        $region49: #{tpu_custom_call.1} parent=47 // pred_check
          %p313 = pneg %p40
        $region50: #{tpu_custom_call.1} parent=47 // pred_check_branch
          %315 = sbr.rel (%p313) target = $region52
        $region51: #{tpu_custom_call.1} parent=47 // pred_region
          %p316 = scmp.lt.s32.totalorder %s20, 1
          %s317 = scalar_select %p316, %s20, 1
          %s318 = smul.addr %s317, 16
          %s319 = smul.addr %s318, 8
          %s320 = scalar_lea.vmem %s0, %s319
        $region52: #{tpu_custom_call.1} parent=47 // pred_fallthru
          _
      $region48: #{tpu_custom_call.1} parent=5 // pred_fallthru
        _
      %p321 = scmp.le.s32.totalorder 1, %s20
      %p322 = scmp.lt.s32.totalorder %s20, 3
      %p323 = pnand %p321, %p322
      %p324 = pneg %p323
      // Predicated region
      $region53: #{tpu_custom_call.1} parent=5 // pred_check
        _
      $region54: #{tpu_custom_call.1} parent=5 // pred_check_branch
        %326 = sbr.rel (%p323) target = $region56
      $region55: #{tpu_custom_call.1} parent=5 // pred_region
        %s327 = ssub.s32 %s20, 1
        // Predicated region
        $region57: #{tpu_custom_call.1} parent=55 // pred_check
          %p328 = pneg %p109
        $region58: #{tpu_custom_call.1} parent=55 // pred_check_branch
          %330 = sbr.rel (%p328) target = $region60
        $region59: #{tpu_custom_call.1} parent=55 // pred_region
          %331 = dma.done [#allocation3], 3072
        $region60: #{tpu_custom_call.1} parent=55 // pred_fallthru
          _
        // Predicated region
        $region61: #{tpu_custom_call.1} parent=55 // pred_check
          %p332 = pneg %p151
        $region62: #{tpu_custom_call.1} parent=55 // pred_check_branch
          %334 = sbr.rel (%p332) target = $region64
        $region63: #{tpu_custom_call.1} parent=55 // pred_region
          %335 = dma.done [#allocation6], 3072
        $region64: #{tpu_custom_call.1} parent=55 // pred_fallthru
          _
        // Predicated region
        $region65: #{tpu_custom_call.1} parent=55 // pred_check
          %p336 = pneg %p193
        $region66: #{tpu_custom_call.1} parent=55 // pred_check_branch
          %338 = sbr.rel (%p336) target = $region68
        $region67: #{tpu_custom_call.1} parent=55 // pred_region
          %339 = dma.done [#allocation6], 3072
        $region68: #{tpu_custom_call.1} parent=55 // pred_fallthru
          _
        %p340 = scmp.lt.s32.totalorder %s25, 1
        %s341 = scalar_select %p340, %s25, 1
        %s342 = smul.addr %s341, 16
        %s343 = smul.addr %s342, 8
        %s344 = scalar_lea.vmem %s0, %s343
        %p345 = pneg %p46
        %p346 = pneg %p43
        %p347 = pneg %p67
        %p348 = pneg %p64
        %p349 = pneg %p88
        %p350 = pneg %p85
        %p351 = pneg %p109
        %p352 = pneg %p106
        %p353 = pneg %p130
        %p354 = pneg %p127
        %p355 = pneg %p151
        %p356 = pneg %p148
        %p357 = pneg %p172
        %p358 = pneg %p169
        %p359 = pneg %p193
        %p360 = pneg %p190
        %p361 = pneg %p214
        %p362 = pneg %p211
        %p363 = pneg %p240
        %p364 = pneg %p237
        %s365 = sand.u32 %s227, 1
        %s366 = scalar_lea.sflag [#allocation4], %s365
        %s367 = sand.u32 %s227, 1
        %s368 = smul.addr %s367, 128
        %s369 = scalar_lea.vmem [#allocation8], %s368
        %p370 = scmp.lt.s32.totalorder %s25, 1
        %s371 = scalar_select %p370, %s25, 1
        %s372 = smul.addr %s371, 16
        %s373 = smul.addr %s372, 8
        %s374 = scalar_lea.vmem %s0, %s373
        %v376 = vld [vmem:[%s374] sm:$0xff]
        %v377 = vld [vmem:[%s374 + $0x8] sm:$0xff]
        %v378 = vld [vmem:[%s374 + $0x10] sm:$0xff]
        %v379 = vld [vmem:[%s374 + $0x18] sm:$0xff]
        %v380 = vld [vmem:[%s374 + $0x20] sm:$0xff]
        %v381 = vld [vmem:[%s374 + $0x28] sm:$0xff]
        %v382 = vld [vmem:[%s374 + $0x30] sm:$0xff]
        %v383 = vld [vmem:[%s374 + $0x38] sm:$0xff]
        %v384 = vld [vmem:[%s374 + $0x40] sm:$0xff]
        %v385 = vld [vmem:[%s374 + $0x48] sm:$0xff]
        %v386 = vld [vmem:[%s374 + $0x50] sm:$0xff]
        %v387 = vld [vmem:[%s374 + $0x58] sm:$0xff]
        %v388 = vld [vmem:[%s374 + $0x60] sm:$0xff]
        %v389 = vld [vmem:[%s374 + $0x68] sm:$0xff]
        %v390 = vld [vmem:[%s374 + $0x70] sm:$0xff]
        %v391 = vld [vmem:[%s374 + $0x78] sm:$0xff]
        %v392 = vpack.c.bf16 %v377, %v376
        %v393 = vpack.c.bf16 %v379, %v378
        %v394 = vpack.c.bf16 %v381, %v380
        %v395 = vpack.c.bf16 %v383, %v382
        %v396 = vpack.c.bf16 %v385, %v384
        %v397 = vpack.c.bf16 %v387, %v386
        %v398 = vpack.c.bf16 %v389, %v388
        %v399 = vpack.c.bf16 %v391, %v390
        %v400 = vld [vmem:[%s1] sm:$0xf]
        %v401 = vld [vmem:[%s1 + $0x4] sm:$0xf]
        %v402 = vld [vmem:[%s1 + $0x8] sm:$0xf]
        %v403 = vld [vmem:[%s1 + $0xc] sm:$0xf]
        %v404 = vld [vmem:[%s1 + $0x10] sm:$0xf]
        %v405 = vld [vmem:[%s1 + $0x14] sm:$0xf]
        %v406 = vld [vmem:[%s1 + $0x18] sm:$0xf]
        %v407 = vld [vmem:[%s1 + $0x1c] sm:$0xf]
        %v408 = vld [vmem:[%s1 + $0x20] sm:$0xf]
        %v409 = vld [vmem:[%s1 + $0x24] sm:$0xf]
        %v410 = vld [vmem:[%s1 + $0x28] sm:$0xf]
        %v411 = vld [vmem:[%s1 + $0x2c] sm:$0xf]
        %v412 = vld [vmem:[%s1 + $0x30] sm:$0xf]
        %v413 = vld [vmem:[%s1 + $0x34] sm:$0xf]
        %v414 = vld [vmem:[%s1 + $0x38] sm:$0xf]
        %v415 = vld [vmem:[%s1 + $0x3c] sm:$0xf]
        %v416 = vld [vmem:[%s1 + $0x40] sm:$0xf]
        %v417 = vld [vmem:[%s1 + $0x44] sm:$0xf]
        %v418 = vld [vmem:[%s1 + $0x48] sm:$0xf]
        %v419 = vld [vmem:[%s1 + $0x4c] sm:$0xf]
        %v420 = vld [vmem:[%s1 + $0x50] sm:$0xf]
        %v421 = vld [vmem:[%s1 + $0x54] sm:$0xf]
        %v422 = vld [vmem:[%s1 + $0x58] sm:$0xf]
        %v423 = vld [vmem:[%s1 + $0x5c] sm:$0xf]
        %v424 = vld [vmem:[%s1 + $0x60] sm:$0xf]
        %v425 = vld [vmem:[%s1 + $0x64] sm:$0xf]
        %v426 = vld [vmem:[%s1 + $0x68] sm:$0xf]
        %v427 = vld [vmem:[%s1 + $0x6c] sm:$0xf]
        %v428 = vld [vmem:[%s1 + $0x70] sm:$0xf]
        %v429 = vld [vmem:[%s1 + $0x74] sm:$0xf]
        %v430 = vld [vmem:[%s1 + $0x78] sm:$0xf]
        %v431 = vld [vmem:[%s1 + $0x7c] sm:$0xf]
        %v432 = vld [vmem:[%s1 + $0x80] sm:$0xf]
        %v433 = vld [vmem:[%s1 + $0x84] sm:$0xf]
        %v434 = vld [vmem:[%s1 + $0x88] sm:$0xf]
        %v435 = vld [vmem:[%s1 + $0x8c] sm:$0xf]
        %v436 = vld [vmem:[%s1 + $0x90] sm:$0xf]
        %v437 = vld [vmem:[%s1 + $0x94] sm:$0xf]
        %v438 = vld [vmem:[%s1 + $0x98] sm:$0xf]
        %v439 = vld [vmem:[%s1 + $0x9c] sm:$0xf]
        %v440 = vld [vmem:[%s1 + $0xa0] sm:$0xf]
        %v441 = vld [vmem:[%s1 + $0xa4] sm:$0xf]
        %v442 = vld [vmem:[%s1 + $0xa8] sm:$0xf]
        %v443 = vld [vmem:[%s1 + $0xac] sm:$0xf]
        %v444 = vld [vmem:[%s1 + $0xb0] sm:$0xf]
        %v445 = vld [vmem:[%s1 + $0xb4] sm:$0xf]
        %v446 = vld [vmem:[%s1 + $0xb8] sm:$0xf]
        %v447 = vld [vmem:[%s1 + $0xbc] sm:$0xf]
        %v448 = vld [vmem:[%s2] sm:$0xff]
        %v449 = vld [vmem:[%s2 + $0x8] sm:$0xff]
        %v450 = vld [vmem:[%s2 + $0x10] sm:$0xff]
        %v451 = vld [vmem:[%s2 + $0x18] sm:$0xff]
        %v452 = vld [vmem:[%s2 + $0x20] sm:$0xff]
        %v453 = vld [vmem:[%s2 + $0x28] sm:$0xff]
        %v454 = vld [vmem:[%s2 + $0x30] sm:$0xff]
        %v455 = vld [vmem:[%s2 + $0x38] sm:$0xff]
        %v456 = vld [vmem:[%s2 + $0x40] sm:$0xff]
        %v457 = vld [vmem:[%s2 + $0x48] sm:$0xff]
        %v458 = vld [vmem:[%s2 + $0x50] sm:$0xff]
        %v459 = vld [vmem:[%s2 + $0x58] sm:$0xff]
        %v460 = vld [vmem:[%s2 + $0x60] sm:$0xff]
        %v461 = vld [vmem:[%s2 + $0x68] sm:$0xff]
        %v462 = vld [vmem:[%s2 + $0x70] sm:$0xff]
        %v463 = vld [vmem:[%s2 + $0x78] sm:$0xff]
        %v464 = vld [vmem:[%s2 + $0x80] sm:$0xff]
        %v465 = vld [vmem:[%s2 + $0x88] sm:$0xff]
        %v466 = vld [vmem:[%s2 + $0x90] sm:$0xff]
        %v467 = vld [vmem:[%s2 + $0x98] sm:$0xff]
        %v468 = vld [vmem:[%s2 + $0xa0] sm:$0xff]
        %v469 = vld [vmem:[%s2 + $0xa8] sm:$0xff]
        %v470 = vld [vmem:[%s2 + $0xb0] sm:$0xff]
        %v471 = vld [vmem:[%s2 + $0xb8] sm:$0xff]
        %v472 = vld [vmem:[%s2 + $0xc0] sm:$0xff]
        %v473 = vld [vmem:[%s2 + $0xc8] sm:$0xff]
        %v474 = vld [vmem:[%s2 + $0xd0] sm:$0xff]
        %v475 = vld [vmem:[%s2 + $0xd8] sm:$0xff]
        %v476 = vld [vmem:[%s2 + $0xe0] sm:$0xff]
        %v477 = vld [vmem:[%s2 + $0xe8] sm:$0xff]
        %v478 = vld [vmem:[%s2 + $0xf0] sm:$0xff]
        %v479 = vld [vmem:[%s2 + $0xf8] sm:$0xff]
        %v480 = vld [vmem:[%s2 + $0x100] sm:$0xff]
        %v481 = vld [vmem:[%s2 + $0x108] sm:$0xff]
        %v482 = vld [vmem:[%s2 + $0x110] sm:$0xff]
        %v483 = vld [vmem:[%s2 + $0x118] sm:$0xff]
        %v484 = vld [vmem:[%s2 + $0x120] sm:$0xff]
        %v485 = vld [vmem:[%s2 + $0x128] sm:$0xff]
        %v486 = vld [vmem:[%s2 + $0x130] sm:$0xff]
        %v487 = vld [vmem:[%s2 + $0x138] sm:$0xff]
        %v488 = vld [vmem:[%s2 + $0x140] sm:$0xff]
        %v489 = vld [vmem:[%s2 + $0x148] sm:$0xff]
        %v490 = vld [vmem:[%s2 + $0x150] sm:$0xff]
        %v491 = vld [vmem:[%s2 + $0x158] sm:$0xff]
        %v492 = vld [vmem:[%s2 + $0x160] sm:$0xff]
        %v493 = vld [vmem:[%s2 + $0x168] sm:$0xff]
        %v494 = vld [vmem:[%s2 + $0x170] sm:$0xff]
        %v495 = vld [vmem:[%s2 + $0x178] sm:$0xff]
        %497 = vset.pattern.permute.xlu0 0
        %498 = vperm.xlu0 %497, %v448
        %v499 = vpop.permute.xlu0 %498
        %502 = vset.pattern.permute.xlu0 0
        %503 = vperm.xlu0 %502, %v449
        %v504 = vpop.permute.xlu0 %503
        %507 = vset.pattern.permute.xlu0 0
        %508 = vperm.xlu0 %507, %v450
        %v509 = vpop.permute.xlu0 %508
        %512 = vset.pattern.permute.xlu0 0
        %513 = vperm.xlu0 %512, %v451
        %v514 = vpop.permute.xlu0 %513
        %517 = vset.pattern.permute.xlu0 0
        %518 = vperm.xlu0 %517, %v452
        %v519 = vpop.permute.xlu0 %518
        %522 = vset.pattern.permute.xlu0 0
        %523 = vperm.xlu0 %522, %v453
        %v524 = vpop.permute.xlu0 %523
        %527 = vset.pattern.permute.xlu0 0
        %528 = vperm.xlu0 %527, %v454
        %v529 = vpop.permute.xlu0 %528
        %532 = vset.pattern.permute.xlu0 0
        %533 = vperm.xlu0 %532, %v455
        %v534 = vpop.permute.xlu0 %533
        %537 = vset.pattern.permute.xlu0 0
        %538 = vperm.xlu0 %537, %v456
        %v539 = vpop.permute.xlu0 %538
        %542 = vset.pattern.permute.xlu0 0
        %543 = vperm.xlu0 %542, %v457
        %v544 = vpop.permute.xlu0 %543
        %547 = vset.pattern.permute.xlu0 0
        %548 = vperm.xlu0 %547, %v458
        %v549 = vpop.permute.xlu0 %548
        %552 = vset.pattern.permute.xlu0 0
        %553 = vperm.xlu0 %552, %v459
        %v554 = vpop.permute.xlu0 %553
        %557 = vset.pattern.permute.xlu0 0
        %558 = vperm.xlu0 %557, %v460
        %v559 = vpop.permute.xlu0 %558
        %562 = vset.pattern.permute.xlu0 0
        %563 = vperm.xlu0 %562, %v461
        %v564 = vpop.permute.xlu0 %563
        %567 = vset.pattern.permute.xlu0 0
        %568 = vperm.xlu0 %567, %v462
        %v569 = vpop.permute.xlu0 %568
        %572 = vset.pattern.permute.xlu0 0
        %573 = vperm.xlu0 %572, %v463
        %v574 = vpop.permute.xlu0 %573
        %577 = vset.pattern.permute.xlu0 0
        %578 = vperm.xlu0 %577, %v464
        %v579 = vpop.permute.xlu0 %578
        %582 = vset.pattern.permute.xlu0 0
        %583 = vperm.xlu0 %582, %v465
        %v584 = vpop.permute.xlu0 %583
        %587 = vset.pattern.permute.xlu0 0
        %588 = vperm.xlu0 %587, %v466
        %v589 = vpop.permute.xlu0 %588
        %592 = vset.pattern.permute.xlu0 0
        %593 = vperm.xlu0 %592, %v467
        %v594 = vpop.permute.xlu0 %593
        %597 = vset.pattern.permute.xlu0 0
        %598 = vperm.xlu0 %597, %v468
        %v599 = vpop.permute.xlu0 %598
        %602 = vset.pattern.permute.xlu0 0
        %603 = vperm.xlu0 %602, %v469
        %v604 = vpop.permute.xlu0 %603
        %607 = vset.pattern.permute.xlu0 0
        %608 = vperm.xlu0 %607, %v470
        %v609 = vpop.permute.xlu0 %608
        %612 = vset.pattern.permute.xlu0 0
        %613 = vperm.xlu0 %612, %v471
        %v614 = vpop.permute.xlu0 %613
        %617 = vset.pattern.permute.xlu0 0
        %618 = vperm.xlu0 %617, %v472
        %v619 = vpop.permute.xlu0 %618
        %622 = vset.pattern.permute.xlu0 0
        %623 = vperm.xlu0 %622, %v473
        %v624 = vpop.permute.xlu0 %623
        %627 = vset.pattern.permute.xlu0 0
        %628 = vperm.xlu0 %627, %v474
        %v629 = vpop.permute.xlu0 %628
        %632 = vset.pattern.permute.xlu0 0
        %633 = vperm.xlu0 %632, %v475
        %v634 = vpop.permute.xlu0 %633
        %637 = vset.pattern.permute.xlu0 0
        %638 = vperm.xlu0 %637, %v476
        %v639 = vpop.permute.xlu0 %638
        %642 = vset.pattern.permute.xlu0 0
        %643 = vperm.xlu0 %642, %v477
        %v644 = vpop.permute.xlu0 %643
        %647 = vset.pattern.permute.xlu0 0
        %648 = vperm.xlu0 %647, %v478
        %v649 = vpop.permute.xlu0 %648
        %652 = vset.pattern.permute.xlu0 0
        %653 = vperm.xlu0 %652, %v479
        %v654 = vpop.permute.xlu0 %653
        %657 = vset.pattern.permute.xlu0 0
        %658 = vperm.xlu0 %657, %v480
        %v659 = vpop.permute.xlu0 %658
        %662 = vset.pattern.permute.xlu0 0
        %663 = vperm.xlu0 %662, %v481
        %v664 = vpop.permute.xlu0 %663
        %667 = vset.pattern.permute.xlu0 0
        %668 = vperm.xlu0 %667, %v482
        %v669 = vpop.permute.xlu0 %668
        %672 = vset.pattern.permute.xlu0 0
        %673 = vperm.xlu0 %672, %v483
        %v674 = vpop.permute.xlu0 %673
        %677 = vset.pattern.permute.xlu0 0
        %678 = vperm.xlu0 %677, %v484
        %v679 = vpop.permute.xlu0 %678
        %682 = vset.pattern.permute.xlu0 0
        %683 = vperm.xlu0 %682, %v485
        %v684 = vpop.permute.xlu0 %683
        %687 = vset.pattern.permute.xlu0 0
        %688 = vperm.xlu0 %687, %v486
        %v689 = vpop.permute.xlu0 %688
        %692 = vset.pattern.permute.xlu0 0
        %693 = vperm.xlu0 %692, %v487
        %v694 = vpop.permute.xlu0 %693
        %697 = vset.pattern.permute.xlu0 0
        %698 = vperm.xlu0 %697, %v488
        %v699 = vpop.permute.xlu0 %698
        %702 = vset.pattern.permute.xlu0 0
        %703 = vperm.xlu0 %702, %v489
        %v704 = vpop.permute.xlu0 %703
        %707 = vset.pattern.permute.xlu0 0
        %708 = vperm.xlu0 %707, %v490
        %v709 = vpop.permute.xlu0 %708
        %712 = vset.pattern.permute.xlu0 0
        %713 = vperm.xlu0 %712, %v491
        %v714 = vpop.permute.xlu0 %713
        %717 = vset.pattern.permute.xlu0 0
        %718 = vperm.xlu0 %717, %v492
        %v719 = vpop.permute.xlu0 %718
        %722 = vset.pattern.permute.xlu0 0
        %723 = vperm.xlu0 %722, %v493
        %v724 = vpop.permute.xlu0 %723
        %727 = vset.pattern.permute.xlu0 0
        %728 = vperm.xlu0 %727, %v494
        %v729 = vpop.permute.xlu0 %728
        %732 = vset.pattern.permute.xlu0 0
        %733 = vperm.xlu0 %732, %v495
        %v734 = vpop.permute.xlu0 %733
        %v784 = vunpack.c.l.b16 %v400
        %v785 = vunpack.c.l.b16 %v401
        %v786 = vunpack.c.l.b16 %v402
        %v787 = vunpack.c.l.b16 %v403
        %v788 = vunpack.c.l.b16 %v404
        %v789 = vunpack.c.l.b16 %v405
        %v790 = vunpack.c.l.b16 %v406
        %v791 = vunpack.c.l.b16 %v407
        %v792 = vunpack.c.l.b16 %v408
        %v793 = vunpack.c.l.b16 %v409
        %v794 = vunpack.c.l.b16 %v410
        %v795 = vunpack.c.l.b16 %v411
        %v796 = vunpack.c.l.b16 %v412
        %v797 = vunpack.c.l.b16 %v413
        %v798 = vunpack.c.l.b16 %v414
        %v799 = vunpack.c.l.b16 %v415
        %v800 = vunpack.c.l.b16 %v416
        %v801 = vunpack.c.l.b16 %v417
        %v802 = vunpack.c.l.b16 %v418
        %v803 = vunpack.c.l.b16 %v419
        %v804 = vunpack.c.l.b16 %v420
        %v805 = vunpack.c.l.b16 %v421
        %v806 = vunpack.c.l.b16 %v422
        %v807 = vunpack.c.l.b16 %v423
        %v808 = vunpack.c.l.b16 %v424
        %v809 = vunpack.c.l.b16 %v425
        %v810 = vunpack.c.l.b16 %v426
        %v811 = vunpack.c.l.b16 %v427
        %v812 = vunpack.c.l.b16 %v428
        %v813 = vunpack.c.l.b16 %v429
        %v814 = vunpack.c.l.b16 %v430
        %v815 = vunpack.c.l.b16 %v431
        %v816 = vunpack.c.l.b16 %v432
        %v817 = vunpack.c.l.b16 %v433
        %v818 = vunpack.c.l.b16 %v434
        %v819 = vunpack.c.l.b16 %v435
        %v820 = vunpack.c.l.b16 %v436
        %v821 = vunpack.c.l.b16 %v437
        %v822 = vunpack.c.l.b16 %v438
        %v823 = vunpack.c.l.b16 %v439
        %v824 = vunpack.c.l.b16 %v440
        %v825 = vunpack.c.l.b16 %v441
        %v826 = vunpack.c.l.b16 %v442
        %v827 = vunpack.c.l.b16 %v443
        %v828 = vunpack.c.l.b16 %v444
        %v829 = vunpack.c.l.b16 %v445
        %v830 = vunpack.c.l.b16 %v446
        %v831 = vunpack.c.l.b16 %v447
        %v832 = vpack.c.b16 %v785, %v784
        %v833 = vpack.c.b16 %v787, %v786
        %v834 = vpack.c.b16 %v789, %v788
        %v835 = vpack.c.b16 %v791, %v790
        %v836 = vpack.c.b16 %v793, %v792
        %v837 = vpack.c.b16 %v795, %v794
        %v838 = vpack.c.b16 %v797, %v796
        %v839 = vpack.c.b16 %v799, %v798
        %v840 = vpack.c.b16 %v801, %v800
        %v841 = vpack.c.b16 %v803, %v802
        %v842 = vpack.c.b16 %v805, %v804
        %v843 = vpack.c.b16 %v807, %v806
        %v844 = vpack.c.b16 %v809, %v808
        %v845 = vpack.c.b16 %v811, %v810
        %v846 = vpack.c.b16 %v813, %v812
        %v847 = vpack.c.b16 %v815, %v814
        %v848 = vpack.c.b16 %v817, %v816
        %v849 = vpack.c.b16 %v819, %v818
        %v850 = vpack.c.b16 %v821, %v820
        %v851 = vpack.c.b16 %v823, %v822
        %v852 = vpack.c.b16 %v825, %v824
        %v853 = vpack.c.b16 %v827, %v826
        %v854 = vpack.c.b16 %v829, %v828
        %v855 = vpack.c.b16 %v831, %v830
        %880 = vmatprep.subr.bf16.mxu0 0
        %881 = vmatpush1.bf16.msra.mxu0 %v392
        %882 = vmatprep.subr.bf16.mxu0 0
        %883 = vmatpush1.bf16.msra.mxu0 %v393
        %884 = vmatprep.subr.bf16.mxu0 0
        %885 = vmatpush1.bf16.msra.mxu0 %v394
        %886 = vmatprep.subr.bf16.mxu0 0
        %887 = vmatpush1.bf16.msra.mxu0 %v395
        %888 = vmatprep.subr.bf16.mxu0 0
        %889 = vmatpush1.bf16.msra.mxu0 %v396
        %890 = vmatprep.subr.bf16.mxu0 0
        %891 = vmatpush1.bf16.msra.mxu0 %v397
        %892 = vmatprep.subr.bf16.mxu0 0
        %893 = vmatpush1.bf16.msra.mxu0 %v398
        %894 = vmatprep.subr.bf16.mxu0 0
        %895 = vmatpush1.bf16.msra.mxu0 %v399
        %896 = vmatprep.subr.bf16.mxu0 0
        %897 = vmatpush1.bf16.msra.mxu0 0
        %898 = vmatprep.subr.bf16.mxu0 0
        %899 = vmatpush1.bf16.msra.mxu0 0
        %900 = vmatprep.subr.bf16.mxu0 0
        %901 = vmatpush1.bf16.msra.mxu0 0
        %902 = vmatprep.subr.bf16.mxu0 0
        %903 = vmatpush1.bf16.msra.mxu0 0
        %904 = vmatprep.subr.bf16.mxu0 0
        %905 = vmatpush1.bf16.msra.mxu0 0
        %906 = vmatprep.subr.bf16.mxu0 0
        %907 = vmatpush1.bf16.msra.mxu0 0
        %908 = vmatprep.subr.bf16.mxu0 0
        %909 = vmatpush1.bf16.msra.mxu0 0
        %910 = vmatprep.subr.bf16.mxu0 0
        %911 = vmatpush1.bf16.msra.mxu0 0
        %912 = vmatprep.mubr.bf16.mxu0 0
        %913 = vmatmul.mubr.bf16.gmra.mrb[0].mxu0 %v832
        %v914 = vpop.f32.mrb[0].mxu0
        %v915 = vadd.f32 %v499, %v914
        %v916 = vpop.f32.mrb[0].mxu0
        %v917 = vpop.f32.mrb[0].mxu0
        %v918 = vadd.f32 %v504, %v917
        %v919 = vpop.f32.mrb[0].mxu0
        %920 = vmatprep.mubr.bf16.mxu0 0
        %921 = vmatmul.mubr.bf16.gmra.mrb[0].mxu0 %v833
        %v922 = vpop.f32.mrb[0].mxu0
        %v923 = vadd.f32 %v509, %v922
        %v924 = vpop.f32.mrb[0].mxu0
        %v925 = vpop.f32.mrb[0].mxu0
        %v926 = vadd.f32 %v514, %v925
        %v927 = vpop.f32.mrb[0].mxu0
        %928 = vmatprep.mubr.bf16.mxu0 0
        %929 = vmatmul.mubr.bf16.gmra.mrb[0].mxu0 %v834
        %v930 = vpop.f32.mrb[0].mxu0
        %v931 = vadd.f32 %v519, %v930
        %v932 = vpop.f32.mrb[0].mxu0
        %v933 = vpop.f32.mrb[0].mxu0
        %v934 = vadd.f32 %v524, %v933
        %v935 = vpop.f32.mrb[0].mxu0
        %936 = vmatprep.mubr.bf16.mxu0 0
        %937 = vmatmul.mubr.bf16.gmra.mrb[0].mxu0 %v835
        %v938 = vpop.f32.mrb[0].mxu0
        %v939 = vadd.f32 %v529, %v938
        %v940 = vpop.f32.mrb[0].mxu0
        %v941 = vpop.f32.mrb[0].mxu0
        %v942 = vadd.f32 %v534, %v941
        %v943 = vpop.f32.mrb[0].mxu0
        %944 = vmatprep.mubr.bf16.mxu0 0
        %945 = vmatmul.mubr.bf16.gmra.mrb[0].mxu0 %v836
        %v946 = vpop.f32.mrb[0].mxu0
        %v947 = vadd.f32 %v539, %v946
        %v948 = vpop.f32.mrb[0].mxu0
        %v949 = vpop.f32.mrb[0].mxu0
        %v950 = vadd.f32 %v544, %v949
        %v951 = vpop.f32.mrb[0].mxu0
        %952 = vmatprep.mubr.bf16.mxu0 0
        %953 = vmatmul.mubr.bf16.gmra.mrb[0].mxu0 %v837
        %v954 = vpop.f32.mrb[0].mxu0
        %v955 = vadd.f32 %v549, %v954
        %v956 = vpop.f32.mrb[0].mxu0
        %v957 = vpop.f32.mrb[0].mxu0
        %v958 = vadd.f32 %v554, %v957
        %v959 = vpop.f32.mrb[0].mxu0
        %960 = vmatprep.mubr.bf16.mxu0 0
        %961 = vmatmul.mubr.bf16.gmra.mrb[0].mxu0 %v838
        %v962 = vpop.f32.mrb[0].mxu0
        %v963 = vadd.f32 %v559, %v962
        %v964 = vpop.f32.mrb[0].mxu0
        %v965 = vpop.f32.mrb[0].mxu0
        %v966 = vadd.f32 %v564, %v965
        %v967 = vpop.f32.mrb[0].mxu0
        %968 = vmatprep.mubr.bf16.mxu0 0
        %969 = vmatmul.mubr.bf16.gmra.mrb[0].mxu0 %v839
        %v970 = vpop.f32.mrb[0].mxu0
        %v971 = vadd.f32 %v569, %v970
        %v972 = vpop.f32.mrb[0].mxu0
        %v973 = vpop.f32.mrb[0].mxu0
        %v974 = vadd.f32 %v574, %v973
        %v975 = vpop.f32.mrb[0].mxu0
        %976 = vmatprep.mubr.bf16.mxu0 0
        %977 = vmatmul.mubr.bf16.gmra.mrb[0].mxu0 %v840
        %v978 = vpop.f32.mrb[0].mxu0
        %v979 = vadd.f32 %v579, %v978
        %v980 = vpop.f32.mrb[0].mxu0
        %v981 = vpop.f32.mrb[0].mxu0
        %v982 = vadd.f32 %v584, %v981
        %v983 = vpop.f32.mrb[0].mxu0
        %984 = vmatprep.mubr.bf16.mxu0 0
        %985 = vmatmul.mubr.bf16.gmra.mrb[0].mxu0 %v841
        %v986 = vpop.f32.mrb[0].mxu0
        %v987 = vadd.f32 %v589, %v986
        %v988 = vpop.f32.mrb[0].mxu0
        %v989 = vpop.f32.mrb[0].mxu0
        %v990 = vadd.f32 %v594, %v989
        %v991 = vpop.f32.mrb[0].mxu0
        %992 = vmatprep.mubr.bf16.mxu0 0
        %993 = vmatmul.mubr.bf16.gmra.mrb[0].mxu0 %v842
        %v994 = vpop.f32.mrb[0].mxu0
        %v995 = vadd.f32 %v599, %v994
        %v996 = vpop.f32.mrb[0].mxu0
        %v997 = vpop.f32.mrb[0].mxu0
        %v998 = vadd.f32 %v604, %v997
        %v999 = vpop.f32.mrb[0].mxu0
        %1000 = vmatprep.mubr.bf16.mxu0 0
        %1001 = vmatmul.mubr.bf16.gmra.mrb[0].mxu0 %v843
        %v1002 = vpop.f32.mrb[0].mxu0
        %v1003 = vadd.f32 %v609, %v1002
        %v1004 = vpop.f32.mrb[0].mxu0
        %v1005 = vpop.f32.mrb[0].mxu0
        %v1006 = vadd.f32 %v614, %v1005
        %v1007 = vpop.f32.mrb[0].mxu0
        %1008 = vmatprep.mubr.bf16.mxu0 0
        %1009 = vmatmul.mubr.bf16.gmra.mrb[0].mxu0 %v844
        %v1010 = vpop.f32.mrb[0].mxu0
        %v1011 = vadd.f32 %v619, %v1010
        %v1012 = vpop.f32.mrb[0].mxu0
        %v1013 = vpop.f32.mrb[0].mxu0
        %v1014 = vadd.f32 %v624, %v1013
        %v1015 = vpop.f32.mrb[0].mxu0
        %1016 = vmatprep.mubr.bf16.mxu0 0
        %1017 = vmatmul.mubr.bf16.gmra.mrb[0].mxu0 %v845
        %v1018 = vpop.f32.mrb[0].mxu0
        %v1019 = vadd.f32 %v629, %v1018
        %v1020 = vpop.f32.mrb[0].mxu0
        %v1021 = vpop.f32.mrb[0].mxu0
        %v1022 = vadd.f32 %v634, %v1021
        %v1023 = vpop.f32.mrb[0].mxu0
        %1024 = vmatprep.mubr.bf16.mxu0 0
        %1025 = vmatmul.mubr.bf16.gmra.mrb[0].mxu0 %v846
        %v1026 = vpop.f32.mrb[0].mxu0
        %v1027 = vadd.f32 %v639, %v1026
        %v1028 = vpop.f32.mrb[0].mxu0
        %v1029 = vpop.f32.mrb[0].mxu0
        %v1030 = vadd.f32 %v644, %v1029
        %v1031 = vpop.f32.mrb[0].mxu0
        %1032 = vmatprep.mubr.bf16.mxu0 0
        %1033 = vmatmul.mubr.bf16.gmra.mrb[0].mxu0 %v847
        %v1034 = vpop.f32.mrb[0].mxu0
        %v1035 = vadd.f32 %v649, %v1034
        %v1036 = vpop.f32.mrb[0].mxu0
        %v1037 = vpop.f32.mrb[0].mxu0
        %v1038 = vadd.f32 %v654, %v1037
        %v1039 = vpop.f32.mrb[0].mxu0
        %1040 = vmatprep.mubr.bf16.mxu0 0
        %1041 = vmatmul.mubr.bf16.gmra.mrb[0].mxu0 %v848
        %v1042 = vpop.f32.mrb[0].mxu0
        %v1043 = vadd.f32 %v659, %v1042
        %v1044 = vpop.f32.mrb[0].mxu0
        %v1045 = vpop.f32.mrb[0].mxu0
        %v1046 = vadd.f32 %v664, %v1045
        %v1047 = vpop.f32.mrb[0].mxu0
        %1048 = vmatprep.mubr.bf16.mxu0 0
        %1049 = vmatmul.mubr.bf16.gmra.mrb[0].mxu0 %v849
        %v1050 = vpop.f32.mrb[0].mxu0
        %v1051 = vadd.f32 %v669, %v1050
        %v1052 = vpop.f32.mrb[0].mxu0
        %v1053 = vpop.f32.mrb[0].mxu0
        %v1054 = vadd.f32 %v674, %v1053
        %v1055 = vpop.f32.mrb[0].mxu0
        %1056 = vmatprep.mubr.bf16.mxu0 0
        %1057 = vmatmul.mubr.bf16.gmra.mrb[0].mxu0 %v850
        %v1058 = vpop.f32.mrb[0].mxu0
        %v1059 = vadd.f32 %v679, %v1058
        %v1060 = vpop.f32.mrb[0].mxu0
        %v1061 = vpop.f32.mrb[0].mxu0
        %v1062 = vadd.f32 %v684, %v1061
        %v1063 = vpop.f32.mrb[0].mxu0
        %1064 = vmatprep.mubr.bf16.mxu0 0
        %1065 = vmatmul.mubr.bf16.gmra.mrb[0].mxu0 %v851
        %v1066 = vpop.f32.mrb[0].mxu0
        %v1067 = vadd.f32 %v689, %v1066
        %v1068 = vpop.f32.mrb[0].mxu0
        %v1069 = vpop.f32.mrb[0].mxu0
        %v1070 = vadd.f32 %v694, %v1069
        %v1071 = vpop.f32.mrb[0].mxu0
        %1072 = vmatprep.mubr.bf16.mxu0 0
        %1073 = vmatmul.mubr.bf16.gmra.mrb[0].mxu0 %v852
        %v1074 = vpop.f32.mrb[0].mxu0
        %v1075 = vadd.f32 %v699, %v1074
        %v1076 = vpop.f32.mrb[0].mxu0
        %v1077 = vpop.f32.mrb[0].mxu0
        %v1078 = vadd.f32 %v704, %v1077
        %v1079 = vpop.f32.mrb[0].mxu0
        %1080 = vmatprep.mubr.bf16.mxu0 0
        %1081 = vmatmul.mubr.bf16.gmra.mrb[0].mxu0 %v853
        %v1082 = vpop.f32.mrb[0].mxu0
        %v1083 = vadd.f32 %v709, %v1082
        %v1084 = vpop.f32.mrb[0].mxu0
        %v1085 = vpop.f32.mrb[0].mxu0
        %v1086 = vadd.f32 %v714, %v1085
        %v1087 = vpop.f32.mrb[0].mxu0
        %1088 = vmatprep.mubr.bf16.mxu0 0
        %1089 = vmatmul.mubr.bf16.gmra.mrb[0].mxu0 %v854
        %v1090 = vpop.f32.mrb[0].mxu0
        %v1091 = vadd.f32 %v719, %v1090
        %v1092 = vpop.f32.mrb[0].mxu0
        %v1093 = vpop.f32.mrb[0].mxu0
        %v1094 = vadd.f32 %v724, %v1093
        %v1095 = vpop.f32.mrb[0].mxu0
        %1096 = vmatprep.mubr.bf16.mxu0 0
        %1097 = vmatmul.mubr.bf16.gmra.mrb[0].mxu0 %v855
        %v1098 = vpop.f32.mrb[0].mxu0
        %v1099 = vadd.f32 %v729, %v1098
        %v1100 = vpop.f32.mrb[0].mxu0
        %v1101 = vpop.f32.mrb[0].mxu0
        %v1102 = vadd.f32 %v734, %v1101
        %v1103 = vpop.f32.mrb[0].mxu0
        %1104 = vdwg.mxu0
        %v1105 = vmul.f32 %v915, 2.0
        %v1106 = vmul.f32 %v918, 2.0
        %v1107 = vmul.f32 %v923, 2.0
        %v1108 = vmul.f32 %v926, 2.0
        %v1109 = vmul.f32 %v931, 2.0
        %v1110 = vmul.f32 %v934, 2.0
        %v1111 = vmul.f32 %v939, 2.0
        %v1112 = vmul.f32 %v942, 2.0
        %v1113 = vmul.f32 %v947, 2.0
        %v1114 = vmul.f32 %v950, 2.0
        %v1115 = vmul.f32 %v955, 2.0
        %v1116 = vmul.f32 %v958, 2.0
        %v1117 = vmul.f32 %v963, 2.0
        %v1118 = vmul.f32 %v966, 2.0
        %v1119 = vmul.f32 %v971, 2.0
        %v1120 = vmul.f32 %v974, 2.0
        %v1121 = vmul.f32 %v979, 2.0
        %v1122 = vmul.f32 %v982, 2.0
        %v1123 = vmul.f32 %v987, 2.0
        %v1124 = vmul.f32 %v990, 2.0
        %v1125 = vmul.f32 %v995, 2.0
        %v1126 = vmul.f32 %v998, 2.0
        %v1127 = vmul.f32 %v1003, 2.0
        %v1128 = vmul.f32 %v1006, 2.0
        %v1129 = vmul.f32 %v1011, 2.0
        %v1130 = vmul.f32 %v1014, 2.0
        %v1131 = vmul.f32 %v1019, 2.0
        %v1132 = vmul.f32 %v1022, 2.0
        %v1133 = vmul.f32 %v1027, 2.0
        %v1134 = vmul.f32 %v1030, 2.0
        %v1135 = vmul.f32 %v1035, 2.0
        %v1136 = vmul.f32 %v1038, 2.0
        %v1137 = vmul.f32 %v1043, 2.0
        %v1138 = vmul.f32 %v1046, 2.0
        %v1139 = vmul.f32 %v1051, 2.0
        %v1140 = vmul.f32 %v1054, 2.0
        %v1141 = vmul.f32 %v1059, 2.0
        %v1142 = vmul.f32 %v1062, 2.0
        %v1143 = vmul.f32 %v1067, 2.0
        %v1144 = vmul.f32 %v1070, 2.0
        %v1145 = vmul.f32 %v1075, 2.0
        %v1146 = vmul.f32 %v1078, 2.0
        %v1147 = vmul.f32 %v1083, 2.0
        %v1148 = vmul.f32 %v1086, 2.0
        %v1149 = vmul.f32 %v1091, 2.0
        %v1150 = vmul.f32 %v1094, 2.0
        %v1151 = vmul.f32 %v1099, 2.0
        %v1152 = vmul.f32 %v1102, 2.0
        %v1153 = vtanh.pop %v1105
        %v1154 = vtanh.pop %v1106
        %v1155 = vtanh.pop %v1107
        %v1156 = vtanh.pop %v1108
        %v1157 = vtanh.pop %v1109
        %v1158 = vtanh.pop %v1110
        %v1159 = vtanh.pop %v1111
        %v1160 = vtanh.pop %v1112
        %v1161 = vtanh.pop %v1113
        %v1162 = vtanh.pop %v1114
        %v1163 = vtanh.pop %v1115
        %v1164 = vtanh.pop %v1116
        %v1165 = vtanh.pop %v1117
        %v1166 = vtanh.pop %v1118
        %v1167 = vtanh.pop %v1119
        %v1168 = vtanh.pop %v1120
        %v1169 = vtanh.pop %v1121
        %v1170 = vtanh.pop %v1122
        %v1171 = vtanh.pop %v1123
        %v1172 = vtanh.pop %v1124
        %v1173 = vtanh.pop %v1125
        %v1174 = vtanh.pop %v1126
        %v1175 = vtanh.pop %v1127
        %v1176 = vtanh.pop %v1128
        %v1177 = vtanh.pop %v1129
        %v1178 = vtanh.pop %v1130
        %v1179 = vtanh.pop %v1131
        %v1180 = vtanh.pop %v1132
        %v1181 = vtanh.pop %v1133
        %v1182 = vtanh.pop %v1134
        %v1183 = vtanh.pop %v1135
        %v1184 = vtanh.pop %v1136
        %v1185 = vtanh.pop %v1137
        %v1186 = vtanh.pop %v1138
        %v1187 = vtanh.pop %v1139
        %v1188 = vtanh.pop %v1140
        %v1189 = vtanh.pop %v1141
        %v1190 = vtanh.pop %v1142
        %v1191 = vtanh.pop %v1143
        %v1192 = vtanh.pop %v1144
        %v1193 = vtanh.pop %v1145
        %v1194 = vtanh.pop %v1146
        %v1195 = vtanh.pop %v1147
        %v1196 = vtanh.pop %v1148
        %v1197 = vtanh.pop %v1149
        %v1198 = vtanh.pop %v1150
        %v1199 = vtanh.pop %v1151
        %v1200 = vtanh.pop %v1152
        %v1201 = vld [vmem:[#allocation2] sm:$0xff]
        %v1202 = vld [vmem:[#allocation2 + $0x8] sm:$0xf]
        %v1203 = vld [vmem:[#allocation2 + $0xc] sm:$0xff]
        %v1204 = vld [vmem:[#allocation2 + $0x14] sm:$0xf]
        %v1205 = vld [vmem:[#allocation2 + $0x18] sm:$0xff]
        %v1206 = vld [vmem:[#allocation2 + $0x20] sm:$0xf]
        %v1207 = vld [vmem:[#allocation2 + $0x24] sm:$0xff]
        %v1208 = vld [vmem:[#allocation2 + $0x2c] sm:$0xf]
        %v1209 = vld [vmem:[#allocation2 + $0x30] sm:$0xff]
        %v1210 = vld [vmem:[#allocation2 + $0x38] sm:$0xf]
        %v1211 = vld [vmem:[#allocation2 + $0x3c] sm:$0xff]
        %v1212 = vld [vmem:[#allocation2 + $0x44] sm:$0xf]
        %v1213 = vld [vmem:[#allocation2 + $0x48] sm:$0xff]
        %v1214 = vld [vmem:[#allocation2 + $0x50] sm:$0xf]
        %v1215 = vld [vmem:[#allocation2 + $0x54] sm:$0xff]
        %v1216 = vld [vmem:[#allocation2 + $0x5c] sm:$0xf]
        %v1217 = vld [vmem:[#allocation2 + $0x60] sm:$0xff]
        %v1218 = vld [vmem:[#allocation2 + $0x68] sm:$0xf]
        %v1219 = vld [vmem:[#allocation2 + $0x6c] sm:$0xff]
        %v1220 = vld [vmem:[#allocation2 + $0x74] sm:$0xf]
        %v1221 = vld [vmem:[#allocation2 + $0x78] sm:$0xff]
        %v1222 = vld [vmem:[#allocation2 + $0x80] sm:$0xf]
        %v1223 = vld [vmem:[#allocation2 + $0x84] sm:$0xff]
        %v1224 = vld [vmem:[#allocation2 + $0x8c] sm:$0xf]
        %v1225 = vld [vmem:[#allocation2 + $0x90] sm:$0xff]
        %v1226 = vld [vmem:[#allocation2 + $0x98] sm:$0xf]
        %v1227 = vld [vmem:[#allocation2 + $0x9c] sm:$0xff]
        %v1228 = vld [vmem:[#allocation2 + $0xa4] sm:$0xf]
        %v1229 = vld [vmem:[#allocation2 + $0xa8] sm:$0xff]
        %v1230 = vld [vmem:[#allocation2 + $0xb0] sm:$0xf]
        %v1231 = vld [vmem:[#allocation2 + $0xb4] sm:$0xff]
        %v1232 = vld [vmem:[#allocation2 + $0xbc] sm:$0xf]
        %v1233 = vpack.c.bf16 %v1154, %v1153
        %v1234 = vpack.c.bf16 %v1156, %v1155
        %v1235 = vpack.c.bf16 %v1158, %v1157
        %v1236 = vpack.c.bf16 %v1160, %v1159
        %v1237 = vpack.c.bf16 %v1162, %v1161
        %v1238 = vpack.c.bf16 %v1164, %v1163
        %v1239 = vpack.c.bf16 %v1166, %v1165
        %v1240 = vpack.c.bf16 %v1168, %v1167
        %v1241 = vpack.c.bf16 %v1170, %v1169
        %v1242 = vpack.c.bf16 %v1172, %v1171
        %v1243 = vpack.c.bf16 %v1174, %v1173
        %v1244 = vpack.c.bf16 %v1176, %v1175
        %v1245 = vpack.c.bf16 %v1178, %v1177
        %v1246 = vpack.c.bf16 %v1180, %v1179
        %v1247 = vpack.c.bf16 %v1182, %v1181
        %v1248 = vpack.c.bf16 %v1184, %v1183
        %v1249 = vpack.c.bf16 %v1186, %v1185
        %v1250 = vpack.c.bf16 %v1188, %v1187
        %v1251 = vpack.c.bf16 %v1190, %v1189
        %v1252 = vpack.c.bf16 %v1192, %v1191
        %v1253 = vpack.c.bf16 %v1194, %v1193
        %v1254 = vpack.c.bf16 %v1196, %v1195
        %v1255 = vpack.c.bf16 %v1198, %v1197
        %v1256 = vpack.c.bf16 %v1200, %v1199
        %v1257 = vld [vmem:[%s4] sm:$0xff]
        %v1258 = vld [vmem:[%s4 + $0x8] sm:$0xff]
        %v1259 = vld [vmem:[%s4 + $0x10] sm:$0xff]
        %v1260 = vld [vmem:[%s4 + $0x18] sm:$0xff]
        %v1261 = vld [vmem:[%s4 + $0x20] sm:$0xff]
        %v1262 = vld [vmem:[%s4 + $0x28] sm:$0xff]
        %v1263 = vld [vmem:[%s4 + $0x30] sm:$0xff]
        %v1264 = vld [vmem:[%s4 + $0x38] sm:$0xff]
        %v1265 = vld [vmem:[%s4 + $0x40] sm:$0xff]
        %v1266 = vld [vmem:[%s4 + $0x48] sm:$0xff]
        %v1267 = vld [vmem:[%s4 + $0x50] sm:$0xff]
        %v1268 = vld [vmem:[%s4 + $0x58] sm:$0xff]
        %v1269 = vld [vmem:[%s4 + $0x60] sm:$0xff]
        %v1270 = vld [vmem:[%s4 + $0x68] sm:$0xff]
        %v1271 = vld [vmem:[%s4 + $0x70] sm:$0xff]
        %v1272 = vld [vmem:[%s4 + $0x78] sm:$0xff]
        %1274 = vset.pattern.permute.xlu0 0
        %1275 = vperm.xlu0 %1274, %v1257
        %v1276 = vpop.permute.xlu0 %1275
        %1279 = vset.pattern.permute.xlu0 0
        %1280 = vperm.xlu0 %1279, %v1258
        %v1281 = vpop.permute.xlu0 %1280
        %1284 = vset.pattern.permute.xlu0 0
        %1285 = vperm.xlu0 %1284, %v1259
        %v1286 = vpop.permute.xlu0 %1285
        %1289 = vset.pattern.permute.xlu0 0
        %1290 = vperm.xlu0 %1289, %v1260
        %v1291 = vpop.permute.xlu0 %1290
        %1294 = vset.pattern.permute.xlu0 0
        %1295 = vperm.xlu0 %1294, %v1261
        %v1296 = vpop.permute.xlu0 %1295
        %1299 = vset.pattern.permute.xlu0 0
        %1300 = vperm.xlu0 %1299, %v1262
        %v1301 = vpop.permute.xlu0 %1300
        %1304 = vset.pattern.permute.xlu0 0
        %1305 = vperm.xlu0 %1304, %v1263
        %v1306 = vpop.permute.xlu0 %1305
        %1309 = vset.pattern.permute.xlu0 0
        %1310 = vperm.xlu0 %1309, %v1264
        %v1311 = vpop.permute.xlu0 %1310
        %1314 = vset.pattern.permute.xlu0 0
        %1315 = vperm.xlu0 %1314, %v1265
        %v1316 = vpop.permute.xlu0 %1315
        %1319 = vset.pattern.permute.xlu0 0
        %1320 = vperm.xlu0 %1319, %v1266
        %v1321 = vpop.permute.xlu0 %1320
        %1324 = vset.pattern.permute.xlu0 0
        %1325 = vperm.xlu0 %1324, %v1267
        %v1326 = vpop.permute.xlu0 %1325
        %1329 = vset.pattern.permute.xlu0 0
        %1330 = vperm.xlu0 %1329, %v1268
        %v1331 = vpop.permute.xlu0 %1330
        %1334 = vset.pattern.permute.xlu0 0
        %1335 = vperm.xlu0 %1334, %v1269
        %v1336 = vpop.permute.xlu0 %1335
        %1339 = vset.pattern.permute.xlu0 0
        %1340 = vperm.xlu0 %1339, %v1270
        %v1341 = vpop.permute.xlu0 %1340
        %1344 = vset.pattern.permute.xlu0 0
        %1345 = vperm.xlu0 %1344, %v1271
        %v1346 = vpop.permute.xlu0 %1345
        %1349 = vset.pattern.permute.xlu0 0
        %1350 = vperm.xlu0 %1349, %v1272
        %v1351 = vpop.permute.xlu0 %1350
        %v1385 = vunpack.c.l.b16 %v1201
        %v1386 = vunpack.c.h.b16 %v1201
        %v1387 = vunpack.c.l.b16 %v1202
        %v1388 = vunpack.c.l.b16 %v1203
        %v1389 = vunpack.c.h.b16 %v1203
        %v1390 = vunpack.c.l.b16 %v1204
        %v1391 = vunpack.c.l.b16 %v1205
        %v1392 = vunpack.c.h.b16 %v1205
        %v1393 = vunpack.c.l.b16 %v1206
        %v1394 = vunpack.c.l.b16 %v1207
        %v1395 = vunpack.c.h.b16 %v1207
        %v1396 = vunpack.c.l.b16 %v1208
        %v1397 = vunpack.c.l.b16 %v1209
        %v1398 = vunpack.c.h.b16 %v1209
        %v1399 = vunpack.c.l.b16 %v1210
        %v1400 = vunpack.c.l.b16 %v1211
        %v1401 = vunpack.c.h.b16 %v1211
        %v1402 = vunpack.c.l.b16 %v1212
        %v1403 = vunpack.c.l.b16 %v1213
        %v1404 = vunpack.c.h.b16 %v1213
        %v1405 = vunpack.c.l.b16 %v1214
        %v1406 = vunpack.c.l.b16 %v1215
        %v1407 = vunpack.c.h.b16 %v1215
        %v1408 = vunpack.c.l.b16 %v1216
        %v1409 = vunpack.c.l.b16 %v1217
        %v1410 = vunpack.c.h.b16 %v1217
        %v1411 = vunpack.c.l.b16 %v1218
        %v1412 = vunpack.c.l.b16 %v1219
        %v1413 = vunpack.c.h.b16 %v1219
        %v1414 = vunpack.c.l.b16 %v1220
        %v1415 = vunpack.c.l.b16 %v1221
        %v1416 = vunpack.c.h.b16 %v1221
        %v1417 = vunpack.c.l.b16 %v1222
        %v1418 = vunpack.c.l.b16 %v1223
        %v1419 = vunpack.c.h.b16 %v1223
        %v1420 = vunpack.c.l.b16 %v1224
        %v1421 = vunpack.c.l.b16 %v1225
        %v1422 = vunpack.c.h.b16 %v1225
        %v1423 = vunpack.c.l.b16 %v1226
        %v1424 = vunpack.c.l.b16 %v1227
        %v1425 = vunpack.c.h.b16 %v1227
        %v1426 = vunpack.c.l.b16 %v1228
        %v1427 = vunpack.c.l.b16 %v1229
        %v1428 = vunpack.c.h.b16 %v1229
        %v1429 = vunpack.c.l.b16 %v1230
        %v1430 = vunpack.c.l.b16 %v1231
        %v1431 = vunpack.c.h.b16 %v1231
        %v1432 = vunpack.c.l.b16 %v1232
        %v1433 = vpack.c.b16 %v1388, %v1385
        %v1434 = vpack.c.b16 %v1389, %v1386
        %v1435 = vpack.c.b16 %v1390, %v1387
        %v1436 = vpack.c.b16 %v1394, %v1391
        %v1437 = vpack.c.b16 %v1395, %v1392
        %v1438 = vpack.c.b16 %v1396, %v1393
        %v1439 = vpack.c.b16 %v1400, %v1397
        %v1440 = vpack.c.b16 %v1401, %v1398
        %v1441 = vpack.c.b16 %v1402, %v1399
        %v1442 = vpack.c.b16 %v1406, %v1403
        %v1443 = vpack.c.b16 %v1407, %v1404
        %v1444 = vpack.c.b16 %v1408, %v1405
        %v1445 = vpack.c.b16 %v1412, %v1409
        %v1446 = vpack.c.b16 %v1413, %v1410
        %v1447 = vpack.c.b16 %v1414, %v1411
        %v1448 = vpack.c.b16 %v1418, %v1415
        %v1449 = vpack.c.b16 %v1419, %v1416
        %v1450 = vpack.c.b16 %v1420, %v1417
        %v1451 = vpack.c.b16 %v1424, %v1421
        %v1452 = vpack.c.b16 %v1425, %v1422
        %v1453 = vpack.c.b16 %v1426, %v1423
        %v1454 = vpack.c.b16 %v1430, %v1427
        %v1455 = vpack.c.b16 %v1431, %v1428
        %v1456 = vpack.c.b16 %v1432, %v1429
        %1481 = vmatprep.subr.bf16.mxu0 0
        %1482 = vmatpush1.bf16.msra.mxu0 %v1233
        %1483 = vmatprep.subr.bf16.mxu0 0
        %1484 = vmatpush1.bf16.msra.mxu0 %v1234
        %1485 = vmatprep.subr.bf16.mxu0 0
        %1486 = vmatpush1.bf16.msra.mxu0 %v1235
        %1487 = vmatprep.subr.bf16.mxu0 0
        %1488 = vmatpush1.bf16.msra.mxu0 %v1236
        %1489 = vmatprep.subr.bf16.mxu0 0
        %1490 = vmatpush1.bf16.msra.mxu0 %v1237
        %1491 = vmatprep.subr.bf16.mxu0 0
        %1492 = vmatpush1.bf16.msra.mxu0 %v1238
        %1493 = vmatprep.subr.bf16.mxu0 0
        %1494 = vmatpush1.bf16.msra.mxu0 %v1239
        %1495 = vmatprep.subr.bf16.mxu0 0
        %1496 = vmatpush1.bf16.msra.mxu0 %v1240
        %1497 = vmatprep.subr.bf16.mxu0 0
        %1498 = vmatpush1.bf16.msra.mxu0 %v1241
        %1499 = vmatprep.subr.bf16.mxu0 0
        %1500 = vmatpush1.bf16.msra.mxu0 %v1242
        %1501 = vmatprep.subr.bf16.mxu0 0
        %1502 = vmatpush1.bf16.msra.mxu0 %v1243
        %1503 = vmatprep.subr.bf16.mxu0 0
        %1504 = vmatpush1.bf16.msra.mxu0 %v1244
        %1505 = vmatprep.subr.bf16.mxu0 0
        %1506 = vmatpush1.bf16.msra.mxu0 %v1245
        %1507 = vmatprep.subr.bf16.mxu0 0
        %1508 = vmatpush1.bf16.msra.mxu0 %v1246
        %1509 = vmatprep.subr.bf16.mxu0 0
        %1510 = vmatpush1.bf16.msra.mxu0 %v1247
        %1511 = vmatprep.subr.bf16.mxu0 0
        %1512 = vmatpush1.bf16.msra.mxu0 %v1248
        %1513 = vmatprep.mubr.bf16.mxu0 %v1434
        %1514 = vmatmul.mubr.bf16.gmra.mrb[0].mxu0 %v1433
        %v1515 = vpop.f32.mrb[0].mxu0
        %v1516 = vadd.f32 %v1276, %v1515
        %v1517 = vpop.f32.mrb[0].mxu0
        %v1518 = vpop.f32.mrb[0].mxu0
        %v1519 = vadd.f32 %v1281, %v1518
        %v1520 = vpop.f32.mrb[0].mxu0
        %1521 = vmatprep.mubr.bf16.mxu0 %v1437
        %1522 = vmatmul.mubr.bf16.gmra.mrb[0].mxu0 %v1436
        %v1523 = vpop.f32.mrb[0].mxu0
        %v1524 = vadd.f32 %v1286, %v1523
        %v1525 = vpop.f32.mrb[0].mxu0
        %v1526 = vpop.f32.mrb[0].mxu0
        %v1527 = vadd.f32 %v1291, %v1526
        %v1528 = vpop.f32.mrb[0].mxu0
        %1529 = vmatprep.mubr.bf16.mxu0 %v1440
        %1530 = vmatmul.mubr.bf16.gmra.mrb[0].mxu0 %v1439
        %v1531 = vpop.f32.mrb[0].mxu0
        %v1532 = vadd.f32 %v1296, %v1531
        %v1533 = vpop.f32.mrb[0].mxu0
        %v1534 = vpop.f32.mrb[0].mxu0
        %v1535 = vadd.f32 %v1301, %v1534
        %v1536 = vpop.f32.mrb[0].mxu0
        %1537 = vmatprep.mubr.bf16.mxu0 %v1443
        %1538 = vmatmul.mubr.bf16.gmra.mrb[0].mxu0 %v1442
        %v1539 = vpop.f32.mrb[0].mxu0
        %v1540 = vadd.f32 %v1306, %v1539
        %v1541 = vpop.f32.mrb[0].mxu0
        %v1542 = vpop.f32.mrb[0].mxu0
        %v1543 = vadd.f32 %v1311, %v1542
        %v1544 = vpop.f32.mrb[0].mxu0
        %1545 = vmatprep.mubr.bf16.mxu0 %v1446
        %1546 = vmatmul.mubr.bf16.gmra.mrb[0].mxu0 %v1445
        %v1547 = vpop.f32.mrb[0].mxu0
        %v1548 = vadd.f32 %v1316, %v1547
        %v1549 = vpop.f32.mrb[0].mxu0
        %v1550 = vpop.f32.mrb[0].mxu0
        %v1551 = vadd.f32 %v1321, %v1550
        %v1552 = vpop.f32.mrb[0].mxu0
        %1553 = vmatprep.mubr.bf16.mxu0 %v1449
        %1554 = vmatmul.mubr.bf16.gmra.mrb[0].mxu0 %v1448
        %v1555 = vpop.f32.mrb[0].mxu0
        %v1556 = vadd.f32 %v1326, %v1555
        %v1557 = vpop.f32.mrb[0].mxu0
        %v1558 = vpop.f32.mrb[0].mxu0
        %v1559 = vadd.f32 %v1331, %v1558
        %v1560 = vpop.f32.mrb[0].mxu0
        %1561 = vmatprep.mubr.bf16.mxu0 %v1452
        %1562 = vmatmul.mubr.bf16.gmra.mrb[0].mxu0 %v1451
        %v1563 = vpop.f32.mrb[0].mxu0
        %v1564 = vadd.f32 %v1336, %v1563
        %v1565 = vpop.f32.mrb[0].mxu0
        %v1566 = vpop.f32.mrb[0].mxu0
        %v1567 = vadd.f32 %v1341, %v1566
        %v1568 = vpop.f32.mrb[0].mxu0
        %1569 = vmatprep.mubr.bf16.mxu0 %v1455
        %1570 = vmatmul.mubr.bf16.gmra.mrb[0].mxu0 %v1454
        %v1571 = vpop.f32.mrb[0].mxu0
        %v1572 = vadd.f32 %v1346, %v1571
        %v1573 = vpop.f32.mrb[0].mxu0
        %v1574 = vpop.f32.mrb[0].mxu0
        %v1575 = vadd.f32 %v1351, %v1574
        %v1576 = vpop.f32.mrb[0].mxu0
        %1577 = vdwg.mxu0
        %1578 = vmatprep.subr.bf16.mxu0 0
        %1579 = vmatpush1.bf16.msra.mxu0 %v1249
        %1580 = vmatprep.subr.bf16.mxu0 0
        %1581 = vmatpush1.bf16.msra.mxu0 %v1250
        %1582 = vmatprep.subr.bf16.mxu0 0
        %1583 = vmatpush1.bf16.msra.mxu0 %v1251
        %1584 = vmatprep.subr.bf16.mxu0 0
        %1585 = vmatpush1.bf16.msra.mxu0 %v1252
        %1586 = vmatprep.subr.bf16.mxu0 0
        %1587 = vmatpush1.bf16.msra.mxu0 %v1253
        %1588 = vmatprep.subr.bf16.mxu0 0
        %1589 = vmatpush1.bf16.msra.mxu0 %v1254
        %1590 = vmatprep.subr.bf16.mxu0 0
        %1591 = vmatpush1.bf16.msra.mxu0 %v1255
        %1592 = vmatprep.subr.bf16.mxu0 0
        %1593 = vmatpush1.bf16.msra.mxu0 %v1256
        %1594 = vmatprep.subr.bf16.mxu0 0
        %1595 = vmatpush1.bf16.msra.mxu0 0
        %1596 = vmatprep.subr.bf16.mxu0 0
        %1597 = vmatpush1.bf16.msra.mxu0 0
        %1598 = vmatprep.subr.bf16.mxu0 0
        %1599 = vmatpush1.bf16.msra.mxu0 0
        %1600 = vmatprep.subr.bf16.mxu0 0
        %1601 = vmatpush1.bf16.msra.mxu0 0
        %1602 = vmatprep.subr.bf16.mxu0 0
        %1603 = vmatpush1.bf16.msra.mxu0 0
        %1604 = vmatprep.subr.bf16.mxu0 0
        %1605 = vmatpush1.bf16.msra.mxu0 0
        %1606 = vmatprep.subr.bf16.mxu0 0
        %1607 = vmatpush1.bf16.msra.mxu0 0
        %1608 = vmatprep.subr.bf16.mxu0 0
        %1609 = vmatpush1.bf16.msra.mxu0 0
        %1610 = vmatprep.mubr.bf16.mxu0 0
        %1611 = vmatmul.mubr.bf16.gmra.mrb[0].mxu0 %v1435
        %v1612 = vpop.f32.mrb[0].mxu0
        %v1613 = vadd.f32 %v1516, %v1612
        %v1614 = vpop.f32.mrb[0].mxu0
        %v1615 = vpop.f32.mrb[0].mxu0
        %v1616 = vadd.f32 %v1519, %v1615
        %v1617 = vpop.f32.mrb[0].mxu0
        %1618 = vmatprep.mubr.bf16.mxu0 0
        %1619 = vmatmul.mubr.bf16.gmra.mrb[0].mxu0 %v1438
        %v1620 = vpop.f32.mrb[0].mxu0
        %v1621 = vadd.f32 %v1524, %v1620
        %v1622 = vpop.f32.mrb[0].mxu0
        %v1623 = vpop.f32.mrb[0].mxu0
        %v1624 = vadd.f32 %v1527, %v1623
        %v1625 = vpop.f32.mrb[0].mxu0
        %1626 = vmatprep.mubr.bf16.mxu0 0
        %1627 = vmatmul.mubr.bf16.gmra.mrb[0].mxu0 %v1441
        %v1628 = vpop.f32.mrb[0].mxu0
        %v1629 = vadd.f32 %v1532, %v1628
        %v1630 = vpop.f32.mrb[0].mxu0
        %v1631 = vpop.f32.mrb[0].mxu0
        %v1632 = vadd.f32 %v1535, %v1631
        %v1633 = vpop.f32.mrb[0].mxu0
        %1634 = vmatprep.mubr.bf16.mxu0 0
        %1635 = vmatmul.mubr.bf16.gmra.mrb[0].mxu0 %v1444
        %v1636 = vpop.f32.mrb[0].mxu0
        %v1637 = vadd.f32 %v1540, %v1636
        %v1638 = vpop.f32.mrb[0].mxu0
        %v1639 = vpop.f32.mrb[0].mxu0
        %v1640 = vadd.f32 %v1543, %v1639
        %v1641 = vpop.f32.mrb[0].mxu0
        %1642 = vmatprep.mubr.bf16.mxu0 0
        %1643 = vmatmul.mubr.bf16.gmra.mrb[0].mxu0 %v1447
        %v1644 = vpop.f32.mrb[0].mxu0
        %v1645 = vadd.f32 %v1548, %v1644
        %v1646 = vpop.f32.mrb[0].mxu0
        %v1647 = vpop.f32.mrb[0].mxu0
        %v1648 = vadd.f32 %v1551, %v1647
        %v1649 = vpop.f32.mrb[0].mxu0
        %1650 = vmatprep.mubr.bf16.mxu0 0
        %1651 = vmatmul.mubr.bf16.gmra.mrb[0].mxu0 %v1450
        %v1652 = vpop.f32.mrb[0].mxu0
        %v1653 = vadd.f32 %v1556, %v1652
        %v1654 = vpop.f32.mrb[0].mxu0
        %v1655 = vpop.f32.mrb[0].mxu0
        %v1656 = vadd.f32 %v1559, %v1655
        %v1657 = vpop.f32.mrb[0].mxu0
        %1658 = vmatprep.mubr.bf16.mxu0 0
        %1659 = vmatmul.mubr.bf16.gmra.mrb[0].mxu0 %v1453
        %v1660 = vpop.f32.mrb[0].mxu0
        %v1661 = vadd.f32 %v1564, %v1660
        %v1662 = vpop.f32.mrb[0].mxu0
        %v1663 = vpop.f32.mrb[0].mxu0
        %v1664 = vadd.f32 %v1567, %v1663
        %v1665 = vpop.f32.mrb[0].mxu0
        %1666 = vmatprep.mubr.bf16.mxu0 0
        %1667 = vmatmul.mubr.bf16.gmra.mrb[0].mxu0 %v1456
        %v1668 = vpop.f32.mrb[0].mxu0
        %v1669 = vadd.f32 %v1572, %v1668
        %v1670 = vpop.f32.mrb[0].mxu0
        %v1671 = vpop.f32.mrb[0].mxu0
        %v1672 = vadd.f32 %v1575, %v1671
        %v1673 = vpop.f32.mrb[0].mxu0
        %1674 = vdwg.mxu0
        %v1675 = vmul.f32 %v1613, 2.0
        %v1676 = vmul.f32 %v1616, 2.0
        %v1677 = vmul.f32 %v1621, 2.0
        %v1678 = vmul.f32 %v1624, 2.0
        %v1679 = vmul.f32 %v1629, 2.0
        %v1680 = vmul.f32 %v1632, 2.0
        %v1681 = vmul.f32 %v1637, 2.0
        %v1682 = vmul.f32 %v1640, 2.0
        %v1683 = vmul.f32 %v1645, 2.0
        %v1684 = vmul.f32 %v1648, 2.0
        %v1685 = vmul.f32 %v1653, 2.0
        %v1686 = vmul.f32 %v1656, 2.0
        %v1687 = vmul.f32 %v1661, 2.0
        %v1688 = vmul.f32 %v1664, 2.0
        %v1689 = vmul.f32 %v1669, 2.0
        %v1690 = vmul.f32 %v1672, 2.0
        %v1691 = vtanh.pop %v1675
        %v1692 = vtanh.pop %v1676
        %v1693 = vtanh.pop %v1677
        %v1694 = vtanh.pop %v1678
        %v1695 = vtanh.pop %v1679
        %v1696 = vtanh.pop %v1680
        %v1697 = vtanh.pop %v1681
        %v1698 = vtanh.pop %v1682
        %v1699 = vtanh.pop %v1683
        %v1700 = vtanh.pop %v1684
        %v1701 = vtanh.pop %v1685
        %v1702 = vtanh.pop %v1686
        %v1703 = vtanh.pop %v1687
        %v1704 = vtanh.pop %v1688
        %v1705 = vtanh.pop %v1689
        %v1706 = vtanh.pop %v1690
        %v1707 = vadd.f32 %v1691, %v376
        %v1708 = vadd.f32 %v1692, %v377
        %v1709 = vadd.f32 %v1693, %v378
        %v1710 = vadd.f32 %v1694, %v379
        %v1711 = vadd.f32 %v1695, %v380
        %v1712 = vadd.f32 %v1696, %v381
        %v1713 = vadd.f32 %v1697, %v382
        %v1714 = vadd.f32 %v1698, %v383
        %v1715 = vadd.f32 %v1699, %v384
        %v1716 = vadd.f32 %v1700, %v385
        %v1717 = vadd.f32 %v1701, %v386
        %v1718 = vadd.f32 %v1702, %v387
        %v1719 = vadd.f32 %v1703, %v388
        %v1720 = vadd.f32 %v1704, %v389
        %v1721 = vadd.f32 %v1705, %v390
        %v1722 = vadd.f32 %v1706, %v391
        %v1723 = vmul.f32 %v1707, 2.0
        %v1724 = vmul.f32 %v1708, 2.0
        %v1725 = vmul.f32 %v1709, 2.0
        %v1726 = vmul.f32 %v1710, 2.0
        %v1727 = vmul.f32 %v1711, 2.0
        %v1728 = vmul.f32 %v1712, 2.0
        %v1729 = vmul.f32 %v1713, 2.0
        %v1730 = vmul.f32 %v1714, 2.0
        %v1731 = vmul.f32 %v1715, 2.0
        %v1732 = vmul.f32 %v1716, 2.0
        %v1733 = vmul.f32 %v1717, 2.0
        %v1734 = vmul.f32 %v1718, 2.0
        %v1735 = vmul.f32 %v1719, 2.0
        %v1736 = vmul.f32 %v1720, 2.0
        %v1737 = vmul.f32 %v1721, 2.0
        %v1738 = vmul.f32 %v1722, 2.0
        %v1739 = vtanh.pop %v1723
        %v1740 = vtanh.pop %v1724
        %v1741 = vtanh.pop %v1725
        %v1742 = vtanh.pop %v1726
        %v1743 = vtanh.pop %v1727
        %v1744 = vtanh.pop %v1728
        %v1745 = vtanh.pop %v1729
        %v1746 = vtanh.pop %v1730
        %v1747 = vtanh.pop %v1731
        %v1748 = vtanh.pop %v1732
        %v1749 = vtanh.pop %v1733
        %v1750 = vtanh.pop %v1734
        %v1751 = vtanh.pop %v1735
        %v1752 = vtanh.pop %v1736
        %v1753 = vtanh.pop %v1737
        %v1754 = vtanh.pop %v1738
        %v1755 = vpack.c.bf16 %v1740, %v1739
        %v1756 = vpack.c.bf16 %v1742, %v1741
        %v1757 = vpack.c.bf16 %v1744, %v1743
        %v1758 = vpack.c.bf16 %v1746, %v1745
        %v1759 = vpack.c.bf16 %v1748, %v1747
        %v1760 = vpack.c.bf16 %v1750, %v1749
        %v1761 = vpack.c.bf16 %v1752, %v1751
        %v1762 = vpack.c.bf16 %v1754, %v1753
        %v1763 = vld [vmem:[#allocation5] sm:$0xff]
        %v1764 = vld [vmem:[#allocation5 + $0x8] sm:$0xf]
        %v1765 = vld [vmem:[#allocation5 + $0xc] sm:$0xff]
        %v1766 = vld [vmem:[#allocation5 + $0x14] sm:$0xf]
        %v1767 = vld [vmem:[#allocation5 + $0x18] sm:$0xff]
        %v1768 = vld [vmem:[#allocation5 + $0x20] sm:$0xf]
        %v1769 = vld [vmem:[#allocation5 + $0x24] sm:$0xff]
        %v1770 = vld [vmem:[#allocation5 + $0x2c] sm:$0xf]
        %v1771 = vld [vmem:[#allocation5 + $0x30] sm:$0xff]
        %v1772 = vld [vmem:[#allocation5 + $0x38] sm:$0xf]
        %v1773 = vld [vmem:[#allocation5 + $0x3c] sm:$0xff]
        %v1774 = vld [vmem:[#allocation5 + $0x44] sm:$0xf]
        %v1775 = vld [vmem:[#allocation5 + $0x48] sm:$0xff]
        %v1776 = vld [vmem:[#allocation5 + $0x50] sm:$0xf]
        %v1777 = vld [vmem:[#allocation5 + $0x54] sm:$0xff]
        %v1778 = vld [vmem:[#allocation5 + $0x5c] sm:$0xf]
        %v1779 = vld [vmem:[#allocation5 + $0x60] sm:$0xff]
        %v1780 = vld [vmem:[#allocation5 + $0x68] sm:$0xf]
        %v1781 = vld [vmem:[#allocation5 + $0x6c] sm:$0xff]
        %v1782 = vld [vmem:[#allocation5 + $0x74] sm:$0xf]
        %v1783 = vld [vmem:[#allocation5 + $0x78] sm:$0xff]
        %v1784 = vld [vmem:[#allocation5 + $0x80] sm:$0xf]
        %v1785 = vld [vmem:[#allocation5 + $0x84] sm:$0xff]
        %v1786 = vld [vmem:[#allocation5 + $0x8c] sm:$0xf]
        %v1787 = vld [vmem:[#allocation5 + $0x90] sm:$0xff]
        %v1788 = vld [vmem:[#allocation5 + $0x98] sm:$0xf]
        %v1789 = vld [vmem:[#allocation5 + $0x9c] sm:$0xff]
        %v1790 = vld [vmem:[#allocation5 + $0xa4] sm:$0xf]
        %v1791 = vld [vmem:[#allocation5 + $0xa8] sm:$0xff]
        %v1792 = vld [vmem:[#allocation5 + $0xb0] sm:$0xf]
        %v1793 = vld [vmem:[#allocation5 + $0xb4] sm:$0xff]
        %v1794 = vld [vmem:[#allocation5 + $0xbc] sm:$0xf]
        %v1795 = vld [vmem:[%s6] sm:$0x7]
        %v1797 = vlaneseq
        %v1798 = vshrl.u32 %v1797, 7
        %v1799 = vsub.s32 0, %v1798
        %v1800 = vrot.slane %v1795, %v1799
        %v1801 = vlaneseq
        %v1802 = vshrl.u32 %v1801, 7
        %v1803 = vsub.s32 1, %v1802
        %v1804 = vrot.slane %v1795, %v1803
        %v1805 = vlaneseq
        %v1806 = vshrl.u32 %v1805, 7
        %v1807 = vsub.s32 2, %v1806
        %v1808 = vrot.slane %v1795, %v1807
        %v1844 = vunpack.c.l.b16 %v1763
        %v1845 = vunpack.c.h.b16 %v1763
        %v1846 = vunpack.c.l.b16 %v1764
        %v1847 = vunpack.c.l.b16 %v1765
        %v1848 = vunpack.c.h.b16 %v1765
        %v1849 = vunpack.c.l.b16 %v1766
        %v1850 = vunpack.c.l.b16 %v1767
        %v1851 = vunpack.c.h.b16 %v1767
        %v1852 = vunpack.c.l.b16 %v1768
        %v1853 = vunpack.c.l.b16 %v1769
        %v1854 = vunpack.c.h.b16 %v1769
        %v1855 = vunpack.c.l.b16 %v1770
        %v1856 = vunpack.c.l.b16 %v1771
        %v1857 = vunpack.c.h.b16 %v1771
        %v1858 = vunpack.c.l.b16 %v1772
        %v1859 = vunpack.c.l.b16 %v1773
        %v1860 = vunpack.c.h.b16 %v1773
        %v1861 = vunpack.c.l.b16 %v1774
        %v1862 = vunpack.c.l.b16 %v1775
        %v1863 = vunpack.c.h.b16 %v1775
        %v1864 = vunpack.c.l.b16 %v1776
        %v1865 = vunpack.c.l.b16 %v1777
        %v1866 = vunpack.c.h.b16 %v1777
        %v1867 = vunpack.c.l.b16 %v1778
        %v1868 = vunpack.c.l.b16 %v1779
        %v1869 = vunpack.c.h.b16 %v1779
        %v1870 = vunpack.c.l.b16 %v1780
        %v1871 = vunpack.c.l.b16 %v1781
        %v1872 = vunpack.c.h.b16 %v1781
        %v1873 = vunpack.c.l.b16 %v1782
        %v1874 = vunpack.c.l.b16 %v1783
        %v1875 = vunpack.c.h.b16 %v1783
        %v1876 = vunpack.c.l.b16 %v1784
        %v1877 = vunpack.c.l.b16 %v1785
        %v1878 = vunpack.c.h.b16 %v1785
        %v1879 = vunpack.c.l.b16 %v1786
        %v1880 = vunpack.c.l.b16 %v1787
        %v1881 = vunpack.c.h.b16 %v1787
        %v1882 = vunpack.c.l.b16 %v1788
        %v1883 = vunpack.c.l.b16 %v1789
        %v1884 = vunpack.c.h.b16 %v1789
        %v1885 = vunpack.c.l.b16 %v1790
        %v1886 = vunpack.c.l.b16 %v1791
        %v1887 = vunpack.c.h.b16 %v1791
        %v1888 = vunpack.c.l.b16 %v1792
        %v1889 = vunpack.c.l.b16 %v1793
        %v1890 = vunpack.c.h.b16 %v1793
        %v1891 = vunpack.c.l.b16 %v1794
        %v1892 = vpack.c.b16 %v1847, %v1844
        %v1893 = vpack.c.b16 %v1848, %v1845
        %v1894 = vpack.c.b16 %v1849, %v1846
        %v1895 = vpack.c.b16 %v1853, %v1850
        %v1896 = vpack.c.b16 %v1854, %v1851
        %v1897 = vpack.c.b16 %v1855, %v1852
        %v1898 = vpack.c.b16 %v1859, %v1856
        %v1899 = vpack.c.b16 %v1860, %v1857
        %v1900 = vpack.c.b16 %v1861, %v1858
        %v1901 = vpack.c.b16 %v1865, %v1862
        %v1902 = vpack.c.b16 %v1866, %v1863
        %v1903 = vpack.c.b16 %v1867, %v1864
        %v1904 = vpack.c.b16 %v1871, %v1868
        %v1905 = vpack.c.b16 %v1872, %v1869
        %v1906 = vpack.c.b16 %v1873, %v1870
        %v1907 = vpack.c.b16 %v1877, %v1874
        %v1908 = vpack.c.b16 %v1878, %v1875
        %v1909 = vpack.c.b16 %v1879, %v1876
        %v1910 = vpack.c.b16 %v1883, %v1880
        %v1911 = vpack.c.b16 %v1884, %v1881
        %v1912 = vpack.c.b16 %v1885, %v1882
        %v1913 = vpack.c.b16 %v1889, %v1886
        %v1914 = vpack.c.b16 %v1890, %v1887
        %v1915 = vpack.c.b16 %v1891, %v1888
        %1940 = vmatprep.subr.bf16.mxu0 %v1893
        %1941 = vmatpush1.bf16.msra.mxu0 %v1892
        %1942 = vmatprep.subr.bf16.mxu0 %v1896
        %1943 = vmatpush1.bf16.msra.mxu0 %v1895
        %1944 = vmatprep.subr.bf16.mxu0 %v1899
        %1945 = vmatpush1.bf16.msra.mxu0 %v1898
        %1946 = vmatprep.subr.bf16.mxu0 %v1902
        %1947 = vmatpush1.bf16.msra.mxu0 %v1901
        %1948 = vmatprep.subr.bf16.mxu0 %v1905
        %1949 = vmatpush1.bf16.msra.mxu0 %v1904
        %1950 = vmatprep.subr.bf16.mxu0 %v1908
        %1951 = vmatpush1.bf16.msra.mxu0 %v1907
        %1952 = vmatprep.subr.bf16.mxu0 %v1911
        %1953 = vmatpush1.bf16.msra.mxu0 %v1910
        %1954 = vmatprep.subr.bf16.mxu0 %v1914
        %1955 = vmatpush1.bf16.msra.mxu0 %v1913
        %1956 = vmatprep.subr.bf16.mxu0 0
        %1957 = vmatpush1.bf16.msra.mxu0 0
        %1958 = vmatprep.subr.bf16.mxu0 0
        %1959 = vmatpush1.bf16.msra.mxu0 0
        %1960 = vmatprep.subr.bf16.mxu0 0
        %1961 = vmatpush1.bf16.msra.mxu0 0
        %1962 = vmatprep.subr.bf16.mxu0 0
        %1963 = vmatpush1.bf16.msra.mxu0 0
        %1964 = vmatprep.subr.bf16.mxu0 0
        %1965 = vmatpush1.bf16.msra.mxu0 0
        %1966 = vmatprep.subr.bf16.mxu0 0
        %1967 = vmatpush1.bf16.msra.mxu0 0
        %1968 = vmatprep.subr.bf16.mxu0 0
        %1969 = vmatpush1.bf16.msra.mxu0 0
        %1970 = vmatprep.subr.bf16.mxu0 0
        %1971 = vmatpush1.bf16.msra.mxu0 0
        %1972 = vmatprep.mubr.bf16.mxu0 0
        %1973 = vmatmul.mubr.bf16.gmra.mrb[0].mxu0 %v1755
        %v1974 = vpop.f32.mrb[0].mxu0
        %v1975 = vadd.f32 %v1800, %v1974
        %v1976 = vpop.f32.mrb[0].mxu0
        %v1977 = vadd.f32 %v1804, %v1976
        %v1978 = vpop.f32.mrb[0].mxu0
        %v1979 = vadd.f32 %v1800, %v1978
        %v1980 = vpop.f32.mrb[0].mxu0
        %v1981 = vadd.f32 %v1804, %v1980
        %1982 = vmatprep.mubr.bf16.mxu0 0
        %1983 = vmatmul.mubr.bf16.gmra.mrb[0].mxu0 %v1756
        %v1984 = vpop.f32.mrb[0].mxu0
        %v1985 = vadd.f32 %v1800, %v1984
        %v1986 = vpop.f32.mrb[0].mxu0
        %v1987 = vadd.f32 %v1804, %v1986
        %v1988 = vpop.f32.mrb[0].mxu0
        %v1989 = vadd.f32 %v1800, %v1988
        %v1990 = vpop.f32.mrb[0].mxu0
        %v1991 = vadd.f32 %v1804, %v1990
        %1992 = vmatprep.mubr.bf16.mxu0 0
        %1993 = vmatmul.mubr.bf16.gmra.mrb[0].mxu0 %v1757
        %v1994 = vpop.f32.mrb[0].mxu0
        %v1995 = vadd.f32 %v1800, %v1994
        %v1996 = vpop.f32.mrb[0].mxu0
        %v1997 = vadd.f32 %v1804, %v1996
        %v1998 = vpop.f32.mrb[0].mxu0
        %v1999 = vadd.f32 %v1800, %v1998
        %v2000 = vpop.f32.mrb[0].mxu0
        %v2001 = vadd.f32 %v1804, %v2000
        %2002 = vmatprep.mubr.bf16.mxu0 0
        %2003 = vmatmul.mubr.bf16.gmra.mrb[0].mxu0 %v1758
        %v2004 = vpop.f32.mrb[0].mxu0
        %v2005 = vadd.f32 %v1800, %v2004
        %v2006 = vpop.f32.mrb[0].mxu0
        %v2007 = vadd.f32 %v1804, %v2006
        %v2008 = vpop.f32.mrb[0].mxu0
        %v2009 = vadd.f32 %v1800, %v2008
        %v2010 = vpop.f32.mrb[0].mxu0
        %v2011 = vadd.f32 %v1804, %v2010
        %2012 = vmatprep.mubr.bf16.mxu0 0
        %2013 = vmatmul.mubr.bf16.gmra.mrb[0].mxu0 %v1759
        %v2014 = vpop.f32.mrb[0].mxu0
        %v2015 = vadd.f32 %v1800, %v2014
        %v2016 = vpop.f32.mrb[0].mxu0
        %v2017 = vadd.f32 %v1804, %v2016
        %v2018 = vpop.f32.mrb[0].mxu0
        %v2019 = vadd.f32 %v1800, %v2018
        %v2020 = vpop.f32.mrb[0].mxu0
        %v2021 = vadd.f32 %v1804, %v2020
        %2022 = vmatprep.mubr.bf16.mxu0 0
        %2023 = vmatmul.mubr.bf16.gmra.mrb[0].mxu0 %v1760
        %v2024 = vpop.f32.mrb[0].mxu0
        %v2025 = vadd.f32 %v1800, %v2024
        %v2026 = vpop.f32.mrb[0].mxu0
        %v2027 = vadd.f32 %v1804, %v2026
        %v2028 = vpop.f32.mrb[0].mxu0
        %v2029 = vadd.f32 %v1800, %v2028
        %v2030 = vpop.f32.mrb[0].mxu0
        %v2031 = vadd.f32 %v1804, %v2030
        %2032 = vmatprep.mubr.bf16.mxu0 0
        %2033 = vmatmul.mubr.bf16.gmra.mrb[0].mxu0 %v1761
        %v2034 = vpop.f32.mrb[0].mxu0
        %v2035 = vadd.f32 %v1800, %v2034
        %v2036 = vpop.f32.mrb[0].mxu0
        %v2037 = vadd.f32 %v1804, %v2036
        %v2038 = vpop.f32.mrb[0].mxu0
        %v2039 = vadd.f32 %v1800, %v2038
        %v2040 = vpop.f32.mrb[0].mxu0
        %v2041 = vadd.f32 %v1804, %v2040
        %2042 = vmatprep.mubr.bf16.mxu0 0
        %2043 = vmatmul.mubr.bf16.gmra.mrb[0].mxu0 %v1762
        %v2044 = vpop.f32.mrb[0].mxu0
        %v2045 = vadd.f32 %v1800, %v2044
        %v2046 = vpop.f32.mrb[0].mxu0
        %v2047 = vadd.f32 %v1804, %v2046
        %v2048 = vpop.f32.mrb[0].mxu0
        %v2049 = vadd.f32 %v1800, %v2048
        %v2050 = vpop.f32.mrb[0].mxu0
        %v2051 = vadd.f32 %v1804, %v2050
        %2052 = vdwg.mxu0
        %2053 = vmatprep.subr.bf16.mxu0 0
        %2054 = vmatpush1.bf16.msra.mxu0 %v1894
        %2055 = vmatprep.subr.bf16.mxu0 0
        %2056 = vmatpush1.bf16.msra.mxu0 %v1897
        %2057 = vmatprep.subr.bf16.mxu0 0
        %2058 = vmatpush1.bf16.msra.mxu0 %v1900
        %2059 = vmatprep.subr.bf16.mxu0 0
        %2060 = vmatpush1.bf16.msra.mxu0 %v1903
        %2061 = vmatprep.subr.bf16.mxu0 0
        %2062 = vmatpush1.bf16.msra.mxu0 %v1906
        %2063 = vmatprep.subr.bf16.mxu0 0
        %2064 = vmatpush1.bf16.msra.mxu0 %v1909
        %2065 = vmatprep.subr.bf16.mxu0 0
        %2066 = vmatpush1.bf16.msra.mxu0 %v1912
        %2067 = vmatprep.subr.bf16.mxu0 0
        %2068 = vmatpush1.bf16.msra.mxu0 %v1915
        %2069 = vmatprep.subr.bf16.mxu0 0
        %2070 = vmatpush1.bf16.msra.mxu0 0
        %2071 = vmatprep.subr.bf16.mxu0 0
        %2072 = vmatpush1.bf16.msra.mxu0 0
        %2073 = vmatprep.subr.bf16.mxu0 0
        %2074 = vmatpush1.bf16.msra.mxu0 0
        %2075 = vmatprep.subr.bf16.mxu0 0
        %2076 = vmatpush1.bf16.msra.mxu0 0
        %2077 = vmatprep.subr.bf16.mxu0 0
        %2078 = vmatpush1.bf16.msra.mxu0 0
        %2079 = vmatprep.subr.bf16.mxu0 0
        %2080 = vmatpush1.bf16.msra.mxu0 0
        %2081 = vmatprep.subr.bf16.mxu0 0
        %2082 = vmatpush1.bf16.msra.mxu0 0
        %2083 = vmatprep.subr.bf16.mxu0 0
        %2084 = vmatpush1.bf16.msra.mxu0 0
        %2085 = vmatprep.mubr.bf16.mxu0 0
        %2086 = vmatmul.mubr.bf16.gmra.mrb[0].mxu0 %v1755
        %v2087 = vpop.f32.mrb[0].mxu0
        %v2088 = vadd.f32 %v1808, %v2087
        %v2089 = vpop.f32.mrb[0].mxu0
        %v2090 = vpop.f32.mrb[0].mxu0
        %v2091 = vadd.f32 %v1808, %v2090
        %v2092 = vpop.f32.mrb[0].mxu0
        %2093 = vmatprep.mubr.bf16.mxu0 0
        %2094 = vmatmul.mubr.bf16.gmra.mrb[0].mxu0 %v1756
        %v2095 = vpop.f32.mrb[0].mxu0
        %v2096 = vadd.f32 %v1808, %v2095
        %v2097 = vpop.f32.mrb[0].mxu0
        %v2098 = vpop.f32.mrb[0].mxu0
        %v2099 = vadd.f32 %v1808, %v2098
        %v2100 = vpop.f32.mrb[0].mxu0
        %2101 = vmatprep.mubr.bf16.mxu0 0
        %2102 = vmatmul.mubr.bf16.gmra.mrb[0].mxu0 %v1757
        %v2103 = vpop.f32.mrb[0].mxu0
        %v2104 = vadd.f32 %v1808, %v2103
        %v2105 = vpop.f32.mrb[0].mxu0
        %v2106 = vpop.f32.mrb[0].mxu0
        %v2107 = vadd.f32 %v1808, %v2106
        %v2108 = vpop.f32.mrb[0].mxu0
        %2109 = vmatprep.mubr.bf16.mxu0 0
        %2110 = vmatmul.mubr.bf16.gmra.mrb[0].mxu0 %v1758
        %v2111 = vpop.f32.mrb[0].mxu0
        %v2112 = vadd.f32 %v1808, %v2111
        %v2113 = vpop.f32.mrb[0].mxu0
        %v2114 = vpop.f32.mrb[0].mxu0
        %v2115 = vadd.f32 %v1808, %v2114
        %v2116 = vpop.f32.mrb[0].mxu0
        %2117 = vmatprep.mubr.bf16.mxu0 0
        %2118 = vmatmul.mubr.bf16.gmra.mrb[0].mxu0 %v1759
        %v2119 = vpop.f32.mrb[0].mxu0
        %v2120 = vadd.f32 %v1808, %v2119
        %v2121 = vpop.f32.mrb[0].mxu0
        %v2122 = vpop.f32.mrb[0].mxu0
        %v2123 = vadd.f32 %v1808, %v2122
        %v2124 = vpop.f32.mrb[0].mxu0
        %2125 = vmatprep.mubr.bf16.mxu0 0
        %2126 = vmatmul.mubr.bf16.gmra.mrb[0].mxu0 %v1760
        %v2127 = vpop.f32.mrb[0].mxu0
        %v2128 = vadd.f32 %v1808, %v2127
        %v2129 = vpop.f32.mrb[0].mxu0
        %v2130 = vpop.f32.mrb[0].mxu0
        %v2131 = vadd.f32 %v1808, %v2130
        %v2132 = vpop.f32.mrb[0].mxu0
        %2133 = vmatprep.mubr.bf16.mxu0 0
        %2134 = vmatmul.mubr.bf16.gmra.mrb[0].mxu0 %v1761
        %v2135 = vpop.f32.mrb[0].mxu0
        %v2136 = vadd.f32 %v1808, %v2135
        %v2137 = vpop.f32.mrb[0].mxu0
        %v2138 = vpop.f32.mrb[0].mxu0
        %v2139 = vadd.f32 %v1808, %v2138
        %v2140 = vpop.f32.mrb[0].mxu0
        %2141 = vmatprep.mubr.bf16.mxu0 0
        %2142 = vmatmul.mubr.bf16.gmra.mrb[0].mxu0 %v1762
        %v2143 = vpop.f32.mrb[0].mxu0
        %v2144 = vadd.f32 %v1808, %v2143
        %v2145 = vpop.f32.mrb[0].mxu0
        %v2146 = vpop.f32.mrb[0].mxu0
        %v2147 = vadd.f32 %v1808, %v2146
        %v2148 = vpop.f32.mrb[0].mxu0
        %2149 = vdwg.mxu0
        %v2150 = vmul.f32 %v1975, 2.0
        %v2151 = vmul.f32 %v1977, 2.0
        %v2152 = vmul.f32 %v2088, 2.0
        %v2153 = vmul.f32 %v1979, 2.0
        %v2154 = vmul.f32 %v1981, 2.0
        %v2155 = vmul.f32 %v2091, 2.0
        %v2156 = vmul.f32 %v1985, 2.0
        %v2157 = vmul.f32 %v1987, 2.0
        %v2158 = vmul.f32 %v2096, 2.0
        %v2159 = vmul.f32 %v1989, 2.0
        %v2160 = vmul.f32 %v1991, 2.0
        %v2161 = vmul.f32 %v2099, 2.0
        %v2162 = vmul.f32 %v1995, 2.0
        %v2163 = vmul.f32 %v1997, 2.0
        %v2164 = vmul.f32 %v2104, 2.0
        %v2165 = vmul.f32 %v1999, 2.0
        %v2166 = vmul.f32 %v2001, 2.0
        %v2167 = vmul.f32 %v2107, 2.0
        %v2168 = vmul.f32 %v2005, 2.0
        %v2169 = vmul.f32 %v2007, 2.0
        %v2170 = vmul.f32 %v2112, 2.0
        %v2171 = vmul.f32 %v2009, 2.0
        %v2172 = vmul.f32 %v2011, 2.0
        %v2173 = vmul.f32 %v2115, 2.0
        %v2174 = vmul.f32 %v2015, 2.0
        %v2175 = vmul.f32 %v2017, 2.0
        %v2176 = vmul.f32 %v2120, 2.0
        %v2177 = vmul.f32 %v2019, 2.0
        %v2178 = vmul.f32 %v2021, 2.0
        %v2179 = vmul.f32 %v2123, 2.0
        %v2180 = vmul.f32 %v2025, 2.0
        %v2181 = vmul.f32 %v2027, 2.0
        %v2182 = vmul.f32 %v2128, 2.0
        %v2183 = vmul.f32 %v2029, 2.0
        %v2184 = vmul.f32 %v2031, 2.0
        %v2185 = vmul.f32 %v2131, 2.0
        %v2186 = vmul.f32 %v2035, 2.0
        %v2187 = vmul.f32 %v2037, 2.0
        %v2188 = vmul.f32 %v2136, 2.0
        %v2189 = vmul.f32 %v2039, 2.0
        %v2190 = vmul.f32 %v2041, 2.0
        %v2191 = vmul.f32 %v2139, 2.0
        %v2192 = vmul.f32 %v2045, 2.0
        %v2193 = vmul.f32 %v2047, 2.0
        %v2194 = vmul.f32 %v2144, 2.0
        %v2195 = vmul.f32 %v2049, 2.0
        %v2196 = vmul.f32 %v2051, 2.0
        %v2197 = vmul.f32 %v2147, 2.0
        %v2198 = vtanh.pop %v2150
        %v2199 = vtanh.pop %v2151
        %v2200 = vtanh.pop %v2152
        %v2201 = vtanh.pop %v2153
        %v2202 = vtanh.pop %v2154
        %v2203 = vtanh.pop %v2155
        %v2204 = vtanh.pop %v2156
        %v2205 = vtanh.pop %v2157
        %v2206 = vtanh.pop %v2158
        %v2207 = vtanh.pop %v2159
        %v2208 = vtanh.pop %v2160
        %v2209 = vtanh.pop %v2161
        %v2210 = vtanh.pop %v2162
        %v2211 = vtanh.pop %v2163
        %v2212 = vtanh.pop %v2164
        %v2213 = vtanh.pop %v2165
        %v2214 = vtanh.pop %v2166
        %v2215 = vtanh.pop %v2167
        %v2216 = vtanh.pop %v2168
        %v2217 = vtanh.pop %v2169
        %v2218 = vtanh.pop %v2170
        %v2219 = vtanh.pop %v2171
        %v2220 = vtanh.pop %v2172
        %v2221 = vtanh.pop %v2173
        %v2222 = vtanh.pop %v2174
        %v2223 = vtanh.pop %v2175
        %v2224 = vtanh.pop %v2176
        %v2225 = vtanh.pop %v2177
        %v2226 = vtanh.pop %v2178
        %v2227 = vtanh.pop %v2179
        %v2228 = vtanh.pop %v2180
        %v2229 = vtanh.pop %v2181
        %v2230 = vtanh.pop %v2182
        %v2231 = vtanh.pop %v2183
        %v2232 = vtanh.pop %v2184
        %v2233 = vtanh.pop %v2185
        %v2234 = vtanh.pop %v2186
        %v2235 = vtanh.pop %v2187
        %v2236 = vtanh.pop %v2188
        %v2237 = vtanh.pop %v2189
        %v2238 = vtanh.pop %v2190
        %v2239 = vtanh.pop %v2191
        %v2240 = vtanh.pop %v2192
        %v2241 = vtanh.pop %v2193
        %v2242 = vtanh.pop %v2194
        %v2243 = vtanh.pop %v2195
        %v2244 = vtanh.pop %v2196
        %v2245 = vtanh.pop %v2197
        %v2246 = vpack.c.bf16 %v2201, %v2198
        %v2247 = vpack.c.bf16 %v2202, %v2199
        %v2248 = vpack.c.bf16 %v2203, %v2200
        %v2249 = vpack.c.bf16 %v2207, %v2204
        %v2250 = vpack.c.bf16 %v2208, %v2205
        %v2251 = vpack.c.bf16 %v2209, %v2206
        %v2252 = vpack.c.bf16 %v2213, %v2210
        %v2253 = vpack.c.bf16 %v2214, %v2211
        %v2254 = vpack.c.bf16 %v2215, %v2212
        %v2255 = vpack.c.bf16 %v2219, %v2216
        %v2256 = vpack.c.bf16 %v2220, %v2217
        %v2257 = vpack.c.bf16 %v2221, %v2218
        %v2258 = vpack.c.bf16 %v2225, %v2222
        %v2259 = vpack.c.bf16 %v2226, %v2223
        %v2260 = vpack.c.bf16 %v2227, %v2224
        %v2261 = vpack.c.bf16 %v2231, %v2228
        %v2262 = vpack.c.bf16 %v2232, %v2229
        %v2263 = vpack.c.bf16 %v2233, %v2230
        %v2264 = vpack.c.bf16 %v2237, %v2234
        %v2265 = vpack.c.bf16 %v2238, %v2235
        %v2266 = vpack.c.bf16 %v2239, %v2236
        %v2267 = vpack.c.bf16 %v2243, %v2240
        %v2268 = vpack.c.bf16 %v2244, %v2241
        %v2269 = vpack.c.bf16 %v2245, %v2242
        %v2270 = vld [vmem:[#allocation7] sm:$0xf]
        %v2271 = vld [vmem:[#allocation7 + $0x4] sm:$0xf]
        %v2272 = vld [vmem:[#allocation7 + $0x8] sm:$0xf]
        %v2273 = vld [vmem:[#allocation7 + $0xc] sm:$0xf]
        %v2274 = vld [vmem:[#allocation7 + $0x10] sm:$0xf]
        %v2275 = vld [vmem:[#allocation7 + $0x14] sm:$0xf]
        %v2276 = vld [vmem:[#allocation7 + $0x18] sm:$0xf]
        %v2277 = vld [vmem:[#allocation7 + $0x1c] sm:$0xf]
        %v2278 = vld [vmem:[#allocation7 + $0x20] sm:$0xf]
        %v2279 = vld [vmem:[#allocation7 + $0x24] sm:$0xf]
        %v2280 = vld [vmem:[#allocation7 + $0x28] sm:$0xf]
        %v2281 = vld [vmem:[#allocation7 + $0x2c] sm:$0xf]
        %v2282 = vld [vmem:[#allocation7 + $0x30] sm:$0xf]
        %v2283 = vld [vmem:[#allocation7 + $0x34] sm:$0xf]
        %v2284 = vld [vmem:[#allocation7 + $0x38] sm:$0xf]
        %v2285 = vld [vmem:[#allocation7 + $0x3c] sm:$0xf]
        %v2286 = vld [vmem:[#allocation7 + $0x40] sm:$0xf]
        %v2287 = vld [vmem:[#allocation7 + $0x44] sm:$0xf]
        %v2288 = vld [vmem:[#allocation7 + $0x48] sm:$0xf]
        %v2289 = vld [vmem:[#allocation7 + $0x4c] sm:$0xf]
        %v2290 = vld [vmem:[#allocation7 + $0x50] sm:$0xf]
        %v2291 = vld [vmem:[#allocation7 + $0x54] sm:$0xf]
        %v2292 = vld [vmem:[#allocation7 + $0x58] sm:$0xf]
        %v2293 = vld [vmem:[#allocation7 + $0x5c] sm:$0xf]
        %v2294 = vld [vmem:[#allocation7 + $0x60] sm:$0xf]
        %v2295 = vld [vmem:[#allocation7 + $0x64] sm:$0xf]
        %v2296 = vld [vmem:[#allocation7 + $0x68] sm:$0xf]
        %v2297 = vld [vmem:[#allocation7 + $0x6c] sm:$0xf]
        %v2298 = vld [vmem:[#allocation7 + $0x70] sm:$0xf]
        %v2299 = vld [vmem:[#allocation7 + $0x74] sm:$0xf]
        %v2300 = vld [vmem:[#allocation7 + $0x78] sm:$0xf]
        %v2301 = vld [vmem:[#allocation7 + $0x7c] sm:$0xf]
        %v2302 = vld [vmem:[#allocation7 + $0x80] sm:$0xf]
        %v2303 = vld [vmem:[#allocation7 + $0x84] sm:$0xf]
        %v2304 = vld [vmem:[#allocation7 + $0x88] sm:$0xf]
        %v2305 = vld [vmem:[#allocation7 + $0x8c] sm:$0xf]
        %v2306 = vld [vmem:[#allocation7 + $0x90] sm:$0xf]
        %v2307 = vld [vmem:[#allocation7 + $0x94] sm:$0xf]
        %v2308 = vld [vmem:[#allocation7 + $0x98] sm:$0xf]
        %v2309 = vld [vmem:[#allocation7 + $0x9c] sm:$0xf]
        %v2310 = vld [vmem:[#allocation7 + $0xa0] sm:$0xf]
        %v2311 = vld [vmem:[#allocation7 + $0xa4] sm:$0xf]
        %v2312 = vld [vmem:[#allocation7 + $0xa8] sm:$0xf]
        %v2313 = vld [vmem:[#allocation7 + $0xac] sm:$0xf]
        %v2314 = vld [vmem:[#allocation7 + $0xb0] sm:$0xf]
        %v2315 = vld [vmem:[#allocation7 + $0xb4] sm:$0xf]
        %v2316 = vld [vmem:[#allocation7 + $0xb8] sm:$0xf]
        %v2317 = vld [vmem:[#allocation7 + $0xbc] sm:$0xf]
        %v2318 = vld [vmem:[%s8] sm:$0x1]
        %v2320 = vlaneseq
        %v2321 = vshrl.u32 %v2320, 7
        %v2322 = vsub.s32 0, %v2321
        %v2323 = vrot.slane %v2318, %v2322
        %v2373 = vunpack.c.l.b16 %v2270
        %v2374 = vunpack.c.l.b16 %v2271
        %v2375 = vunpack.c.l.b16 %v2272
        %v2376 = vunpack.c.l.b16 %v2273
        %v2377 = vunpack.c.l.b16 %v2274
        %v2378 = vunpack.c.l.b16 %v2275
        %v2379 = vunpack.c.l.b16 %v2276
        %v2380 = vunpack.c.l.b16 %v2277
        %v2381 = vunpack.c.l.b16 %v2278
        %v2382 = vunpack.c.l.b16 %v2279
        %v2383 = vunpack.c.l.b16 %v2280
        %v2384 = vunpack.c.l.b16 %v2281
        %v2385 = vunpack.c.l.b16 %v2282
        %v2386 = vunpack.c.l.b16 %v2283
        %v2387 = vunpack.c.l.b16 %v2284
        %v2388 = vunpack.c.l.b16 %v2285
        %v2389 = vunpack.c.l.b16 %v2286
        %v2390 = vunpack.c.l.b16 %v2287
        %v2391 = vunpack.c.l.b16 %v2288
        %v2392 = vunpack.c.l.b16 %v2289
        %v2393 = vunpack.c.l.b16 %v2290
        %v2394 = vunpack.c.l.b16 %v2291
        %v2395 = vunpack.c.l.b16 %v2292
        %v2396 = vunpack.c.l.b16 %v2293
        %v2397 = vunpack.c.l.b16 %v2294
        %v2398 = vunpack.c.l.b16 %v2295
        %v2399 = vunpack.c.l.b16 %v2296
        %v2400 = vunpack.c.l.b16 %v2297
        %v2401 = vunpack.c.l.b16 %v2298
        %v2402 = vunpack.c.l.b16 %v2299
        %v2403 = vunpack.c.l.b16 %v2300
        %v2404 = vunpack.c.l.b16 %v2301
        %v2405 = vunpack.c.l.b16 %v2302
        %v2406 = vunpack.c.l.b16 %v2303
        %v2407 = vunpack.c.l.b16 %v2304
        %v2408 = vunpack.c.l.b16 %v2305
        %v2409 = vunpack.c.l.b16 %v2306
        %v2410 = vunpack.c.l.b16 %v2307
        %v2411 = vunpack.c.l.b16 %v2308
        %v2412 = vunpack.c.l.b16 %v2309
        %v2413 = vunpack.c.l.b16 %v2310
        %v2414 = vunpack.c.l.b16 %v2311
        %v2415 = vunpack.c.l.b16 %v2312
        %v2416 = vunpack.c.l.b16 %v2313
        %v2417 = vunpack.c.l.b16 %v2314
        %v2418 = vunpack.c.l.b16 %v2315
        %v2419 = vunpack.c.l.b16 %v2316
        %v2420 = vunpack.c.l.b16 %v2317
        %v2421 = vpack.c.b16 %v2374, %v2373
        %v2422 = vpack.c.b16 %v2376, %v2375
        %v2423 = vpack.c.b16 %v2378, %v2377
        %v2424 = vpack.c.b16 %v2380, %v2379
        %v2425 = vpack.c.b16 %v2382, %v2381
        %v2426 = vpack.c.b16 %v2384, %v2383
        %v2427 = vpack.c.b16 %v2386, %v2385
        %v2428 = vpack.c.b16 %v2388, %v2387
        %v2429 = vpack.c.b16 %v2390, %v2389
        %v2430 = vpack.c.b16 %v2392, %v2391
        %v2431 = vpack.c.b16 %v2394, %v2393
        %v2432 = vpack.c.b16 %v2396, %v2395
        %v2433 = vpack.c.b16 %v2398, %v2397
        %v2434 = vpack.c.b16 %v2400, %v2399
        %v2435 = vpack.c.b16 %v2402, %v2401
        %v2436 = vpack.c.b16 %v2404, %v2403
        %v2437 = vpack.c.b16 %v2406, %v2405
        %v2438 = vpack.c.b16 %v2408, %v2407
        %v2439 = vpack.c.b16 %v2410, %v2409
        %v2440 = vpack.c.b16 %v2412, %v2411
        %v2441 = vpack.c.b16 %v2414, %v2413
        %v2442 = vpack.c.b16 %v2416, %v2415
        %v2443 = vpack.c.b16 %v2418, %v2417
        %v2444 = vpack.c.b16 %v2420, %v2419
        %2469 = vmatprep.subr.bf16.mxu0 0
        %2470 = vmatpush1.bf16.msra.mxu0 %v2421
        %2471 = vmatprep.subr.bf16.mxu0 0
        %2472 = vmatpush1.bf16.msra.mxu0 %v2422
        %2473 = vmatprep.subr.bf16.mxu0 0
        %2474 = vmatpush1.bf16.msra.mxu0 %v2423
        %2475 = vmatprep.subr.bf16.mxu0 0
        %2476 = vmatpush1.bf16.msra.mxu0 %v2424
        %2477 = vmatprep.subr.bf16.mxu0 0
        %2478 = vmatpush1.bf16.msra.mxu0 %v2425
        %2479 = vmatprep.subr.bf16.mxu0 0
        %2480 = vmatpush1.bf16.msra.mxu0 %v2426
        %2481 = vmatprep.subr.bf16.mxu0 0
        %2482 = vmatpush1.bf16.msra.mxu0 %v2427
        %2483 = vmatprep.subr.bf16.mxu0 0
        %2484 = vmatpush1.bf16.msra.mxu0 %v2428
        %2485 = vmatprep.subr.bf16.mxu0 0
        %2486 = vmatpush1.bf16.msra.mxu0 %v2429
        %2487 = vmatprep.subr.bf16.mxu0 0
        %2488 = vmatpush1.bf16.msra.mxu0 %v2430
        %2489 = vmatprep.subr.bf16.mxu0 0
        %2490 = vmatpush1.bf16.msra.mxu0 %v2431
        %2491 = vmatprep.subr.bf16.mxu0 0
        %2492 = vmatpush1.bf16.msra.mxu0 %v2432
        %2493 = vmatprep.subr.bf16.mxu0 0
        %2494 = vmatpush1.bf16.msra.mxu0 %v2433
        %2495 = vmatprep.subr.bf16.mxu0 0
        %2496 = vmatpush1.bf16.msra.mxu0 %v2434
        %2497 = vmatprep.subr.bf16.mxu0 0
        %2498 = vmatpush1.bf16.msra.mxu0 %v2435
        %2499 = vmatprep.subr.bf16.mxu0 0
        %2500 = vmatpush1.bf16.msra.mxu0 %v2436
        %2501 = vmatprep.mubr.bf16.mxu0 %v2247
        %2502 = vmatmul.mubr.bf16.gmra.mrb[0].mxu0 %v2246
        %v2503 = vpop.f32.mrb[0].mxu0
        %v2504 = vadd.f32 %v2323, %v2503
        %v2505 = vpop.f32.mrb[0].mxu0
        %v2506 = vpop.f32.mrb[0].mxu0
        %v2507 = vadd.f32 %v2323, %v2506
        %v2508 = vpop.f32.mrb[0].mxu0
        %2509 = vmatprep.mubr.bf16.mxu0 %v2250
        %2510 = vmatmul.mubr.bf16.gmra.mrb[0].mxu0 %v2249
        %v2511 = vpop.f32.mrb[0].mxu0
        %v2512 = vadd.f32 %v2323, %v2511
        %v2513 = vpop.f32.mrb[0].mxu0
        %v2514 = vpop.f32.mrb[0].mxu0
        %v2515 = vadd.f32 %v2323, %v2514
        %v2516 = vpop.f32.mrb[0].mxu0
        %2517 = vmatprep.mubr.bf16.mxu0 %v2253
        %2518 = vmatmul.mubr.bf16.gmra.mrb[0].mxu0 %v2252
        %v2519 = vpop.f32.mrb[0].mxu0
        %v2520 = vadd.f32 %v2323, %v2519
        %v2521 = vpop.f32.mrb[0].mxu0
        %v2522 = vpop.f32.mrb[0].mxu0
        %v2523 = vadd.f32 %v2323, %v2522
        %v2524 = vpop.f32.mrb[0].mxu0
        %2525 = vmatprep.mubr.bf16.mxu0 %v2256
        %2526 = vmatmul.mubr.bf16.gmra.mrb[0].mxu0 %v2255
        %v2527 = vpop.f32.mrb[0].mxu0
        %v2528 = vadd.f32 %v2323, %v2527
        %v2529 = vpop.f32.mrb[0].mxu0
        %v2530 = vpop.f32.mrb[0].mxu0
        %v2531 = vadd.f32 %v2323, %v2530
        %v2532 = vpop.f32.mrb[0].mxu0
        %2533 = vmatprep.mubr.bf16.mxu0 %v2259
        %2534 = vmatmul.mubr.bf16.gmra.mrb[0].mxu0 %v2258
        %v2535 = vpop.f32.mrb[0].mxu0
        %v2536 = vadd.f32 %v2323, %v2535
        %v2537 = vpop.f32.mrb[0].mxu0
        %v2538 = vpop.f32.mrb[0].mxu0
        %v2539 = vadd.f32 %v2323, %v2538
        %v2540 = vpop.f32.mrb[0].mxu0
        %2541 = vmatprep.mubr.bf16.mxu0 %v2262
        %2542 = vmatmul.mubr.bf16.gmra.mrb[0].mxu0 %v2261
        %v2543 = vpop.f32.mrb[0].mxu0
        %v2544 = vadd.f32 %v2323, %v2543
        %v2545 = vpop.f32.mrb[0].mxu0
        %v2546 = vpop.f32.mrb[0].mxu0
        %v2547 = vadd.f32 %v2323, %v2546
        %v2548 = vpop.f32.mrb[0].mxu0
        %2549 = vmatprep.mubr.bf16.mxu0 %v2265
        %2550 = vmatmul.mubr.bf16.gmra.mrb[0].mxu0 %v2264
        %v2551 = vpop.f32.mrb[0].mxu0
        %v2552 = vadd.f32 %v2323, %v2551
        %v2553 = vpop.f32.mrb[0].mxu0
        %v2554 = vpop.f32.mrb[0].mxu0
        %v2555 = vadd.f32 %v2323, %v2554
        %v2556 = vpop.f32.mrb[0].mxu0
        %2557 = vmatprep.mubr.bf16.mxu0 %v2268
        %2558 = vmatmul.mubr.bf16.gmra.mrb[0].mxu0 %v2267
        %v2559 = vpop.f32.mrb[0].mxu0
        %v2560 = vadd.f32 %v2323, %v2559
        %v2561 = vpop.f32.mrb[0].mxu0
        %v2562 = vpop.f32.mrb[0].mxu0
        %v2563 = vadd.f32 %v2323, %v2562
        %v2564 = vpop.f32.mrb[0].mxu0
        %2565 = vdwg.mxu0
        %2566 = vmatprep.subr.bf16.mxu0 0
        %2567 = vmatpush1.bf16.msra.mxu0 %v2437
        %2568 = vmatprep.subr.bf16.mxu0 0
        %2569 = vmatpush1.bf16.msra.mxu0 %v2438
        %2570 = vmatprep.subr.bf16.mxu0 0
        %2571 = vmatpush1.bf16.msra.mxu0 %v2439
        %2572 = vmatprep.subr.bf16.mxu0 0
        %2573 = vmatpush1.bf16.msra.mxu0 %v2440
        %2574 = vmatprep.subr.bf16.mxu0 0
        %2575 = vmatpush1.bf16.msra.mxu0 %v2441
        %2576 = vmatprep.subr.bf16.mxu0 0
        %2577 = vmatpush1.bf16.msra.mxu0 %v2442
        %2578 = vmatprep.subr.bf16.mxu0 0
        %2579 = vmatpush1.bf16.msra.mxu0 %v2443
        %2580 = vmatprep.subr.bf16.mxu0 0
        %2581 = vmatpush1.bf16.msra.mxu0 %v2444
        %2582 = vmatprep.subr.bf16.mxu0 0
        %2583 = vmatpush1.bf16.msra.mxu0 0
        %2584 = vmatprep.subr.bf16.mxu0 0
        %2585 = vmatpush1.bf16.msra.mxu0 0
        %2586 = vmatprep.subr.bf16.mxu0 0
        %2587 = vmatpush1.bf16.msra.mxu0 0
        %2588 = vmatprep.subr.bf16.mxu0 0
        %2589 = vmatpush1.bf16.msra.mxu0 0
        %2590 = vmatprep.subr.bf16.mxu0 0
        %2591 = vmatpush1.bf16.msra.mxu0 0
        %2592 = vmatprep.subr.bf16.mxu0 0
        %2593 = vmatpush1.bf16.msra.mxu0 0
        %2594 = vmatprep.subr.bf16.mxu0 0
        %2595 = vmatpush1.bf16.msra.mxu0 0
        %2596 = vmatprep.subr.bf16.mxu0 0
        %2597 = vmatpush1.bf16.msra.mxu0 0
        %2598 = vmatprep.mubr.bf16.mxu0 0
        %2599 = vmatmul.mubr.bf16.gmra.mrb[0].mxu0 %v2248
        %v2600 = vpop.f32.mrb[0].mxu0
        %v2601 = vadd.f32 %v2504, %v2600
        %v2602 = vpop.f32.mrb[0].mxu0
        %v2603 = vpop.f32.mrb[0].mxu0
        %v2604 = vadd.f32 %v2507, %v2603
        %v2605 = vpop.f32.mrb[0].mxu0
        %2606 = vmatprep.mubr.bf16.mxu0 0
        %2607 = vmatmul.mubr.bf16.gmra.mrb[0].mxu0 %v2251
        %v2608 = vpop.f32.mrb[0].mxu0
        %v2609 = vadd.f32 %v2512, %v2608
        %v2610 = vpop.f32.mrb[0].mxu0
        %v2611 = vpop.f32.mrb[0].mxu0
        %v2612 = vadd.f32 %v2515, %v2611
        %v2613 = vpop.f32.mrb[0].mxu0
        %2614 = vmatprep.mubr.bf16.mxu0 0
        %2615 = vmatmul.mubr.bf16.gmra.mrb[0].mxu0 %v2254
        %v2616 = vpop.f32.mrb[0].mxu0
        %v2617 = vadd.f32 %v2520, %v2616
        %v2618 = vpop.f32.mrb[0].mxu0
        %v2619 = vpop.f32.mrb[0].mxu0
        %v2620 = vadd.f32 %v2523, %v2619
        %v2621 = vpop.f32.mrb[0].mxu0
        %2622 = vmatprep.mubr.bf16.mxu0 0
        %2623 = vmatmul.mubr.bf16.gmra.mrb[0].mxu0 %v2257
        %v2624 = vpop.f32.mrb[0].mxu0
        %v2625 = vadd.f32 %v2528, %v2624
        %v2626 = vpop.f32.mrb[0].mxu0
        %v2627 = vpop.f32.mrb[0].mxu0
        %v2628 = vadd.f32 %v2531, %v2627
        %v2629 = vpop.f32.mrb[0].mxu0
        %2630 = vmatprep.mubr.bf16.mxu0 0
        %2631 = vmatmul.mubr.bf16.gmra.mrb[0].mxu0 %v2260
        %v2632 = vpop.f32.mrb[0].mxu0
        %v2633 = vadd.f32 %v2536, %v2632
        %v2634 = vpop.f32.mrb[0].mxu0
        %v2635 = vpop.f32.mrb[0].mxu0
        %v2636 = vadd.f32 %v2539, %v2635
        %v2637 = vpop.f32.mrb[0].mxu0
        %2638 = vmatprep.mubr.bf16.mxu0 0
        %2639 = vmatmul.mubr.bf16.gmra.mrb[0].mxu0 %v2263
        %v2640 = vpop.f32.mrb[0].mxu0
        %v2641 = vadd.f32 %v2544, %v2640
        %v2642 = vpop.f32.mrb[0].mxu0
        %v2643 = vpop.f32.mrb[0].mxu0
        %v2644 = vadd.f32 %v2547, %v2643
        %v2645 = vpop.f32.mrb[0].mxu0
        %2646 = vmatprep.mubr.bf16.mxu0 0
        %2647 = vmatmul.mubr.bf16.gmra.mrb[0].mxu0 %v2266
        %v2648 = vpop.f32.mrb[0].mxu0
        %v2649 = vadd.f32 %v2552, %v2648
        %v2650 = vpop.f32.mrb[0].mxu0
        %v2651 = vpop.f32.mrb[0].mxu0
        %v2652 = vadd.f32 %v2555, %v2651
        %v2653 = vpop.f32.mrb[0].mxu0
        %2654 = vmatprep.mubr.bf16.mxu0 0
        %2655 = vmatmul.mubr.bf16.gmra.mrb[0].mxu0 %v2269
        %v2656 = vpop.f32.mrb[0].mxu0
        %v2657 = vadd.f32 %v2560, %v2656
        %v2658 = vpop.f32.mrb[0].mxu0
        %v2659 = vpop.f32.mrb[0].mxu0
        %v2660 = vadd.f32 %v2563, %v2659
        %v2661 = vpop.f32.mrb[0].mxu0
        %2662 = vdwg.mxu0
        %v2663 = vadd.f32 %v2601, %v1739
        %v2664 = vadd.f32 %v2604, %v1740
        %v2665 = vadd.f32 %v2609, %v1741
        %v2666 = vadd.f32 %v2612, %v1742
        %v2667 = vadd.f32 %v2617, %v1743
        %v2668 = vadd.f32 %v2620, %v1744
        %v2669 = vadd.f32 %v2625, %v1745
        %v2670 = vadd.f32 %v2628, %v1746
        %v2671 = vadd.f32 %v2633, %v1747
        %v2672 = vadd.f32 %v2636, %v1748
        %v2673 = vadd.f32 %v2641, %v1749
        %v2674 = vadd.f32 %v2644, %v1750
        %v2675 = vadd.f32 %v2649, %v1751
        %v2676 = vadd.f32 %v2652, %v1752
        %v2677 = vadd.f32 %v2657, %v1753
        %v2678 = vadd.f32 %v2660, %v1754
        %v2679 = vmul.f32 %v2663, 2.0
        %v2680 = vmul.f32 %v2664, 2.0
        %v2681 = vmul.f32 %v2665, 2.0
        %v2682 = vmul.f32 %v2666, 2.0
        %v2683 = vmul.f32 %v2667, 2.0
        %v2684 = vmul.f32 %v2668, 2.0
        %v2685 = vmul.f32 %v2669, 2.0
        %v2686 = vmul.f32 %v2670, 2.0
        %v2687 = vmul.f32 %v2671, 2.0
        %v2688 = vmul.f32 %v2672, 2.0
        %v2689 = vmul.f32 %v2673, 2.0
        %v2690 = vmul.f32 %v2674, 2.0
        %v2691 = vmul.f32 %v2675, 2.0
        %v2692 = vmul.f32 %v2676, 2.0
        %v2693 = vmul.f32 %v2677, 2.0
        %v2694 = vmul.f32 %v2678, 2.0
        %v2695 = vtanh.pop %v2679
        %v2696 = vtanh.pop %v2680
        %v2697 = vtanh.pop %v2681
        %v2698 = vtanh.pop %v2682
        %v2699 = vtanh.pop %v2683
        %v2700 = vtanh.pop %v2684
        %v2701 = vtanh.pop %v2685
        %v2702 = vtanh.pop %v2686
        %v2703 = vtanh.pop %v2687
        %v2704 = vtanh.pop %v2688
        %v2705 = vtanh.pop %v2689
        %v2706 = vtanh.pop %v2690
        %v2707 = vtanh.pop %v2691
        %v2708 = vtanh.pop %v2692
        %v2709 = vtanh.pop %v2693
        %v2710 = vtanh.pop %v2694
        %2711 = vst [vmem:[%s369] sm:$0xff] %v2695
        %2712 = vst [vmem:[%s369 + $0x8] sm:$0xff] %v2696
        %2713 = vst [vmem:[%s369 + $0x10] sm:$0xff] %v2697
        %2714 = vst [vmem:[%s369 + $0x18] sm:$0xff] %v2698
        %2715 = vst [vmem:[%s369 + $0x20] sm:$0xff] %v2699
        %2716 = vst [vmem:[%s369 + $0x28] sm:$0xff] %v2700
        %2717 = vst [vmem:[%s369 + $0x30] sm:$0xff] %v2701
        %2718 = vst [vmem:[%s369 + $0x38] sm:$0xff] %v2702
        %2719 = vst [vmem:[%s369 + $0x40] sm:$0xff] %v2703
        %2720 = vst [vmem:[%s369 + $0x48] sm:$0xff] %v2704
        %2721 = vst [vmem:[%s369 + $0x50] sm:$0xff] %v2705
        %2722 = vst [vmem:[%s369 + $0x58] sm:$0xff] %v2706
        %2723 = vst [vmem:[%s369 + $0x60] sm:$0xff] %v2707
        %2724 = vst [vmem:[%s369 + $0x68] sm:$0xff] %v2708
        %2725 = vst [vmem:[%s369 + $0x70] sm:$0xff] %v2709
        %2726 = vst [vmem:[%s369 + $0x78] sm:$0xff] %v2710
        %s2727 = sand.u32 %s227, 1
        %s2728 = scalar_lea.sflag [#allocation4], %s2727
        %s2729 = sand.u32 %s227, 1
        %s2730 = smul.addr %s2729, 128
        %s2731 = scalar_lea.vmem [#allocation8], %s2730
        // Predicated region
        $region69: #{tpu_custom_call.1} parent=55 // pred_check
          %p2732 = pneg %p237
        $region70: #{tpu_custom_call.1} parent=55 // pred_check_branch
          %2734 = sbr.rel (%p2732) target = $region72
        $region71: #{tpu_custom_call.1} parent=55 // pred_region
          %s2736 = ssub.s32 2048, 2048
          %2737 = vsyncadd %s2728, %s2736
          %s2738 = smul.addr %s25, 16
          %s2739 = smul.addr %s2738, 128
          %s2740 = scalar_lea.hbm %s9, %s2739
          %s2741 = sshll.u32 %s2731, 4
          %s2742 = int_to_ptr.vmem [resolvable:$true] %s2741
          %2747 = dma.vmem_to_hbm [thread:$0]  %s2742, 2048, %s2740, %s2728, 128, 128, 8
        $region72: #{tpu_custom_call.1} parent=55 // pred_fallthru
          _
      $region56: #{tpu_custom_call.1} parent=5 // pred_fallthru
        _
      %p2748 = scmp.le.s32.totalorder 2, %s20
      // Predicated region
      $region73: #{tpu_custom_call.1} parent=5 // pred_check
        %p2749 = pneg %p2748
      $region74: #{tpu_custom_call.1} parent=5 // pred_check_branch
        %2751 = sbr.rel (%p2749) target = $region76
      $region75: #{tpu_custom_call.1} parent=5 // pred_region
        %s2752 = ssub.s32 %s20, 2
        // Predicated region
        $region77: #{tpu_custom_call.1} parent=75 // pred_check
          %p2753 = pneg %p243
        $region78: #{tpu_custom_call.1} parent=75 // pred_check_branch
          %2755 = sbr.rel (%p2753) target = $region80
        $region79: #{tpu_custom_call.1} parent=75 // pred_region
          %s2756 = sand.u32 %s228, 1
          %s2757 = scalar_lea.sflag [#allocation4], %s2756
          %s2758 = sand.u32 %s228, 1
          %s2759 = smul.addr %s2758, 128
          %s2760 = scalar_lea.vmem [#allocation8], %s2759
          %2761 = dma.done %s2757, 2048
        $region80: #{tpu_custom_call.1} parent=75 // pred_fallthru
          _
      $region76: #{tpu_custom_call.1} parent=5 // pred_fallthru
        _
    $region6: #{tpu_custom_call.1} parent=1 // loop_footer
      %s24 = sadd.s32 1, %s20
    $region7: #{tpu_custom_call.1} parent=1 // loop_footer_branch
      %19 = sbr.rel target = $region3
    $region8: #{tpu_custom_call.1} parent=1 // loop_exit
      _
    %2762 = vsyncpa [#allocation3], 1
    %s2763 = scalar_lea.sflag [#allocation3], 1
    %2764 = vsyncpa %s2763, 1
    %2765 = vsyncpa [#allocation6], 1
    %2766 = vsyncpa [#allocation4], 1
    %s2767 = scalar_lea.sflag [#allocation4], 1
    %2768 = vsyncpa %s2767, 1

// kernel: tpu_custom_call.1
$region0: #{tpu_custom_call.1}
  #allocation0 [shape = 'u32[]', space=smem, size = 0x4, offset = 0x4, fixed_abs, tag = 'smem constant byte address 0x4 - core index']
  #allocation1 [shape = 'u32[144,128]{1,0:T(1,128)}', space=vmem, size = 0x12000, scoped, tag = 'internal scratch']
  %s0 = inlined_call_operand.vmem [shape: f32[2,128,128], index: 0, kind: input, shape index: {}]
  %s1 = inlined_call_operand.vmem [shape: bf16[384,128], index: 1, kind: input, shape index: {}]
  %s2 = inlined_call_operand.vmem [shape: f32[384,1], index: 2, kind: input, shape index: {}]
  %s3 = inlined_call_operand.hbm [shape: bf16[128,384], index: 3, kind: input, shape index: {}]
  %s4 = inlined_call_operand.vmem [shape: f32[128,1], index: 4, kind: input, shape index: {}]
  %s5 = inlined_call_operand.hbm [shape: bf16[128,384], index: 5, kind: input, shape index: {}]
  %s6 = inlined_call_operand.vmem [shape: f32[1,384], index: 6, kind: input, shape index: {}]
  %s7 = inlined_call_operand.hbm [shape: bf16[384,128], index: 7, kind: input, shape index: {}]
  %s8 = inlined_call_operand.vmem [shape: f32[1,128], index: 8, kind: input, shape index: {}]
  %s9 = inlined_call_operand.hbm [shape: f32[2,128,128], index: 9, kind: output, shape index: {}]
  %s10 = sld [smem:[#allocation0]]
  $region81: #{tpu_custom_call.1} parent=0
    _
  %s12 = ssub.s32 1, %s10
  %s13 = scalar_select 0, %s12, %s10
  $region1: #{tpu_custom_call.1} parent=0
    #allocation2 [shape = 'u8[98304]{0}', space=vmem, size = 0x18000, scoped, tag = 'input window, operand 3, single buffered']
    #allocation3 [shape = 's32[2]{0}', space=sflag, size = 0x8, scoped, tag = 'scoped memory for tpu_custom_call.1']
    #allocation4 [shape = 's32[2]{0}', space=sflag, size = 0x8, scoped, tag = 'scoped memory for tpu_custom_call.1']
    #allocation5 [shape = 'u8[98304]{0}', space=vmem, size = 0x18000, scoped, tag = 'input window, operand 5, single buffered']
    #allocation6 [shape = 's32[1]{0}', space=sflag, size = 0x4, scoped, tag = 'scoped memory for tpu_custom_call.1']
    #allocation7 [shape = 'u8[98304]{0}', space=vmem, size = 0x18000, scoped, tag = 'input window, operand 7, single buffered']
    #allocation8 [shape = 'u8[131072]{0}', space=vmem, size = 0x20000, scoped, tag = 'output window, operand 0']
    %14 = vsyncpa [#allocation3], 0
    %15 = vsyncpa [#allocation6], 0
    %16 = vsyncpa [#allocation4], 0
    %s17 = scalar_lea.sflag [#allocation4], 1
    %18 = vsyncpa %s17, 0
    loop: start=0, step=1, limit=4
    $region2: #{tpu_custom_call.1} parent=1 // loop_pre_header
      _
    $region3: #{tpu_custom_call.1} parent=1 // loop_header
      %s20 = sphi 0, %s24
      %p21 = scmp.ge.s32.totalorder %s20, 4
      %s30 = sphi 0, %s32
      %s33 = sphi 0, %s30
      %s34 = sphi 0, %s33
      %s50 = sphi 0, %s34
      %s54 = sphi 0, %s54
      %s56 = sphi 0, %s54
      %s57 = sphi 0, %s56
      %s71 = sphi 0, %s57
      %s75 = sphi 0, %s75
      %s77 = sphi 0, %s75
      %s78 = sphi 0, %s77
      %s92 = sphi 0, %s78
      %s96 = sphi 0, %s96
      %s98 = sphi 0, %s96
      %s99 = sphi 0, %s98
      %s113 = sphi 0, %s99
      %s117 = sphi 0, %s117
      %s119 = sphi 0, %s117
      %s120 = sphi 0, %s119
      %s134 = sphi 0, %s120
      %s138 = sphi 0, %s138
      %s140 = sphi 0, %s138
      %s141 = sphi 0, %s140
      %s155 = sphi 0, %s141
      %s159 = sphi 0, %s159
      %s161 = sphi 0, %s159
      %s162 = sphi 0, %s161
      %s176 = sphi 0, %s162
      %s180 = sphi 0, %s180
      %s182 = sphi 0, %s180
      %s183 = sphi 0, %s182
      %s197 = sphi 0, %s183
      %s201 = sphi 0, %s201
      %s203 = sphi 0, %s201
      %s204 = sphi 0, %s203
      %s218 = sphi 0, %s204
      %s224 = sphi 0, %s226
      %s227 = sphi 0, %s224
      %s228 = sphi 0, %s227
      %s244 = sphi 0, %s228
    $region4: #{tpu_custom_call.1} parent=1 // loop_header_branch
      %23 = sbr.rel (%p21) target = $region8
    $region5: #{tpu_custom_call.1} parent=1 // loop_body
      %s25 = ssub.s32 %s20, 1
      %s26 = ssub.s32 %s20, 2
      %s27 = sadd.s32 %s20, 1
      %s28 = ssub.s32 %s20, %s27
      %p29 = scmp.eq.s32.totalorder %s28, 0
      %s31 = sadd.s32 %s30, 1
      %s32 = scalar_select %p29, %s30, %s31
      %p35 = pneg %p29
      %p36 = scmp.eq.s32.totalorder %s20, 1
      %p37 = por %p35, %p36
      %p38 = scmp.ne.s32.totalorder %s30, %s33
      %p39 = scmp.eq.s32.totalorder %s20, 0
      %p40 = por %p38, %p39
      %p41 = scmp.ne.s32.totalorder %s30, %s33
      %p42 = scmp.eq.s32.totalorder %s25, 1
      %p43 = por %p41, %p42
      %p44 = scmp.ne.s32.totalorder %s33, %s34
      %p45 = scmp.eq.s32.totalorder %s25, 0
      %p46 = por %p44, %p45
      %p47 = scmp.ne.s32.totalorder %s33, %s34
      %p48 = scmp.eq.s32.totalorder %s26, 1
      %p49 = por %p47, %p48
      %p51 = scmp.ne.s32.totalorder %s34, %s50
      %p52 = scmp.eq.s32.totalorder %s26, 0
      %p53 = por %p51, %p52
      %s55 = sadd.s32 %s54, 1
      %p58 = scmp.eq.s32.totalorder %s20, 1
      %p59 = scmp.ne.s32.totalorder %s54, %s56
      %p60 = scmp.eq.s32.totalorder %s20, 0
      %p61 = por %p59, %p60
      %p62 = scmp.ne.s32.totalorder %s54, %s56
      %p63 = scmp.eq.s32.totalorder %s25, 1
      %p64 = por %p62, %p63
      %p65 = scmp.ne.s32.totalorder %s56, %s57
      %p66 = scmp.eq.s32.totalorder %s25, 0
      %p67 = por %p65, %p66
      %p68 = scmp.ne.s32.totalorder %s56, %s57
      %p69 = scmp.eq.s32.totalorder %s26, 1
      %p70 = por %p68, %p69
      %p72 = scmp.ne.s32.totalorder %s57, %s71
      %p73 = scmp.eq.s32.totalorder %s26, 0
      %p74 = por %p72, %p73
      %s76 = sadd.s32 %s75, 1
      %p79 = scmp.eq.s32.totalorder %s20, 1
      %p80 = scmp.ne.s32.totalorder %s75, %s77
      %p81 = scmp.eq.s32.totalorder %s20, 0
      %p82 = por %p80, %p81
      %p83 = scmp.ne.s32.totalorder %s75, %s77
      %p84 = scmp.eq.s32.totalorder %s25, 1
      %p85 = por %p83, %p84
      %p86 = scmp.ne.s32.totalorder %s77, %s78
      %p87 = scmp.eq.s32.totalorder %s25, 0
      %p88 = por %p86, %p87
      %p89 = scmp.ne.s32.totalorder %s77, %s78
      %p90 = scmp.eq.s32.totalorder %s26, 1
      %p91 = por %p89, %p90
      %p93 = scmp.ne.s32.totalorder %s78, %s92
      %p94 = scmp.eq.s32.totalorder %s26, 0
      %p95 = por %p93, %p94
      %s97 = sadd.s32 %s96, 1
      %p100 = scmp.eq.s32.totalorder %s20, 1
      %p101 = scmp.ne.s32.totalorder %s96, %s98
      %p102 = scmp.eq.s32.totalorder %s20, 0
      %p103 = por %p101, %p102
      %p104 = scmp.ne.s32.totalorder %s96, %s98
      %p105 = scmp.eq.s32.totalorder %s25, 1
      %p106 = por %p104, %p105
      %p107 = scmp.ne.s32.totalorder %s98, %s99
      %p108 = scmp.eq.s32.totalorder %s25, 0
      %p109 = por %p107, %p108
      %p110 = scmp.ne.s32.totalorder %s98, %s99
      %p111 = scmp.eq.s32.totalorder %s26, 1
      %p112 = por %p110, %p111
      %p114 = scmp.ne.s32.totalorder %s99, %s113
      %p115 = scmp.eq.s32.totalorder %s26, 0
      %p116 = por %p114, %p115
      %s118 = sadd.s32 %s117, 1
      %p121 = scmp.eq.s32.totalorder %s20, 1
      %p122 = scmp.ne.s32.totalorder %s117, %s119
      %p123 = scmp.eq.s32.totalorder %s20, 0
      %p124 = por %p122, %p123
      %p125 = scmp.ne.s32.totalorder %s117, %s119
      %p126 = scmp.eq.s32.totalorder %s25, 1
      %p127 = por %p125, %p126
      %p128 = scmp.ne.s32.totalorder %s119, %s120
      %p129 = scmp.eq.s32.totalorder %s25, 0
      %p130 = por %p128, %p129
      %p131 = scmp.ne.s32.totalorder %s119, %s120
      %p132 = scmp.eq.s32.totalorder %s26, 1
      %p133 = por %p131, %p132
      %p135 = scmp.ne.s32.totalorder %s120, %s134
      %p136 = scmp.eq.s32.totalorder %s26, 0
      %p137 = por %p135, %p136
      %s139 = sadd.s32 %s138, 1
      %p142 = scmp.eq.s32.totalorder %s20, 1
      %p143 = scmp.ne.s32.totalorder %s138, %s140
      %p144 = scmp.eq.s32.totalorder %s20, 0
      %p145 = por %p143, %p144
      %p146 = scmp.ne.s32.totalorder %s138, %s140
      %p147 = scmp.eq.s32.totalorder %s25, 1
      %p148 = por %p146, %p147
      %p149 = scmp.ne.s32.totalorder %s140, %s141
      %p150 = scmp.eq.s32.totalorder %s25, 0
      %p151 = por %p149, %p150
      %p152 = scmp.ne.s32.totalorder %s140, %s141
      %p153 = scmp.eq.s32.totalorder %s26, 1
      %p154 = por %p152, %p153
      %p156 = scmp.ne.s32.totalorder %s141, %s155
      %p157 = scmp.eq.s32.totalorder %s26, 0
      %p158 = por %p156, %p157
      %s160 = sadd.s32 %s159, 1
      %p163 = scmp.eq.s32.totalorder %s20, 1
      %p164 = scmp.ne.s32.totalorder %s159, %s161
      %p165 = scmp.eq.s32.totalorder %s20, 0
      %p166 = por %p164, %p165
      %p167 = scmp.ne.s32.totalorder %s159, %s161
      %p168 = scmp.eq.s32.totalorder %s25, 1
      %p169 = por %p167, %p168
      %p170 = scmp.ne.s32.totalorder %s161, %s162
      %p171 = scmp.eq.s32.totalorder %s25, 0
      %p172 = por %p170, %p171
      %p173 = scmp.ne.s32.totalorder %s161, %s162
      %p174 = scmp.eq.s32.totalorder %s26, 1
      %p175 = por %p173, %p174
      %p177 = scmp.ne.s32.totalorder %s162, %s176
      %p178 = scmp.eq.s32.totalorder %s26, 0
      %p179 = por %p177, %p178
      %s181 = sadd.s32 %s180, 1
      %p184 = scmp.eq.s32.totalorder %s20, 1
      %p185 = scmp.ne.s32.totalorder %s180, %s182
      %p186 = scmp.eq.s32.totalorder %s20, 0
      %p187 = por %p185, %p186
      %p188 = scmp.ne.s32.totalorder %s180, %s182
      %p189 = scmp.eq.s32.totalorder %s25, 1
      %p190 = por %p188, %p189
      %p191 = scmp.ne.s32.totalorder %s182, %s183
      %p192 = scmp.eq.s32.totalorder %s25, 0
      %p193 = por %p191, %p192
      %p194 = scmp.ne.s32.totalorder %s182, %s183
      %p195 = scmp.eq.s32.totalorder %s26, 1
      %p196 = por %p194, %p195
      %p198 = scmp.ne.s32.totalorder %s183, %s197
      %p199 = scmp.eq.s32.totalorder %s26, 0
      %p200 = por %p198, %p199
      %s202 = sadd.s32 %s201, 1
      %p205 = scmp.eq.s32.totalorder %s20, 1
      %p206 = scmp.ne.s32.totalorder %s201, %s203
      %p207 = scmp.eq.s32.totalorder %s20, 0
      %p208 = por %p206, %p207
      %p209 = scmp.ne.s32.totalorder %s201, %s203
      %p210 = scmp.eq.s32.totalorder %s25, 1
      %p211 = por %p209, %p210
      %p212 = scmp.ne.s32.totalorder %s203, %s204
      %p213 = scmp.eq.s32.totalorder %s25, 0
      %p214 = por %p212, %p213
      %p215 = scmp.ne.s32.totalorder %s203, %s204
      %p216 = scmp.eq.s32.totalorder %s26, 1
      %p217 = por %p215, %p216
      %p219 = scmp.ne.s32.totalorder %s204, %s218
      %p220 = scmp.eq.s32.totalorder %s26, 0
      %p221 = por %p219, %p220
      %s222 = ssub.s32 %s20, %s27
      %p223 = scmp.eq.s32.totalorder %s222, 0
      %s225 = sadd.s32 %s224, 1
      %s226 = scalar_select %p223, %s224, %s225
      %p229 = pneg %p223
      %p230 = scmp.eq.s32.totalorder %s20, 1
      %p231 = por %p229, %p230
      %p232 = scmp.ne.s32.totalorder %s224, %s227
      %p233 = scmp.eq.s32.totalorder %s20, 0
      %p234 = por %p232, %p233
      %p235 = scmp.ne.s32.totalorder %s224, %s227
      %p236 = scmp.eq.s32.totalorder %s25, 1
      %p237 = por %p235, %p236
      %p238 = scmp.ne.s32.totalorder %s227, %s228
      %p239 = scmp.eq.s32.totalorder %s25, 0
      %p240 = por %p238, %p239
      %p241 = scmp.ne.s32.totalorder %s227, %s228
      %p242 = scmp.eq.s32.totalorder %s26, 1
      %p243 = por %p241, %p242
      %p245 = scmp.ne.s32.totalorder %s228, %s244
      %p246 = scmp.eq.s32.totalorder %s26, 0
      %p247 = por %p245, %p246
      %p248 = scmp.le.s32.totalorder 1, %s20
      %p249 = scmp.lt.s32.totalorder %s20, 3
      %p250 = pnand %p248, %p249
      %p251 = pneg %p250
      // Predicated region
      $region9: #{tpu_custom_call.1} parent=5 // pred_check
        _
      $region10: #{tpu_custom_call.1} parent=5 // pred_check_branch
        %253 = sbr.rel (%p250) target = $region12
      $region11: #{tpu_custom_call.1} parent=5 // pred_region
        %s254 = ssub.s32 %s20, 1
        // Predicated region
        $region13: #{tpu_custom_call.1} parent=11 // pred_check
          %p255 = pneg %p67
        $region14: #{tpu_custom_call.1} parent=11 // pred_check_branch
          %257 = sbr.rel (%p255) target = $region16
        $region15: #{tpu_custom_call.1} parent=11 // pred_region
          _
        $region16: #{tpu_custom_call.1} parent=11 // pred_fallthru
          _
        // Predicated region
        $region17: #{tpu_custom_call.1} parent=11 // pred_check
          %p258 = pneg %p88
        $region18: #{tpu_custom_call.1} parent=11 // pred_check_branch
          %260 = sbr.rel (%p258) target = $region20
        $region19: #{tpu_custom_call.1} parent=11 // pred_region
          _
        $region20: #{tpu_custom_call.1} parent=11 // pred_fallthru
          _
        // Predicated region
        $region21: #{tpu_custom_call.1} parent=11 // pred_check
          %p261 = pneg %p109
        $region22: #{tpu_custom_call.1} parent=11 // pred_check_branch
          %263 = sbr.rel (%p261) target = $region24
        $region23: #{tpu_custom_call.1} parent=11 // pred_region
          %s265 = ssub.s32 3072, 3072
          %266 = vsyncadd [#allocation3], %s265
          %s267 = sshll.u32 [#allocation2], 4
          %s268 = int_to_ptr.vmem [resolvable:$true] %s267
          %273 = dma.hbm_to_vmem [thread:$0]  %s3, 3072, %s268, [#allocation3], 192, 192, 12
        $region24: #{tpu_custom_call.1} parent=11 // pred_fallthru
          _
        // Predicated region
        $region25: #{tpu_custom_call.1} parent=11 // pred_check
          %p274 = pneg %p130
        $region26: #{tpu_custom_call.1} parent=11 // pred_check_branch
          %276 = sbr.rel (%p274) target = $region28
        $region27: #{tpu_custom_call.1} parent=11 // pred_region
          _
        $region28: #{tpu_custom_call.1} parent=11 // pred_fallthru
          _
        // Predicated region
        $region29: #{tpu_custom_call.1} parent=11 // pred_check
          %p277 = pneg %p151
        $region30: #{tpu_custom_call.1} parent=11 // pred_check_branch
          %279 = sbr.rel (%p277) target = $region32
        $region31: #{tpu_custom_call.1} parent=11 // pred_region
          %s281 = ssub.s32 3072, 3072
          %282 = vsyncadd [#allocation6], %s281
          %s283 = sshll.u32 [#allocation5], 4
          %s284 = int_to_ptr.vmem [resolvable:$true] %s283
          %289 = dma.hbm_to_vmem [thread:$0]  %s5, 3072, %s284, [#allocation6], 192, 192, 12
        $region32: #{tpu_custom_call.1} parent=11 // pred_fallthru
          _
        // Predicated region
        $region33: #{tpu_custom_call.1} parent=11 // pred_check
          %p290 = pneg %p172
        $region34: #{tpu_custom_call.1} parent=11 // pred_check_branch
          %292 = sbr.rel (%p290) target = $region36
        $region35: #{tpu_custom_call.1} parent=11 // pred_region
          _
        $region36: #{tpu_custom_call.1} parent=11 // pred_fallthru
          _
        // Predicated region
        $region37: #{tpu_custom_call.1} parent=11 // pred_check
          %p293 = pneg %p193
        $region38: #{tpu_custom_call.1} parent=11 // pred_check_branch
          %295 = sbr.rel (%p293) target = $region40
        $region39: #{tpu_custom_call.1} parent=11 // pred_region
          %s297 = ssub.s32 3072, 3072
          %298 = vsyncadd [#allocation6], %s297
          %s299 = sshll.u32 [#allocation7], 4
          %s300 = int_to_ptr.vmem [resolvable:$true] %s299
          %305 = dma.hbm_to_vmem [thread:$0]  %s7, 3072, %s300, [#allocation6], 64, 64, 4
        $region40: #{tpu_custom_call.1} parent=11 // pred_fallthru
          _
        // Predicated region
        $region41: #{tpu_custom_call.1} parent=11 // pred_check
          %p306 = pneg %p214
        $region42: #{tpu_custom_call.1} parent=11 // pred_check_branch
          %308 = sbr.rel (%p306) target = $region44
        $region43: #{tpu_custom_call.1} parent=11 // pred_region
          _
        $region44: #{tpu_custom_call.1} parent=11 // pred_fallthru
          _
      $region12: #{tpu_custom_call.1} parent=5 // pred_fallthru
        _
      %p309 = scmp.lt.s32.totalorder %s20, 2
      // Predicated region
      $region45: #{tpu_custom_call.1} parent=5 // pred_check
        %p310 = pneg %p309
      $region46: #{tpu_custom_call.1} parent=5 // pred_check_branch
        %312 = sbr.rel (%p310) target = $region48
      $region47: #{tpu_custom_call.1} parent=5 // pred_region
        // Predicated region
        $region49: #{tpu_custom_call.1} parent=47 // pred_check
          %p313 = pneg %p40
        $region50: #{tpu_custom_call.1} parent=47 // pred_check_branch
          %315 = sbr.rel (%p313) target = $region52
        $region51: #{tpu_custom_call.1} parent=47 // pred_region
          %p316 = scmp.lt.s32.totalorder %s20, 1
          %s317 = scalar_select %p316, %s20, 1
          %s318 = smul.addr %s317, 16
          %s319 = smul.addr %s318, 8
          %s320 = scalar_lea.vmem %s0, %s319
        $region52: #{tpu_custom_call.1} parent=47 // pred_fallthru
          _
      $region48: #{tpu_custom_call.1} parent=5 // pred_fallthru
        _
      %p321 = scmp.le.s32.totalorder 1, %s20
      %p322 = scmp.lt.s32.totalorder %s20, 3
      %p323 = pnand %p321, %p322
      %p324 = pneg %p323
      // Predicated region
      $region53: #{tpu_custom_call.1} parent=5 // pred_check
        _
      $region54: #{tpu_custom_call.1} parent=5 // pred_check_branch
        %326 = sbr.rel (%p323) target = $region56
      $region55: #{tpu_custom_call.1} parent=5 // pred_region
        %s327 = ssub.s32 %s20, 1
        // Predicated region
        $region57: #{tpu_custom_call.1} parent=55 // pred_check
          %p328 = pneg %p109
        $region58: #{tpu_custom_call.1} parent=55 // pred_check_branch
          %330 = sbr.rel (%p328) target = $region60
        $region59: #{tpu_custom_call.1} parent=55 // pred_region
          %331 = dma.done [#allocation3], 3072
        $region60: #{tpu_custom_call.1} parent=55 // pred_fallthru
          _
        // Predicated region
        $region61: #{tpu_custom_call.1} parent=55 // pred_check
          %p332 = pneg %p151
        $region62: #{tpu_custom_call.1} parent=55 // pred_check_branch
          %334 = sbr.rel (%p332) target = $region64
        $region63: #{tpu_custom_call.1} parent=55 // pred_region
          %335 = dma.done [#allocation6], 3072
        $region64: #{tpu_custom_call.1} parent=55 // pred_fallthru
          _
        // Predicated region
        $region65: #{tpu_custom_call.1} parent=55 // pred_check
          %p336 = pneg %p193
        $region66: #{tpu_custom_call.1} parent=55 // pred_check_branch
          %338 = sbr.rel (%p336) target = $region68
        $region67: #{tpu_custom_call.1} parent=55 // pred_region
          %339 = dma.done [#allocation6], 3072
        $region68: #{tpu_custom_call.1} parent=55 // pred_fallthru
          _
        %p340 = scmp.lt.s32.totalorder %s25, 1
        %s341 = scalar_select %p340, %s25, 1
        %s342 = smul.addr %s341, 16
        %s343 = smul.addr %s342, 8
        %s344 = scalar_lea.vmem %s0, %s343
        %p345 = pneg %p46
        %p346 = pneg %p43
        %p347 = pneg %p67
        %p348 = pneg %p64
        %p349 = pneg %p88
        %p350 = pneg %p85
        %p351 = pneg %p109
        %p352 = pneg %p106
        %p353 = pneg %p130
        %p354 = pneg %p127
        %p355 = pneg %p151
        %p356 = pneg %p148
        %p357 = pneg %p172
        %p358 = pneg %p169
        %p359 = pneg %p193
        %p360 = pneg %p190
        %p361 = pneg %p214
        %p362 = pneg %p211
        %p363 = pneg %p240
        %p364 = pneg %p237
        %s365 = sand.u32 %s227, 1
        %s366 = scalar_lea.sflag [#allocation4], %s365
        %s367 = sand.u32 %s227, 1
        %s368 = smul.addr %s367, 128
        %s369 = scalar_lea.vmem [#allocation8], %s368
        %p370 = scmp.lt.s32.totalorder %s25, 1
        %s371 = scalar_select %p370, %s25, 1
        %s372 = smul.addr %s371, 16
        %s373 = smul.addr %s372, 8
        %s374 = scalar_lea.vmem %s0, %s373
        %v376 = vld [vmem:[%s374] sm:$0xff]
        %v377 = vld [vmem:[%s374 + $0x8] sm:$0xff]
        %v378 = vld [vmem:[%s374 + $0x10] sm:$0xff]
        %v379 = vld [vmem:[%s374 + $0x18] sm:$0xff]
        %v380 = vld [vmem:[%s374 + $0x20] sm:$0xff]
        %v381 = vld [vmem:[%s374 + $0x28] sm:$0xff]
        %v382 = vld [vmem:[%s374 + $0x30] sm:$0xff]
        %v383 = vld [vmem:[%s374 + $0x38] sm:$0xff]
        %v384 = vld [vmem:[%s374 + $0x40] sm:$0xff]
        %v385 = vld [vmem:[%s374 + $0x48] sm:$0xff]
        %v386 = vld [vmem:[%s374 + $0x50] sm:$0xff]
        %v387 = vld [vmem:[%s374 + $0x58] sm:$0xff]
        %v388 = vld [vmem:[%s374 + $0x60] sm:$0xff]
        %v389 = vld [vmem:[%s374 + $0x68] sm:$0xff]
        %v390 = vld [vmem:[%s374 + $0x70] sm:$0xff]
        %v391 = vld [vmem:[%s374 + $0x78] sm:$0xff]
        %v392 = vpack.c.bf16 %v377, %v376
        %v393 = vpack.c.bf16 %v379, %v378
        %v394 = vpack.c.bf16 %v381, %v380
        %v395 = vpack.c.bf16 %v383, %v382
        %v396 = vpack.c.bf16 %v385, %v384
        %v397 = vpack.c.bf16 %v387, %v386
        %v398 = vpack.c.bf16 %v389, %v388
        %v399 = vpack.c.bf16 %v391, %v390
        %v400 = vld [vmem:[%s1] sm:$0xf]
        %v401 = vld [vmem:[%s1 + $0x4] sm:$0xf]
        %v402 = vld [vmem:[%s1 + $0x8] sm:$0xf]
        %v403 = vld [vmem:[%s1 + $0xc] sm:$0xf]
        %v404 = vld [vmem:[%s1 + $0x10] sm:$0xf]
        %v405 = vld [vmem:[%s1 + $0x14] sm:$0xf]
        %v406 = vld [vmem:[%s1 + $0x18] sm:$0xf]
        %v407 = vld [vmem:[%s1 + $0x1c] sm:$0xf]
        %v408 = vld [vmem:[%s1 + $0x20] sm:$0xf]
        %v409 = vld [vmem:[%s1 + $0x24] sm:$0xf]
        %v410 = vld [vmem:[%s1 + $0x28] sm:$0xf]
        %v411 = vld [vmem:[%s1 + $0x2c] sm:$0xf]
        %v412 = vld [vmem:[%s1 + $0x30] sm:$0xf]
        %v413 = vld [vmem:[%s1 + $0x34] sm:$0xf]
        %v414 = vld [vmem:[%s1 + $0x38] sm:$0xf]
        %v415 = vld [vmem:[%s1 + $0x3c] sm:$0xf]
        %v416 = vld [vmem:[%s1 + $0x40] sm:$0xf]
        %v417 = vld [vmem:[%s1 + $0x44] sm:$0xf]
        %v418 = vld [vmem:[%s1 + $0x48] sm:$0xf]
        %v419 = vld [vmem:[%s1 + $0x4c] sm:$0xf]
        %v420 = vld [vmem:[%s1 + $0x50] sm:$0xf]
        %v421 = vld [vmem:[%s1 + $0x54] sm:$0xf]
        %v422 = vld [vmem:[%s1 + $0x58] sm:$0xf]
        %v423 = vld [vmem:[%s1 + $0x5c] sm:$0xf]
        %v424 = vld [vmem:[%s1 + $0x60] sm:$0xf]
        %v425 = vld [vmem:[%s1 + $0x64] sm:$0xf]
        %v426 = vld [vmem:[%s1 + $0x68] sm:$0xf]
        %v427 = vld [vmem:[%s1 + $0x6c] sm:$0xf]
        %v428 = vld [vmem:[%s1 + $0x70] sm:$0xf]
        %v429 = vld [vmem:[%s1 + $0x74] sm:$0xf]
        %v430 = vld [vmem:[%s1 + $0x78] sm:$0xf]
        %v431 = vld [vmem:[%s1 + $0x7c] sm:$0xf]
        %v432 = vld [vmem:[%s1 + $0x80] sm:$0xf]
        %v433 = vld [vmem:[%s1 + $0x84] sm:$0xf]
        %v434 = vld [vmem:[%s1 + $0x88] sm:$0xf]
        %v435 = vld [vmem:[%s1 + $0x8c] sm:$0xf]
        %v436 = vld [vmem:[%s1 + $0x90] sm:$0xf]
        %v437 = vld [vmem:[%s1 + $0x94] sm:$0xf]
        %v438 = vld [vmem:[%s1 + $0x98] sm:$0xf]
        %v439 = vld [vmem:[%s1 + $0x9c] sm:$0xf]
        %v440 = vld [vmem:[%s1 + $0xa0] sm:$0xf]
        %v441 = vld [vmem:[%s1 + $0xa4] sm:$0xf]
        %v442 = vld [vmem:[%s1 + $0xa8] sm:$0xf]
        %v443 = vld [vmem:[%s1 + $0xac] sm:$0xf]
        %v444 = vld [vmem:[%s1 + $0xb0] sm:$0xf]
        %v445 = vld [vmem:[%s1 + $0xb4] sm:$0xf]
        %v446 = vld [vmem:[%s1 + $0xb8] sm:$0xf]
        %v447 = vld [vmem:[%s1 + $0xbc] sm:$0xf]
        %v448 = vld [vmem:[%s2] sm:$0xff]
        %v449 = vld [vmem:[%s2 + $0x8] sm:$0xff]
        %v450 = vld [vmem:[%s2 + $0x10] sm:$0xff]
        %v451 = vld [vmem:[%s2 + $0x18] sm:$0xff]
        %v452 = vld [vmem:[%s2 + $0x20] sm:$0xff]
        %v453 = vld [vmem:[%s2 + $0x28] sm:$0xff]
        %v454 = vld [vmem:[%s2 + $0x30] sm:$0xff]
        %v455 = vld [vmem:[%s2 + $0x38] sm:$0xff]
        %v456 = vld [vmem:[%s2 + $0x40] sm:$0xff]
        %v457 = vld [vmem:[%s2 + $0x48] sm:$0xff]
        %v458 = vld [vmem:[%s2 + $0x50] sm:$0xff]
        %v459 = vld [vmem:[%s2 + $0x58] sm:$0xff]
        %v460 = vld [vmem:[%s2 + $0x60] sm:$0xff]
        %v461 = vld [vmem:[%s2 + $0x68] sm:$0xff]
        %v462 = vld [vmem:[%s2 + $0x70] sm:$0xff]
        %v463 = vld [vmem:[%s2 + $0x78] sm:$0xff]
        %v464 = vld [vmem:[%s2 + $0x80] sm:$0xff]
        %v465 = vld [vmem:[%s2 + $0x88] sm:$0xff]
        %v466 = vld [vmem:[%s2 + $0x90] sm:$0xff]
        %v467 = vld [vmem:[%s2 + $0x98] sm:$0xff]
        %v468 = vld [vmem:[%s2 + $0xa0] sm:$0xff]
        %v469 = vld [vmem:[%s2 + $0xa8] sm:$0xff]
        %v470 = vld [vmem:[%s2 + $0xb0] sm:$0xff]
        %v471 = vld [vmem:[%s2 + $0xb8] sm:$0xff]
        %v472 = vld [vmem:[%s2 + $0xc0] sm:$0xff]
        %v473 = vld [vmem:[%s2 + $0xc8] sm:$0xff]
        %v474 = vld [vmem:[%s2 + $0xd0] sm:$0xff]
        %v475 = vld [vmem:[%s2 + $0xd8] sm:$0xff]
        %v476 = vld [vmem:[%s2 + $0xe0] sm:$0xff]
        %v477 = vld [vmem:[%s2 + $0xe8] sm:$0xff]
        %v478 = vld [vmem:[%s2 + $0xf0] sm:$0xff]
        %v479 = vld [vmem:[%s2 + $0xf8] sm:$0xff]
        %v480 = vld [vmem:[%s2 + $0x100] sm:$0xff]
        %v481 = vld [vmem:[%s2 + $0x108] sm:$0xff]
        %v482 = vld [vmem:[%s2 + $0x110] sm:$0xff]
        %v483 = vld [vmem:[%s2 + $0x118] sm:$0xff]
        %v484 = vld [vmem:[%s2 + $0x120] sm:$0xff]
        %v485 = vld [vmem:[%s2 + $0x128] sm:$0xff]
        %v486 = vld [vmem:[%s2 + $0x130] sm:$0xff]
        %v487 = vld [vmem:[%s2 + $0x138] sm:$0xff]
        %v488 = vld [vmem:[%s2 + $0x140] sm:$0xff]
        %v489 = vld [vmem:[%s2 + $0x148] sm:$0xff]
        %v490 = vld [vmem:[%s2 + $0x150] sm:$0xff]
        %v491 = vld [vmem:[%s2 + $0x158] sm:$0xff]
        %v492 = vld [vmem:[%s2 + $0x160] sm:$0xff]
        %v493 = vld [vmem:[%s2 + $0x168] sm:$0xff]
        %v494 = vld [vmem:[%s2 + $0x170] sm:$0xff]
        %v495 = vld [vmem:[%s2 + $0x178] sm:$0xff]
        %497 = vset.pattern.permute.xlu0 0
        %498 = vperm.xlu0 %497, %v448
        %v499 = vpop.permute.xlu0 %498
        %502 = vset.pattern.permute.xlu0 0
        %503 = vperm.xlu0 %502, %v449
        %v504 = vpop.permute.xlu0 %503
        %507 = vset.pattern.permute.xlu0 0
        %508 = vperm.xlu0 %507, %v450
        %v509 = vpop.permute.xlu0 %508
        %512 = vset.pattern.permute.xlu0 0
        %513 = vperm.xlu0 %512, %v451
        %v514 = vpop.permute.xlu0 %513
        %517 = vset.pattern.permute.xlu0 0
        %518 = vperm.xlu0 %517, %v452
        %v519 = vpop.permute.xlu0 %518
        %522 = vset.pattern.permute.xlu0 0
        %523 = vperm.xlu0 %522, %v453
        %v524 = vpop.permute.xlu0 %523
        %527 = vset.pattern.permute.xlu0 0
        %528 = vperm.xlu0 %527, %v454
        %v529 = vpop.permute.xlu0 %528
        %532 = vset.pattern.permute.xlu0 0
        %533 = vperm.xlu0 %532, %v455
        %v534 = vpop.permute.xlu0 %533
        %537 = vset.pattern.permute.xlu0 0
        %538 = vperm.xlu0 %537, %v456
        %v539 = vpop.permute.xlu0 %538
        %542 = vset.pattern.permute.xlu0 0
        %543 = vperm.xlu0 %542, %v457
        %v544 = vpop.permute.xlu0 %543
        %547 = vset.pattern.permute.xlu0 0
        %548 = vperm.xlu0 %547, %v458
        %v549 = vpop.permute.xlu0 %548
        %552 = vset.pattern.permute.xlu0 0
        %553 = vperm.xlu0 %552, %v459
        %v554 = vpop.permute.xlu0 %553
        %557 = vset.pattern.permute.xlu0 0
        %558 = vperm.xlu0 %557, %v460
        %v559 = vpop.permute.xlu0 %558
        %562 = vset.pattern.permute.xlu0 0
        %563 = vperm.xlu0 %562, %v461
        %v564 = vpop.permute.xlu0 %563
        %567 = vset.pattern.permute.xlu0 0
        %568 = vperm.xlu0 %567, %v462
        %v569 = vpop.permute.xlu0 %568
        %572 = vset.pattern.permute.xlu0 0
        %573 = vperm.xlu0 %572, %v463
        %v574 = vpop.permute.xlu0 %573
        %577 = vset.pattern.permute.xlu0 0
        %578 = vperm.xlu0 %577, %v464
        %v579 = vpop.permute.xlu0 %578
        %582 = vset.pattern.permute.xlu0 0
        %583 = vperm.xlu0 %582, %v465
        %v584 = vpop.permute.xlu0 %583
        %587 = vset.pattern.permute.xlu0 0
        %588 = vperm.xlu0 %587, %v466
        %v589 = vpop.permute.xlu0 %588
        %592 = vset.pattern.permute.xlu0 0
        %593 = vperm.xlu0 %592, %v467
        %v594 = vpop.permute.xlu0 %593
        %597 = vset.pattern.permute.xlu0 0
        %598 = vperm.xlu0 %597, %v468
        %v599 = vpop.permute.xlu0 %598
        %602 = vset.pattern.permute.xlu0 0
        %603 = vperm.xlu0 %602, %v469
        %v604 = vpop.permute.xlu0 %603
        %607 = vset.pattern.permute.xlu0 0
        %608 = vperm.xlu0 %607, %v470
        %v609 = vpop.permute.xlu0 %608
        %612 = vset.pattern.permute.xlu0 0
        %613 = vperm.xlu0 %612, %v471
        %v614 = vpop.permute.xlu0 %613
        %617 = vset.pattern.permute.xlu0 0
        %618 = vperm.xlu0 %617, %v472
        %v619 = vpop.permute.xlu0 %618
        %622 = vset.pattern.permute.xlu0 0
        %623 = vperm.xlu0 %622, %v473
        %v624 = vpop.permute.xlu0 %623
        %627 = vset.pattern.permute.xlu0 0
        %628 = vperm.xlu0 %627, %v474
        %v629 = vpop.permute.xlu0 %628
        %632 = vset.pattern.permute.xlu0 0
        %633 = vperm.xlu0 %632, %v475
        %v634 = vpop.permute.xlu0 %633
        %637 = vset.pattern.permute.xlu0 0
        %638 = vperm.xlu0 %637, %v476
        %v639 = vpop.permute.xlu0 %638
        %642 = vset.pattern.permute.xlu0 0
        %643 = vperm.xlu0 %642, %v477
        %v644 = vpop.permute.xlu0 %643
        %647 = vset.pattern.permute.xlu0 0
        %648 = vperm.xlu0 %647, %v478
        %v649 = vpop.permute.xlu0 %648
        %652 = vset.pattern.permute.xlu0 0
        %653 = vperm.xlu0 %652, %v479
        %v654 = vpop.permute.xlu0 %653
        %657 = vset.pattern.permute.xlu0 0
        %658 = vperm.xlu0 %657, %v480
        %v659 = vpop.permute.xlu0 %658
        %662 = vset.pattern.permute.xlu0 0
        %663 = vperm.xlu0 %662, %v481
        %v664 = vpop.permute.xlu0 %663
        %667 = vset.pattern.permute.xlu0 0
        %668 = vperm.xlu0 %667, %v482
        %v669 = vpop.permute.xlu0 %668
        %672 = vset.pattern.permute.xlu0 0
        %673 = vperm.xlu0 %672, %v483
        %v674 = vpop.permute.xlu0 %673
        %677 = vset.pattern.permute.xlu0 0
        %678 = vperm.xlu0 %677, %v484
        %v679 = vpop.permute.xlu0 %678
        %682 = vset.pattern.permute.xlu0 0
        %683 = vperm.xlu0 %682, %v485
        %v684 = vpop.permute.xlu0 %683
        %687 = vset.pattern.permute.xlu0 0
        %688 = vperm.xlu0 %687, %v486
        %v689 = vpop.permute.xlu0 %688
        %692 = vset.pattern.permute.xlu0 0
        %693 = vperm.xlu0 %692, %v487
        %v694 = vpop.permute.xlu0 %693
        %697 = vset.pattern.permute.xlu0 0
        %698 = vperm.xlu0 %697, %v488
        %v699 = vpop.permute.xlu0 %698
        %702 = vset.pattern.permute.xlu0 0
        %703 = vperm.xlu0 %702, %v489
        %v704 = vpop.permute.xlu0 %703
        %707 = vset.pattern.permute.xlu0 0
        %708 = vperm.xlu0 %707, %v490
        %v709 = vpop.permute.xlu0 %708
        %712 = vset.pattern.permute.xlu0 0
        %713 = vperm.xlu0 %712, %v491
        %v714 = vpop.permute.xlu0 %713
        %717 = vset.pattern.permute.xlu0 0
        %718 = vperm.xlu0 %717, %v492
        %v719 = vpop.permute.xlu0 %718
        %722 = vset.pattern.permute.xlu0 0
        %723 = vperm.xlu0 %722, %v493
        %v724 = vpop.permute.xlu0 %723
        %727 = vset.pattern.permute.xlu0 0
        %728 = vperm.xlu0 %727, %v494
        %v729 = vpop.permute.xlu0 %728
        %732 = vset.pattern.permute.xlu0 0
        %733 = vperm.xlu0 %732, %v495
        %v734 = vpop.permute.xlu0 %733
        %v784 = vunpack.c.l.b16 %v400
        %v785 = vunpack.c.l.b16 %v401
        %v786 = vunpack.c.l.b16 %v402
        %v787 = vunpack.c.l.b16 %v403
        %v788 = vunpack.c.l.b16 %v404
        %v789 = vunpack.c.l.b16 %v405
        %v790 = vunpack.c.l.b16 %v406
        %v791 = vunpack.c.l.b16 %v407
        %v792 = vunpack.c.l.b16 %v408
        %v793 = vunpack.c.l.b16 %v409
        %v794 = vunpack.c.l.b16 %v410
        %v795 = vunpack.c.l.b16 %v411
        %v796 = vunpack.c.l.b16 %v412
        %v797 = vunpack.c.l.b16 %v413
        %v798 = vunpack.c.l.b16 %v414
        %v799 = vunpack.c.l.b16 %v415
        %v800 = vunpack.c.l.b16 %v416
        %v801 = vunpack.c.l.b16 %v417
        %v802 = vunpack.c.l.b16 %v418
        %v803 = vunpack.c.l.b16 %v419
        %v804 = vunpack.c.l.b16 %v420
        %v805 = vunpack.c.l.b16 %v421
        %v806 = vunpack.c.l.b16 %v422
        %v807 = vunpack.c.l.b16 %v423
        %v808 = vunpack.c.l.b16 %v424
        %v809 = vunpack.c.l.b16 %v425
        %v810 = vunpack.c.l.b16 %v426
        %v811 = vunpack.c.l.b16 %v427
        %v812 = vunpack.c.l.b16 %v428
        %v813 = vunpack.c.l.b16 %v429
        %v814 = vunpack.c.l.b16 %v430
        %v815 = vunpack.c.l.b16 %v431
        %v816 = vunpack.c.l.b16 %v432
        %v817 = vunpack.c.l.b16 %v433
        %v818 = vunpack.c.l.b16 %v434
        %v819 = vunpack.c.l.b16 %v435
        %v820 = vunpack.c.l.b16 %v436
        %v821 = vunpack.c.l.b16 %v437
        %v822 = vunpack.c.l.b16 %v438
        %v823 = vunpack.c.l.b16 %v439
        %v824 = vunpack.c.l.b16 %v440
        %v825 = vunpack.c.l.b16 %v441
        %v826 = vunpack.c.l.b16 %v442
        %v827 = vunpack.c.l.b16 %v443
        %v828 = vunpack.c.l.b16 %v444
        %v829 = vunpack.c.l.b16 %v445
        %v830 = vunpack.c.l.b16 %v446
        %v831 = vunpack.c.l.b16 %v447
        %v832 = vpack.c.b16 %v785, %v784
        %v833 = vpack.c.b16 %v787, %v786
        %v834 = vpack.c.b16 %v789, %v788
        %v835 = vpack.c.b16 %v791, %v790
        %v836 = vpack.c.b16 %v793, %v792
        %v837 = vpack.c.b16 %v795, %v794
        %v838 = vpack.c.b16 %v797, %v796
        %v839 = vpack.c.b16 %v799, %v798
        %v840 = vpack.c.b16 %v801, %v800
        %v841 = vpack.c.b16 %v803, %v802
        %v842 = vpack.c.b16 %v805, %v804
        %v843 = vpack.c.b16 %v807, %v806
        %v844 = vpack.c.b16 %v809, %v808
        %v845 = vpack.c.b16 %v811, %v810
        %v846 = vpack.c.b16 %v813, %v812
        %v847 = vpack.c.b16 %v815, %v814
        %v848 = vpack.c.b16 %v817, %v816
        %v849 = vpack.c.b16 %v819, %v818
        %v850 = vpack.c.b16 %v821, %v820
        %v851 = vpack.c.b16 %v823, %v822
        %v852 = vpack.c.b16 %v825, %v824
        %v853 = vpack.c.b16 %v827, %v826
        %v854 = vpack.c.b16 %v829, %v828
        %v855 = vpack.c.b16 %v831, %v830
        %880 = vmatprep.subr.bf16.mxu0 0
        %881 = vmatpush1.bf16.msra.mxu0 %v392
        %882 = vmatprep.subr.bf16.mxu0 0
        %883 = vmatpush1.bf16.msra.mxu0 %v393
        %884 = vmatprep.subr.bf16.mxu0 0
        %885 = vmatpush1.bf16.msra.mxu0 %v394
        %886 = vmatprep.subr.bf16.mxu0 0
        %887 = vmatpush1.bf16.msra.mxu0 %v395
        %888 = vmatprep.subr.bf16.mxu0 0
        %889 = vmatpush1.bf16.msra.mxu0 %v396
        %890 = vmatprep.subr.bf16.mxu0 0
        %891 = vmatpush1.bf16.msra.mxu0 %v397
        %892 = vmatprep.subr.bf16.mxu0 0
        %893 = vmatpush1.bf16.msra.mxu0 %v398
        %894 = vmatprep.subr.bf16.mxu0 0
        %895 = vmatpush1.bf16.msra.mxu0 %v399
        %896 = vmatprep.subr.bf16.mxu0 0
        %897 = vmatpush1.bf16.msra.mxu0 0
        %898 = vmatprep.subr.bf16.mxu0 0
        %899 = vmatpush1.bf16.msra.mxu0 0
        %900 = vmatprep.subr.bf16.mxu0 0
        %901 = vmatpush1.bf16.msra.mxu0 0
        %902 = vmatprep.subr.bf16.mxu0 0
        %903 = vmatpush1.bf16.msra.mxu0 0
        %904 = vmatprep.subr.bf16.mxu0 0
        %905 = vmatpush1.bf16.msra.mxu0 0
        %906 = vmatprep.subr.bf16.mxu0 0
        %907 = vmatpush1.bf16.msra.mxu0 0
        %908 = vmatprep.subr.bf16.mxu0 0
        %909 = vmatpush1.bf16.msra.mxu0 0
        %910 = vmatprep.subr.bf16.mxu0 0
        %911 = vmatpush1.bf16.msra.mxu0 0
        %912 = vmatprep.mubr.bf16.mxu0 0
        %913 = vmatmul.mubr.bf16.gmra.mrb[0].mxu0 %v832
        %v914 = vpop.f32.mrb[0].mxu0
        %v915 = vadd.f32 %v499, %v914
        %v916 = vpop.f32.mrb[0].mxu0
        %v917 = vpop.f32.mrb[0].mxu0
        %v918 = vadd.f32 %v504, %v917
        %v919 = vpop.f32.mrb[0].mxu0
        %920 = vmatprep.mubr.bf16.mxu0 0
        %921 = vmatmul.mubr.bf16.gmra.mrb[0].mxu0 %v833
        %v922 = vpop.f32.mrb[0].mxu0
        %v923 = vadd.f32 %v509, %v922
        %v924 = vpop.f32.mrb[0].mxu0
        %v925 = vpop.f32.mrb[0].mxu0
        %v926 = vadd.f32 %v514, %v925
        %v927 = vpop.f32.mrb[0].mxu0
        %928 = vmatprep.mubr.bf16.mxu0 0
        %929 = vmatmul.mubr.bf16.gmra.mrb[0].mxu0 %v834
        %v930 = vpop.f32.mrb[0].mxu0
        %v931 = vadd.f32 %v519, %v930
        %v932 = vpop.f32.mrb[0].mxu0
        %v933 = vpop.f32.mrb[0].mxu0
        %v934 = vadd.f32 %v524, %v933
        %v935 = vpop.f32.mrb[0].mxu0
        %936 = vmatprep.mubr.bf16.mxu0 0
        %937 = vmatmul.mubr.bf16.gmra.mrb[0].mxu0 %v835
        %v938 = vpop.f32.mrb[0].mxu0
        %v939 = vadd.f32 %v529, %v938
        %v940 = vpop.f32.mrb[0].mxu0
        %v941 = vpop.f32.mrb[0].mxu0
        %v942 = vadd.f32 %v534, %v941
        %v943 = vpop.f32.mrb[0].mxu0
        %944 = vmatprep.mubr.bf16.mxu0 0
        %945 = vmatmul.mubr.bf16.gmra.mrb[0].mxu0 %v836
        %v946 = vpop.f32.mrb[0].mxu0
        %v947 = vadd.f32 %v539, %v946
        %v948 = vpop.f32.mrb[0].mxu0
        %v949 = vpop.f32.mrb[0].mxu0
        %v950 = vadd.f32 %v544, %v949
        %v951 = vpop.f32.mrb[0].mxu0
        %952 = vmatprep.mubr.bf16.mxu0 0
        %953 = vmatmul.mubr.bf16.gmra.mrb[0].mxu0 %v837
        %v954 = vpop.f32.mrb[0].mxu0
        %v955 = vadd.f32 %v549, %v954
        %v956 = vpop.f32.mrb[0].mxu0
        %v957 = vpop.f32.mrb[0].mxu0
        %v958 = vadd.f32 %v554, %v957
        %v959 = vpop.f32.mrb[0].mxu0
        %960 = vmatprep.mubr.bf16.mxu0 0
        %961 = vmatmul.mubr.bf16.gmra.mrb[0].mxu0 %v838
        %v962 = vpop.f32.mrb[0].mxu0
        %v963 = vadd.f32 %v559, %v962
        %v964 = vpop.f32.mrb[0].mxu0
        %v965 = vpop.f32.mrb[0].mxu0
        %v966 = vadd.f32 %v564, %v965
        %v967 = vpop.f32.mrb[0].mxu0
        %968 = vmatprep.mubr.bf16.mxu0 0
        %969 = vmatmul.mubr.bf16.gmra.mrb[0].mxu0 %v839
        %v970 = vpop.f32.mrb[0].mxu0
        %v971 = vadd.f32 %v569, %v970
        %v972 = vpop.f32.mrb[0].mxu0
        %v973 = vpop.f32.mrb[0].mxu0
        %v974 = vadd.f32 %v574, %v973
        %v975 = vpop.f32.mrb[0].mxu0
        %976 = vmatprep.mubr.bf16.mxu0 0
        %977 = vmatmul.mubr.bf16.gmra.mrb[0].mxu0 %v840
        %v978 = vpop.f32.mrb[0].mxu0
        %v979 = vadd.f32 %v579, %v978
        %v980 = vpop.f32.mrb[0].mxu0
        %v981 = vpop.f32.mrb[0].mxu0
        %v982 = vadd.f32 %v584, %v981
        %v983 = vpop.f32.mrb[0].mxu0
        %984 = vmatprep.mubr.bf16.mxu0 0
        %985 = vmatmul.mubr.bf16.gmra.mrb[0].mxu0 %v841
        %v986 = vpop.f32.mrb[0].mxu0
        %v987 = vadd.f32 %v589, %v986
        %v988 = vpop.f32.mrb[0].mxu0
        %v989 = vpop.f32.mrb[0].mxu0
        %v990 = vadd.f32 %v594, %v989
        %v991 = vpop.f32.mrb[0].mxu0
        %992 = vmatprep.mubr.bf16.mxu0 0
        %993 = vmatmul.mubr.bf16.gmra.mrb[0].mxu0 %v842
        %v994 = vpop.f32.mrb[0].mxu0
        %v995 = vadd.f32 %v599, %v994
        %v996 = vpop.f32.mrb[0].mxu0
        %v997 = vpop.f32.mrb[0].mxu0
        %v998 = vadd.f32 %v604, %v997
        %v999 = vpop.f32.mrb[0].mxu0
        %1000 = vmatprep.mubr.bf16.mxu0 0
        %1001 = vmatmul.mubr.bf16.gmra.mrb[0].mxu0 %v843
        %v1002 = vpop.f32.mrb[0].mxu0
        %v1003 = vadd.f32 %v609, %v1002
        %v1004 = vpop.f32.mrb[0].mxu0
        %v1005 = vpop.f32.mrb[0].mxu0
        %v1006 = vadd.f32 %v614, %v1005
        %v1007 = vpop.f32.mrb[0].mxu0
        %1008 = vmatprep.mubr.bf16.mxu0 0
        %1009 = vmatmul.mubr.bf16.gmra.mrb[0].mxu0 %v844
        %v1010 = vpop.f32.mrb[0].mxu0
        %v1011 = vadd.f32 %v619, %v1010
        %v1012 = vpop.f32.mrb[0].mxu0
        %v1013 = vpop.f32.mrb[0].mxu0
        %v1014 = vadd.f32 %v624, %v1013
        %v1015 = vpop.f32.mrb[0].mxu0
        %1016 = vmatprep.mubr.bf16.mxu0 0
        %1017 = vmatmul.mubr.bf16.gmra.mrb[0].mxu0 %v845
        %v1018 = vpop.f32.mrb[0].mxu0
        %v1019 = vadd.f32 %v629, %v1018
        %v1020 = vpop.f32.mrb[0].mxu0
        %v1021 = vpop.f32.mrb[0].mxu0
        %v1022 = vadd.f32 %v634, %v1021
        %v1023 = vpop.f32.mrb[0].mxu0
        %1024 = vmatprep.mubr.bf16.mxu0 0
        %1025 = vmatmul.mubr.bf16.gmra.mrb[0].mxu0 %v846
        %v1026 = vpop.f32.mrb[0].mxu0
        %v1027 = vadd.f32 %v639, %v1026
        %v1028 = vpop.f32.mrb[0].mxu0
        %v1029 = vpop.f32.mrb[0].mxu0
        %v1030 = vadd.f32 %v644, %v1029
        %v1031 = vpop.f32.mrb[0].mxu0
        %1032 = vmatprep.mubr.bf16.mxu0 0
        %1033 = vmatmul.mubr.bf16.gmra.mrb[0].mxu0 %v847
        %v1034 = vpop.f32.mrb[0].mxu0
        %v1035 = vadd.f32 %v649, %v1034
        %v1036 = vpop.f32.mrb[0].mxu0
        %v1037 = vpop.f32.mrb[0].mxu0
        %v1038 = vadd.f32 %v654, %v1037
        %v1039 = vpop.f32.mrb[0].mxu0
        %1040 = vmatprep.mubr.bf16.mxu0 0
        %1041 = vmatmul.mubr.bf16.gmra.mrb[0].mxu0 %v848
        %v1042 = vpop.f32.mrb[0].mxu0
        %v1043 = vadd.f32 %v659, %v1042
        %v1044 = vpop.f32.mrb[0].mxu0
        %v1045 = vpop.f32.mrb[0].mxu0
        %v1046 = vadd.f32 %v664, %v1045
        %v1047 = vpop.f32.mrb[0].mxu0
        %1048 = vmatprep.mubr.bf16.mxu0 0
        %1049 = vmatmul.mubr.bf16.gmra.mrb[0].mxu0 %v849
        %v1050 = vpop.f32.mrb[0].mxu0
        %v1051 = vadd.f32 %v669, %v1050
        %v1052 = vpop.f32.mrb[0].mxu0
        %v1053 = vpop.f32.mrb[0].mxu0
        %v1054 = vadd.f32 %v674, %v1053
        %v1055 = vpop.f32.mrb[0].mxu0
        %1056 = vmatprep.mubr.bf16.mxu0 0
        %1057 = vmatmul.mubr.bf16.gmra.mrb[0].mxu0 %v850
        %v1058 = vpop.f32.mrb[0].mxu0
        %v1059 = vadd.f32 %v679, %v1058
        %v1060 = vpop.f32.mrb[0].mxu0
        %v1061 = vpop.f32.mrb[0].mxu0
        %v1062 = vadd.f32 %v684, %v1061
        %v1063 = vpop.f32.mrb[0].mxu0
        %1064 = vmatprep.mubr.bf16.mxu0 0
        %1065 = vmatmul.mubr.bf16.gmra.mrb[0].mxu0 %v851
        %v1066 = vpop.f32.mrb[0].mxu0
        %v1067 = vadd.f32 %v689, %v1066
        %v1068 = vpop.f32.mrb[0].mxu0
        %v1069 = vpop.f32.mrb[0].mxu0
        %v1070 = vadd.f32 %v694, %v1069
        %v1071 = vpop.f32.mrb[0].mxu0
        %1072 = vmatprep.mubr.bf16.mxu0 0
        %1073 = vmatmul.mubr.bf16.gmra.mrb[0].mxu0 %v852
        %v1074 = vpop.f32.mrb[0].mxu0
        %v1075 = vadd.f32 %v699, %v1074
        %v1076 = vpop.f32.mrb[0].mxu0
        %v1077 = vpop.f32.mrb[0].mxu0
        %v1078 = vadd.f32 %v704, %v1077
        %v1079 = vpop.f32.mrb[0].mxu0
        %1080 = vmatprep.mubr.bf16.mxu0 0
        %1081 = vmatmul.mubr.bf16.gmra.mrb[0].mxu0 %v853
        %v1082 = vpop.f32.mrb[0].mxu0
        %v1083 = vadd.f32 %v709, %v1082
        %v1084 = vpop.f32.mrb[0].mxu0
        %v1085 = vpop.f32.mrb[0].mxu0
        %v1086 = vadd.f32 %v714, %v1085
        %v1087 = vpop.f32.mrb[0].mxu0
        %1088 = vmatprep.mubr.bf16.mxu0 0
        %1089 = vmatmul.mubr.bf16.gmra.mrb[0].mxu0 %v854
        %v1090 = vpop.f32.mrb[0].mxu0
        %v1091 = vadd.f32 %v719, %v1090
        %v1092 = vpop.f32.mrb[0].mxu0
        %v1093 = vpop.f32.mrb[0].mxu0
        %v1094 = vadd.f32 %v724, %v1093
        %v1095 = vpop.f32.mrb[0].mxu0
        %1096 = vmatprep.mubr.bf16.mxu0 0
        %1097 = vmatmul.mubr.bf16.gmra.mrb[0].mxu0 %v855
        %v1098 = vpop.f32.mrb[0].mxu0
        %v1099 = vadd.f32 %v729, %v1098
        %v1100 = vpop.f32.mrb[0].mxu0
        %v1101 = vpop.f32.mrb[0].mxu0
        %v1102 = vadd.f32 %v734, %v1101
        %v1103 = vpop.f32.mrb[0].mxu0
        %1104 = vdwg.mxu0
        %v1105 = vmul.f32 %v915, 2.0
        %v1106 = vmul.f32 %v918, 2.0
        %v1107 = vmul.f32 %v923, 2.0
        %v1108 = vmul.f32 %v926, 2.0
        %v1109 = vmul.f32 %v931, 2.0
        %v1110 = vmul.f32 %v934, 2.0
        %v1111 = vmul.f32 %v939, 2.0
        %v1112 = vmul.f32 %v942, 2.0
        %v1113 = vmul.f32 %v947, 2.0
        %v1114 = vmul.f32 %v950, 2.0
        %v1115 = vmul.f32 %v955, 2.0
        %v1116 = vmul.f32 %v958, 2.0
        %v1117 = vmul.f32 %v963, 2.0
        %v1118 = vmul.f32 %v966, 2.0
        %v1119 = vmul.f32 %v971, 2.0
        %v1120 = vmul.f32 %v974, 2.0
        %v1121 = vmul.f32 %v979, 2.0
        %v1122 = vmul.f32 %v982, 2.0
        %v1123 = vmul.f32 %v987, 2.0
        %v1124 = vmul.f32 %v990, 2.0
        %v1125 = vmul.f32 %v995, 2.0
        %v1126 = vmul.f32 %v998, 2.0
        %v1127 = vmul.f32 %v1003, 2.0
        %v1128 = vmul.f32 %v1006, 2.0
        %v1129 = vmul.f32 %v1011, 2.0
        %v1130 = vmul.f32 %v1014, 2.0
        %v1131 = vmul.f32 %v1019, 2.0
        %v1132 = vmul.f32 %v1022, 2.0
        %v1133 = vmul.f32 %v1027, 2.0
        %v1134 = vmul.f32 %v1030, 2.0
        %v1135 = vmul.f32 %v1035, 2.0
        %v1136 = vmul.f32 %v1038, 2.0
        %v1137 = vmul.f32 %v1043, 2.0
        %v1138 = vmul.f32 %v1046, 2.0
        %v1139 = vmul.f32 %v1051, 2.0
        %v1140 = vmul.f32 %v1054, 2.0
        %v1141 = vmul.f32 %v1059, 2.0
        %v1142 = vmul.f32 %v1062, 2.0
        %v1143 = vmul.f32 %v1067, 2.0
        %v1144 = vmul.f32 %v1070, 2.0
        %v1145 = vmul.f32 %v1075, 2.0
        %v1146 = vmul.f32 %v1078, 2.0
        %v1147 = vmul.f32 %v1083, 2.0
        %v1148 = vmul.f32 %v1086, 2.0
        %v1149 = vmul.f32 %v1091, 2.0
        %v1150 = vmul.f32 %v1094, 2.0
        %v1151 = vmul.f32 %v1099, 2.0
        %v1152 = vmul.f32 %v1102, 2.0
        %v1153 = vtanh.pop %v1105
        %v1154 = vtanh.pop %v1106
        %v1155 = vtanh.pop %v1107
        %v1156 = vtanh.pop %v1108
        %v1157 = vtanh.pop %v1109
        %v1158 = vtanh.pop %v1110
        %v1159 = vtanh.pop %v1111
        %v1160 = vtanh.pop %v1112
        %v1161 = vtanh.pop %v1113
        %v1162 = vtanh.pop %v1114
        %v1163 = vtanh.pop %v1115
        %v1164 = vtanh.pop %v1116
        %v1165 = vtanh.pop %v1117
        %v1166 = vtanh.pop %v1118
        %v1167 = vtanh.pop %v1119
        %v1168 = vtanh.pop %v1120
        %v1169 = vtanh.pop %v1121
        %v1170 = vtanh.pop %v1122
        %v1171 = vtanh.pop %v1123
        %v1172 = vtanh.pop %v1124
        %v1173 = vtanh.pop %v1125
        %v1174 = vtanh.pop %v1126
        %v1175 = vtanh.pop %v1127
        %v1176 = vtanh.pop %v1128
        %v1177 = vtanh.pop %v1129
        %v1178 = vtanh.pop %v1130
        %v1179 = vtanh.pop %v1131
        %v1180 = vtanh.pop %v1132
        %v1181 = vtanh.pop %v1133
        %v1182 = vtanh.pop %v1134
        %v1183 = vtanh.pop %v1135
        %v1184 = vtanh.pop %v1136
        %v1185 = vtanh.pop %v1137
        %v1186 = vtanh.pop %v1138
        %v1187 = vtanh.pop %v1139
        %v1188 = vtanh.pop %v1140
        %v1189 = vtanh.pop %v1141
        %v1190 = vtanh.pop %v1142
        %v1191 = vtanh.pop %v1143
        %v1192 = vtanh.pop %v1144
        %v1193 = vtanh.pop %v1145
        %v1194 = vtanh.pop %v1146
        %v1195 = vtanh.pop %v1147
        %v1196 = vtanh.pop %v1148
        %v1197 = vtanh.pop %v1149
        %v1198 = vtanh.pop %v1150
        %v1199 = vtanh.pop %v1151
        %v1200 = vtanh.pop %v1152
        %v1201 = vld [vmem:[#allocation2] sm:$0xff]
        %v1202 = vld [vmem:[#allocation2 + $0x8] sm:$0xf]
        %v1203 = vld [vmem:[#allocation2 + $0xc] sm:$0xff]
        %v1204 = vld [vmem:[#allocation2 + $0x14] sm:$0xf]
        %v1205 = vld [vmem:[#allocation2 + $0x18] sm:$0xff]
        %v1206 = vld [vmem:[#allocation2 + $0x20] sm:$0xf]
        %v1207 = vld [vmem:[#allocation2 + $0x24] sm:$0xff]
        %v1208 = vld [vmem:[#allocation2 + $0x2c] sm:$0xf]
        %v1209 = vld [vmem:[#allocation2 + $0x30] sm:$0xff]
        %v1210 = vld [vmem:[#allocation2 + $0x38] sm:$0xf]
        %v1211 = vld [vmem:[#allocation2 + $0x3c] sm:$0xff]
        %v1212 = vld [vmem:[#allocation2 + $0x44] sm:$0xf]
        %v1213 = vld [vmem:[#allocation2 + $0x48] sm:$0xff]
        %v1214 = vld [vmem:[#allocation2 + $0x50] sm:$0xf]
        %v1215 = vld [vmem:[#allocation2 + $0x54] sm:$0xff]
        %v1216 = vld [vmem:[#allocation2 + $0x5c] sm:$0xf]
        %v1217 = vld [vmem:[#allocation2 + $0x60] sm:$0xff]
        %v1218 = vld [vmem:[#allocation2 + $0x68] sm:$0xf]
        %v1219 = vld [vmem:[#allocation2 + $0x6c] sm:$0xff]
        %v1220 = vld [vmem:[#allocation2 + $0x74] sm:$0xf]
        %v1221 = vld [vmem:[#allocation2 + $0x78] sm:$0xff]
        %v1222 = vld [vmem:[#allocation2 + $0x80] sm:$0xf]
        %v1223 = vld [vmem:[#allocation2 + $0x84] sm:$0xff]
        %v1224 = vld [vmem:[#allocation2 + $0x8c] sm:$0xf]
        %v1225 = vld [vmem:[#allocation2 + $0x90] sm:$0xff]
        %v1226 = vld [vmem:[#allocation2 + $0x98] sm:$0xf]
        %v1227 = vld [vmem:[#allocation2 + $0x9c] sm:$0xff]
        %v1228 = vld [vmem:[#allocation2 + $0xa4] sm:$0xf]
        %v1229 = vld [vmem:[#allocation2 + $0xa8] sm:$0xff]
        %v1230 = vld [vmem:[#allocation2 + $0xb0] sm:$0xf]
        %v1231 = vld [vmem:[#allocation2 + $0xb4] sm:$0xff]
        %v1232 = vld [vmem:[#allocation2 + $0xbc] sm:$0xf]
        %v1233 = vpack.c.bf16 %v1154, %v1153
        %v1234 = vpack.c.bf16 %v1156, %v1155
        %v1235 = vpack.c.bf16 %v1158, %v1157
        %v1236 = vpack.c.bf16 %v1160, %v1159
        %v1237 = vpack.c.bf16 %v1162, %v1161
        %v1238 = vpack.c.bf16 %v1164, %v1163
        %v1239 = vpack.c.bf16 %v1166, %v1165
        %v1240 = vpack.c.bf16 %v1168, %v1167
        %v1241 = vpack.c.bf16 %v1170, %v1169
        %v1242 = vpack.c.bf16 %v1172, %v1171
        %v1243 = vpack.c.bf16 %v1174, %v1173
        %v1244 = vpack.c.bf16 %v1176, %v1175
        %v1245 = vpack.c.bf16 %v1178, %v1177
        %v1246 = vpack.c.bf16 %v1180, %v1179
        %v1247 = vpack.c.bf16 %v1182, %v1181
        %v1248 = vpack.c.bf16 %v1184, %v1183
        %v1249 = vpack.c.bf16 %v1186, %v1185
        %v1250 = vpack.c.bf16 %v1188, %v1187
        %v1251 = vpack.c.bf16 %v1190, %v1189
        %v1252 = vpack.c.bf16 %v1192, %v1191
        %v1253 = vpack.c.bf16 %v1194, %v1193
        %v1254 = vpack.c.bf16 %v1196, %v1195
        %v1255 = vpack.c.bf16 %v1198, %v1197
        %v1256 = vpack.c.bf16 %v1200, %v1199
        %v1257 = vld [vmem:[%s4] sm:$0xff]
        %v1258 = vld [vmem:[%s4 + $0x8] sm:$0xff]
        %v1259 = vld [vmem:[%s4 + $0x10] sm:$0xff]
        %v1260 = vld [vmem:[%s4 + $0x18] sm:$0xff]
        %v1261 = vld [vmem:[%s4 + $0x20] sm:$0xff]
        %v1262 = vld [vmem:[%s4 + $0x28] sm:$0xff]
        %v1263 = vld [vmem:[%s4 + $0x30] sm:$0xff]
        %v1264 = vld [vmem:[%s4 + $0x38] sm:$0xff]
        %v1265 = vld [vmem:[%s4 + $0x40] sm:$0xff]
        %v1266 = vld [vmem:[%s4 + $0x48] sm:$0xff]
        %v1267 = vld [vmem:[%s4 + $0x50] sm:$0xff]
        %v1268 = vld [vmem:[%s4 + $0x58] sm:$0xff]
        %v1269 = vld [vmem:[%s4 + $0x60] sm:$0xff]
        %v1270 = vld [vmem:[%s4 + $0x68] sm:$0xff]
        %v1271 = vld [vmem:[%s4 + $0x70] sm:$0xff]
        %v1272 = vld [vmem:[%s4 + $0x78] sm:$0xff]
        %1274 = vset.pattern.permute.xlu0 0
        %1275 = vperm.xlu0 %1274, %v1257
        %v1276 = vpop.permute.xlu0 %1275
        %1279 = vset.pattern.permute.xlu0 0
        %1280 = vperm.xlu0 %1279, %v1258
        %v1281 = vpop.permute.xlu0 %1280
        %1284 = vset.pattern.permute.xlu0 0
        %1285 = vperm.xlu0 %1284, %v1259
        %v1286 = vpop.permute.xlu0 %1285
        %1289 = vset.pattern.permute.xlu0 0
        %1290 = vperm.xlu0 %1289, %v1260
        %v1291 = vpop.permute.xlu0 %1290
        %1294 = vset.pattern.permute.xlu0 0
        %1295 = vperm.xlu0 %1294, %v1261
        %v1296 = vpop.permute.xlu0 %1295
        %1299 = vset.pattern.permute.xlu0 0
        %1300 = vperm.xlu0 %1299, %v1262
        %v1301 = vpop.permute.xlu0 %1300
        %1304 = vset.pattern.permute.xlu0 0
        %1305 = vperm.xlu0 %1304, %v1263
        %v1306 = vpop.permute.xlu0 %1305
        %1309 = vset.pattern.permute.xlu0 0
        %1310 = vperm.xlu0 %1309, %v1264
        %v1311 = vpop.permute.xlu0 %1310
        %1314 = vset.pattern.permute.xlu0 0
        %1315 = vperm.xlu0 %1314, %v1265
        %v1316 = vpop.permute.xlu0 %1315
        %1319 = vset.pattern.permute.xlu0 0
        %1320 = vperm.xlu0 %1319, %v1266
        %v1321 = vpop.permute.xlu0 %1320
        %1324 = vset.pattern.permute.xlu0 0
        %1325 = vperm.xlu0 %1324, %v1267
        %v1326 = vpop.permute.xlu0 %1325
        %1329 = vset.pattern.permute.xlu0 0
        %1330 = vperm.xlu0 %1329, %v1268
        %v1331 = vpop.permute.xlu0 %1330
        %1334 = vset.pattern.permute.xlu0 0
        %1335 = vperm.xlu0 %1334, %v1269
        %v1336 = vpop.permute.xlu0 %1335
        %1339 = vset.pattern.permute.xlu0 0
        %1340 = vperm.xlu0 %1339, %v1270
        %v1341 = vpop.permute.xlu0 %1340
        %1344 = vset.pattern.permute.xlu0 0
        %1345 = vperm.xlu0 %1344, %v1271
        %v1346 = vpop.permute.xlu0 %1345
        %1349 = vset.pattern.permute.xlu0 0
        %1350 = vperm.xlu0 %1349, %v1272
        %v1351 = vpop.permute.xlu0 %1350
        %v1385 = vunpack.c.l.b16 %v1201
        %v1386 = vunpack.c.h.b16 %v1201
        %v1387 = vunpack.c.l.b16 %v1202
        %v1388 = vunpack.c.l.b16 %v1203
        %v1389 = vunpack.c.h.b16 %v1203
        %v1390 = vunpack.c.l.b16 %v1204
        %v1391 = vunpack.c.l.b16 %v1205
        %v1392 = vunpack.c.h.b16 %v1205
        %v1393 = vunpack.c.l.b16 %v1206
        %v1394 = vunpack.c.l.b16 %v1207
        %v1395 = vunpack.c.h.b16 %v1207
        %v1396 = vunpack.c.l.b16 %v1208
        %v1397 = vunpack.c.l.b16 %v1209
        %v1398 = vunpack.c.h.b16 %v1209
        %v1399 = vunpack.c.l.b16 %v1210
        %v1400 = vunpack.c.l.b16 %v1211
        %v1401 = vunpack.c.h.b16 %v1211
        %v1402 = vunpack.c.l.b16 %v1212
        %v1403 = vunpack.c.l.b16 %v1213
        %v1404 = vunpack.c.h.b16 %v1213
        %v1405 = vunpack.c.l.b16 %v1214
        %v1406 = vunpack.c.l.b16 %v1215
        %v1407 = vunpack.c.h.b16 %v1215
        %v1408 = vunpack.c.l.b16 %v1216
        %v1409 = vunpack.c.l.b16 %v1217
        %v1410 = vunpack.c.h.b16 %v1217
        %v1411 = vunpack.c.l.b16 %v1218
        %v1412 = vunpack.c.l.b16 %v1219
        %v1413 = vunpack.c.h.b16 %v1219
        %v1414 = vunpack.c.l.b16 %v1220
        %v1415 = vunpack.c.l.b16 %v1221
        %v1416 = vunpack.c.h.b16 %v1221
        %v1417 = vunpack.c.l.b16 %v1222
        %v1418 = vunpack.c.l.b16 %v1223
        %v1419 = vunpack.c.h.b16 %v1223
        %v1420 = vunpack.c.l.b16 %v1224
        %v1421 = vunpack.c.l.b16 %v1225
        %v1422 = vunpack.c.h.b16 %v1225
        %v1423 = vunpack.c.l.b16 %v1226
        %v1424 = vunpack.c.l.b16 %v1227
        %v1425 = vunpack.c.h.b16 %v1227
        %v1426 = vunpack.c.l.b16 %v1228
        %v1427 = vunpack.c.l.b16 %v1229
        %v1428 = vunpack.c.h.b16 %v1229
        %v1429 = vunpack.c.l.b16 %v1230
        %v1430 = vunpack.c.l.b16 %v1231
        %v1431 = vunpack.c.h.b16 %v1231
        %v1432 = vunpack.c.l.b16 %v1232
        %v1433 = vpack.c.b16 %v1388, %v1385
        %v1434 = vpack.c.b16 %v1389, %v1386
        %v1435 = vpack.c.b16 %v1390, %v1387
        %v1436 = vpack.c.b16 %v1394, %v1391
        %v1437 = vpack.c.b16 %v1395, %v1392
        %v1438 = vpack.c.b16 %v1396, %v1393
        %v1439 = vpack.c.b16 %v1400, %v1397
        %v1440 = vpack.c.b16 %v1401, %v1398
        %v1441 = vpack.c.b16 %v1402, %v1399
        %v1442 = vpack.c.b16 %v1406, %v1403
        %v1443 = vpack.c.b16 %v1407, %v1404
        %v1444 = vpack.c.b16 %v1408, %v1405
        %v1445 = vpack.c.b16 %v1412, %v1409
        %v1446 = vpack.c.b16 %v1413, %v1410
        %v1447 = vpack.c.b16 %v1414, %v1411
        %v1448 = vpack.c.b16 %v1418, %v1415
        %v1449 = vpack.c.b16 %v1419, %v1416
        %v1450 = vpack.c.b16 %v1420, %v1417
        %v1451 = vpack.c.b16 %v1424, %v1421
        %v1452 = vpack.c.b16 %v1425, %v1422
        %v1453 = vpack.c.b16 %v1426, %v1423
        %v1454 = vpack.c.b16 %v1430, %v1427
        %v1455 = vpack.c.b16 %v1431, %v1428
        %v1456 = vpack.c.b16 %v1432, %v1429
        %1481 = vmatprep.subr.bf16.mxu0 0
        %1482 = vmatpush1.bf16.msra.mxu0 %v1233
        %1483 = vmatprep.subr.bf16.mxu0 0
        %1484 = vmatpush1.bf16.msra.mxu0 %v1234
        %1485 = vmatprep.subr.bf16.mxu0 0
        %1486 = vmatpush1.bf16.msra.mxu0 %v1235
        %1487 = vmatprep.subr.bf16.mxu0 0
        %1488 = vmatpush1.bf16.msra.mxu0 %v1236
        %1489 = vmatprep.subr.bf16.mxu0 0
        %1490 = vmatpush1.bf16.msra.mxu0 %v1237
        %1491 = vmatprep.subr.bf16.mxu0 0
        %1492 = vmatpush1.bf16.msra.mxu0 %v1238
        %1493 = vmatprep.subr.bf16.mxu0 0
        %1494 = vmatpush1.bf16.msra.mxu0 %v1239
        %1495 = vmatprep.subr.bf16.mxu0 0
        %1496 = vmatpush1.bf16.msra.mxu0 %v1240
        %1497 = vmatprep.subr.bf16.mxu0 0
        %1498 = vmatpush1.bf16.msra.mxu0 %v1241
        %1499 = vmatprep.subr.bf16.mxu0 0
        %1500 = vmatpush1.bf16.msra.mxu0 %v1242
        %1501 = vmatprep.subr.bf16.mxu0 0
        %1502 = vmatpush1.bf16.msra.mxu0 %v1243
        %1503 = vmatprep.subr.bf16.mxu0 0
        %1504 = vmatpush1.bf16.msra.mxu0 %v1244
        %1505 = vmatprep.subr.bf16.mxu0 0
        %1506 = vmatpush1.bf16.msra.mxu0 %v1245
        %1507 = vmatprep.subr.bf16.mxu0 0
        %1508 = vmatpush1.bf16.msra.mxu0 %v1246
        %1509 = vmatprep.subr.bf16.mxu0 0
        %1510 = vmatpush1.bf16.msra.mxu0 %v1247
        %1511 = vmatprep.subr.bf16.mxu0 0
        %1512 = vmatpush1.bf16.msra.mxu0 %v1248
        %1513 = vmatprep.mubr.bf16.mxu0 %v1434
        %1514 = vmatmul.mubr.bf16.gmra.mrb[0].mxu0 %v1433
        %v1515 = vpop.f32.mrb[0].mxu0
        %v1516 = vadd.f32 %v1276, %v1515
        %v1517 = vpop.f32.mrb[0].mxu0
        %v1518 = vpop.f32.mrb[0].mxu0
        %v1519 = vadd.f32 %v1281, %v1518
        %v1520 = vpop.f32.mrb[0].mxu0
        %1521 = vmatprep.mubr.bf16.mxu0 %v1437
        %1522 = vmatmul.mubr.bf16.gmra.mrb[0].mxu0 %v1436
        %v1523 = vpop.f32.mrb[0].mxu0
        %v1524 = vadd.f32 %v1286, %v1523
        %v1525 = vpop.f32.mrb[0].mxu0
        %v1526 = vpop.f32.mrb[0].mxu0
        %v1527 = vadd.f32 %v1291, %v1526
        %v1528 = vpop.f32.mrb[0].mxu0
        %1529 = vmatprep.mubr.bf16.mxu0 %v1440
        %1530 = vmatmul.mubr.bf16.gmra.mrb[0].mxu0 %v1439
        %v1531 = vpop.f32.mrb[0].mxu0
        %v1532 = vadd.f32 %v1296, %v1531
        %v1533 = vpop.f32.mrb[0].mxu0
        %v1534 = vpop.f32.mrb[0].mxu0
        %v1535 = vadd.f32 %v1301, %v1534
        %v1536 = vpop.f32.mrb[0].mxu0
        %1537 = vmatprep.mubr.bf16.mxu0 %v1443
        %1538 = vmatmul.mubr.bf16.gmra.mrb[0].mxu0 %v1442
        %v1539 = vpop.f32.mrb[0].mxu0
        %v1540 = vadd.f32 %v1306, %v1539
        %v1541 = vpop.f32.mrb[0].mxu0
        %v1542 = vpop.f32.mrb[0].mxu0
        %v1543 = vadd.f32 %v1311, %v1542
        %v1544 = vpop.f32.mrb[0].mxu0
        %1545 = vmatprep.mubr.bf16.mxu0 %v1446
        %1546 = vmatmul.mubr.bf16.gmra.mrb[0].mxu0 %v1445
        %v1547 = vpop.f32.mrb[0].mxu0
        %v1548 = vadd.f32 %v1316, %v1547
        %v1549 = vpop.f32.mrb[0].mxu0
        %v1550 = vpop.f32.mrb[0].mxu0
        %v1551 = vadd.f32 %v1321, %v1550
        %v1552 = vpop.f32.mrb[0].mxu0
        %1553 = vmatprep.mubr.bf16.mxu0 %v1449
        %1554 = vmatmul.mubr.bf16.gmra.mrb[0].mxu0 %v1448
        %v1555 = vpop.f32.mrb[0].mxu0
        %v1556 = vadd.f32 %v1326, %v1555
        %v1557 = vpop.f32.mrb[0].mxu0
        %v1558 = vpop.f32.mrb[0].mxu0
        %v1559 = vadd.f32 %v1331, %v1558
        %v1560 = vpop.f32.mrb[0].mxu0
        %1561 = vmatprep.mubr.bf16.mxu0 %v1452
        %1562 = vmatmul.mubr.bf16.gmra.mrb[0].mxu0 %v1451
        %v1563 = vpop.f32.mrb[0].mxu0
        %v1564 = vadd.f32 %v1336, %v1563
        %v1565 = vpop.f32.mrb[0].mxu0
        %v1566 = vpop.f32.mrb[0].mxu0
        %v1567 = vadd.f32 %v1341, %v1566
        %v1568 = vpop.f32.mrb[0].mxu0
        %1569 = vmatprep.mubr.bf16.mxu0 %v1455
        %1570 = vmatmul.mubr.bf16.gmra.mrb[0].mxu0 %v1454
        %v1571 = vpop.f32.mrb[0].mxu0
        %v1572 = vadd.f32 %v1346, %v1571
        %v1573 = vpop.f32.mrb[0].mxu0
        %v1574 = vpop.f32.mrb[0].mxu0
        %v1575 = vadd.f32 %v1351, %v1574
        %v1576 = vpop.f32.mrb[0].mxu0
        %1577 = vdwg.mxu0
        %1578 = vmatprep.subr.bf16.mxu0 0
        %1579 = vmatpush1.bf16.msra.mxu0 %v1249
        %1580 = vmatprep.subr.bf16.mxu0 0
        %1581 = vmatpush1.bf16.msra.mxu0 %v1250
        %1582 = vmatprep.subr.bf16.mxu0 0
        %1583 = vmatpush1.bf16.msra.mxu0 %v1251
        %1584 = vmatprep.subr.bf16.mxu0 0
        %1585 = vmatpush1.bf16.msra.mxu0 %v1252
        %1586 = vmatprep.subr.bf16.mxu0 0
        %1587 = vmatpush1.bf16.msra.mxu0 %v1253
        %1588 = vmatprep.subr.bf16.mxu0 0
        %1589 = vmatpush1.bf16.msra.mxu0 %v1254
        %1590 = vmatprep.subr.bf16.mxu0 0
        %1591 = vmatpush1.bf16.msra.mxu0 %v1255
        %1592 = vmatprep.subr.bf16.mxu0 0
        %1593 = vmatpush1.bf16.msra.mxu0 %v1256
        %1594 = vmatprep.subr.bf16.mxu0 0
        %1595 = vmatpush1.bf16.msra.mxu0 0
        %1596 = vmatprep.subr.bf16.mxu0 0
        %1597 = vmatpush1.bf16.msra.mxu0 0
        %1598 = vmatprep.subr.bf16.mxu0 0
        %1599 = vmatpush1.bf16.msra.mxu0 0
        %1600 = vmatprep.subr.bf16.mxu0 0
        %1601 = vmatpush1.bf16.msra.mxu0 0
        %1602 = vmatprep.subr.bf16.mxu0 0
        %1603 = vmatpush1.bf16.msra.mxu0 0
        %1604 = vmatprep.subr.bf16.mxu0 0
        %1605 = vmatpush1.bf16.msra.mxu0 0
        %1606 = vmatprep.subr.bf16.mxu0 0
        %1607 = vmatpush1.bf16.msra.mxu0 0
        %1608 = vmatprep.subr.bf16.mxu0 0
        %1609 = vmatpush1.bf16.msra.mxu0 0
        %1610 = vmatprep.mubr.bf16.mxu0 0
        %1611 = vmatmul.mubr.bf16.gmra.mrb[0].mxu0 %v1435
        %v1612 = vpop.f32.mrb[0].mxu0
        %v1613 = vadd.f32 %v1516, %v1612
        %v1614 = vpop.f32.mrb[0].mxu0
        %v1615 = vpop.f32.mrb[0].mxu0
        %v1616 = vadd.f32 %v1519, %v1615
        %v1617 = vpop.f32.mrb[0].mxu0
        %1618 = vmatprep.mubr.bf16.mxu0 0
        %1619 = vmatmul.mubr.bf16.gmra.mrb[0].mxu0 %v1438
        %v1620 = vpop.f32.mrb[0].mxu0
        %v1621 = vadd.f32 %v1524, %v1620
        %v1622 = vpop.f32.mrb[0].mxu0
        %v1623 = vpop.f32.mrb[0].mxu0
        %v1624 = vadd.f32 %v1527, %v1623
        %v1625 = vpop.f32.mrb[0].mxu0
        %1626 = vmatprep.mubr.bf16.mxu0 0
        %1627 = vmatmul.mubr.bf16.gmra.mrb[0].mxu0 %v1441
        %v1628 = vpop.f32.mrb[0].mxu0
        %v1629 = vadd.f32 %v1532, %v1628
        %v1630 = vpop.f32.mrb[0].mxu0
        %v1631 = vpop.f32.mrb[0].mxu0
        %v1632 = vadd.f32 %v1535, %v1631
        %v1633 = vpop.f32.mrb[0].mxu0
        %1634 = vmatprep.mubr.bf16.mxu0 0
        %1635 = vmatmul.mubr.bf16.gmra.mrb[0].mxu0 %v1444
        %v1636 = vpop.f32.mrb[0].mxu0
        %v1637 = vadd.f32 %v1540, %v1636
        %v1638 = vpop.f32.mrb[0].mxu0
        %v1639 = vpop.f32.mrb[0].mxu0
        %v1640 = vadd.f32 %v1543, %v1639
        %v1641 = vpop.f32.mrb[0].mxu0
        %1642 = vmatprep.mubr.bf16.mxu0 0
        %1643 = vmatmul.mubr.bf16.gmra.mrb[0].mxu0 %v1447
        %v1644 = vpop.f32.mrb[0].mxu0
        %v1645 = vadd.f32 %v1548, %v1644
        %v1646 = vpop.f32.mrb[0].mxu0
        %v1647 = vpop.f32.mrb[0].mxu0
        %v1648 = vadd.f32 %v1551, %v1647
        %v1649 = vpop.f32.mrb[0].mxu0
        %1650 = vmatprep.mubr.bf16.mxu0 0
        %1651 = vmatmul.mubr.bf16.gmra.mrb[0].mxu0 %v1450
        %v1652 = vpop.f32.mrb[0].mxu0
        %v1653 = vadd.f32 %v1556, %v1652
        %v1654 = vpop.f32.mrb[0].mxu0
        %v1655 = vpop.f32.mrb[0].mxu0
        %v1656 = vadd.f32 %v1559, %v1655
        %v1657 = vpop.f32.mrb[0].mxu0
        %1658 = vmatprep.mubr.bf16.mxu0 0
        %1659 = vmatmul.mubr.bf16.gmra.mrb[0].mxu0 %v1453
        %v1660 = vpop.f32.mrb[0].mxu0
        %v1661 = vadd.f32 %v1564, %v1660
        %v1662 = vpop.f32.mrb[0].mxu0
        %v1663 = vpop.f32.mrb[0].mxu0
        %v1664 = vadd.f32 %v1567, %v1663
        %v1665 = vpop.f32.mrb[0].mxu0
        %1666 = vmatprep.mubr.bf16.mxu0 0
        %1667 = vmatmul.mubr.bf16.gmra.mrb[0].mxu0 %v1456
        %v1668 = vpop.f32.mrb[0].mxu0
        %v1669 = vadd.f32 %v1572, %v1668
        %v1670 = vpop.f32.mrb[0].mxu0
        %v1671 = vpop.f32.mrb[0].mxu0
        %v1672 = vadd.f32 %v1575, %v1671
        %v1673 = vpop.f32.mrb[0].mxu0
        %1674 = vdwg.mxu0
        %v1675 = vmul.f32 %v1613, 2.0
        %v1676 = vmul.f32 %v1616, 2.0
        %v1677 = vmul.f32 %v1621, 2.0
        %v1678 = vmul.f32 %v1624, 2.0
        %v1679 = vmul.f32 %v1629, 2.0
        %v1680 = vmul.f32 %v1632, 2.0
        %v1681 = vmul.f32 %v1637, 2.0
        %v1682 = vmul.f32 %v1640, 2.0
        %v1683 = vmul.f32 %v1645, 2.0
        %v1684 = vmul.f32 %v1648, 2.0
        %v1685 = vmul.f32 %v1653, 2.0
        %v1686 = vmul.f32 %v1656, 2.0
        %v1687 = vmul.f32 %v1661, 2.0
        %v1688 = vmul.f32 %v1664, 2.0
        %v1689 = vmul.f32 %v1669, 2.0
        %v1690 = vmul.f32 %v1672, 2.0
        %v1691 = vtanh.pop %v1675
        %v1692 = vtanh.pop %v1676
        %v1693 = vtanh.pop %v1677
        %v1694 = vtanh.pop %v1678
        %v1695 = vtanh.pop %v1679
        %v1696 = vtanh.pop %v1680
        %v1697 = vtanh.pop %v1681
        %v1698 = vtanh.pop %v1682
        %v1699 = vtanh.pop %v1683
        %v1700 = vtanh.pop %v1684
        %v1701 = vtanh.pop %v1685
        %v1702 = vtanh.pop %v1686
        %v1703 = vtanh.pop %v1687
        %v1704 = vtanh.pop %v1688
        %v1705 = vtanh.pop %v1689
        %v1706 = vtanh.pop %v1690
        %v1707 = vadd.f32 %v1691, %v376
        %v1708 = vadd.f32 %v1692, %v377
        %v1709 = vadd.f32 %v1693, %v378
        %v1710 = vadd.f32 %v1694, %v379
        %v1711 = vadd.f32 %v1695, %v380
        %v1712 = vadd.f32 %v1696, %v381
        %v1713 = vadd.f32 %v1697, %v382
        %v1714 = vadd.f32 %v1698, %v383
        %v1715 = vadd.f32 %v1699, %v384
        %v1716 = vadd.f32 %v1700, %v385
        %v1717 = vadd.f32 %v1701, %v386
        %v1718 = vadd.f32 %v1702, %v387
        %v1719 = vadd.f32 %v1703, %v388
        %v1720 = vadd.f32 %v1704, %v389
        %v1721 = vadd.f32 %v1705, %v390
        %v1722 = vadd.f32 %v1706, %v391
        %v1723 = vmul.f32 %v1707, 2.0
        %v1724 = vmul.f32 %v1708, 2.0
        %v1725 = vmul.f32 %v1709, 2.0
        %v1726 = vmul.f32 %v1710, 2.0
        %v1727 = vmul.f32 %v1711, 2.0
        %v1728 = vmul.f32 %v1712, 2.0
        %v1729 = vmul.f32 %v1713, 2.0
        %v1730 = vmul.f32 %v1714, 2.0
        %v1731 = vmul.f32 %v1715, 2.0
        %v1732 = vmul.f32 %v1716, 2.0
        %v1733 = vmul.f32 %v1717, 2.0
        %v1734 = vmul.f32 %v1718, 2.0
        %v1735 = vmul.f32 %v1719, 2.0
        %v1736 = vmul.f32 %v1720, 2.0
        %v1737 = vmul.f32 %v1721, 2.0
        %v1738 = vmul.f32 %v1722, 2.0
        %v1739 = vtanh.pop %v1723
        %v1740 = vtanh.pop %v1724
        %v1741 = vtanh.pop %v1725
        %v1742 = vtanh.pop %v1726
        %v1743 = vtanh.pop %v1727
        %v1744 = vtanh.pop %v1728
        %v1745 = vtanh.pop %v1729
        %v1746 = vtanh.pop %v1730
        %v1747 = vtanh.pop %v1731
        %v1748 = vtanh.pop %v1732
        %v1749 = vtanh.pop %v1733
        %v1750 = vtanh.pop %v1734
        %v1751 = vtanh.pop %v1735
        %v1752 = vtanh.pop %v1736
        %v1753 = vtanh.pop %v1737
        %v1754 = vtanh.pop %v1738
        %v1755 = vpack.c.bf16 %v1740, %v1739
        %v1756 = vpack.c.bf16 %v1742, %v1741
        %v1757 = vpack.c.bf16 %v1744, %v1743
        %v1758 = vpack.c.bf16 %v1746, %v1745
        %v1759 = vpack.c.bf16 %v1748, %v1747
        %v1760 = vpack.c.bf16 %v1750, %v1749
        %v1761 = vpack.c.bf16 %v1752, %v1751
        %v1762 = vpack.c.bf16 %v1754, %v1753
        %v1763 = vld [vmem:[#allocation5] sm:$0xff]
        %v1764 = vld [vmem:[#allocation5 + $0x8] sm:$0xf]
        %v1765 = vld [vmem:[#allocation5 + $0xc] sm:$0xff]
        %v1766 = vld [vmem:[#allocation5 + $0x14] sm:$0xf]
        %v1767 = vld [vmem:[#allocation5 + $0x18] sm:$0xff]
        %v1768 = vld [vmem:[#allocation5 + $0x20] sm:$0xf]
        %v1769 = vld [vmem:[#allocation5 + $0x24] sm:$0xff]
        %v1770 = vld [vmem:[#allocation5 + $0x2c] sm:$0xf]
        %v1771 = vld [vmem:[#allocation5 + $0x30] sm:$0xff]
        %v1772 = vld [vmem:[#allocation5 + $0x38] sm:$0xf]
        %v1773 = vld [vmem:[#allocation5 + $0x3c] sm:$0xff]
        %v1774 = vld [vmem:[#allocation5 + $0x44] sm:$0xf]
        %v1775 = vld [vmem:[#allocation5 + $0x48] sm:$0xff]
        %v1776 = vld [vmem:[#allocation5 + $0x50] sm:$0xf]
        %v1777 = vld [vmem:[#allocation5 + $0x54] sm:$0xff]
        %v1778 = vld [vmem:[#allocation5 + $0x5c] sm:$0xf]
        %v1779 = vld [vmem:[#allocation5 + $0x60] sm:$0xff]
        %v1780 = vld [vmem:[#allocation5 + $0x68] sm:$0xf]
        %v1781 = vld [vmem:[#allocation5 + $0x6c] sm:$0xff]
        %v1782 = vld [vmem:[#allocation5 + $0x74] sm:$0xf]
        %v1783 = vld [vmem:[#allocation5 + $0x78] sm:$0xff]
        %v1784 = vld [vmem:[#allocation5 + $0x80] sm:$0xf]
        %v1785 = vld [vmem:[#allocation5 + $0x84] sm:$0xff]
        %v1786 = vld [vmem:[#allocation5 + $0x8c] sm:$0xf]
        %v1787 = vld [vmem:[#allocation5 + $0x90] sm:$0xff]
        %v1788 = vld [vmem:[#allocation5 + $0x98] sm:$0xf]
        %v1789 = vld [vmem:[#allocation5 + $0x9c] sm:$0xff]
        %v1790 = vld [vmem:[#allocation5 + $0xa4] sm:$0xf]
        %v1791 = vld [vmem:[#allocation5 + $0xa8] sm:$0xff]
        %v1792 = vld [vmem:[#allocation5 + $0xb0] sm:$0xf]
        %v1793 = vld [vmem:[#allocation5 + $0xb4] sm:$0xff]
        %v1794 = vld [vmem:[#allocation5 + $0xbc] sm:$0xf]
        %v1795 = vld [vmem:[%s6] sm:$0x7]
        %v1797 = vlaneseq
        %v1798 = vshrl.u32 %v1797, 7
        %v1799 = vsub.s32 0, %v1798
        %v1800 = vrot.slane %v1795, %v1799
        %v1801 = vlaneseq
        %v1802 = vshrl.u32 %v1801, 7
        %v1803 = vsub.s32 1, %v1802
        %v1804 = vrot.slane %v1795, %v1803
        %v1805 = vlaneseq
        %v1806 = vshrl.u32 %v1805, 7
        %v1807 = vsub.s32 2, %v1806
        %v1808 = vrot.slane %v1795, %v1807
        %v1844 = vunpack.c.l.b16 %v1763
        %v1845 = vunpack.c.h.b16 %v1763
        %v1846 = vunpack.c.l.b16 %v1764
        %v1847 = vunpack.c.l.b16 %v1765
        %v1848 = vunpack.c.h.b16 %v1765
        %v1849 = vunpack.c.l.b16 %v1766
        %v1850 = vunpack.c.l.b16 %v1767
        %v1851 = vunpack.c.h.b16 %v1767
        %v1852 = vunpack.c.l.b16 %v1768
        %v1853 = vunpack.c.l.b16 %v1769
        %v1854 = vunpack.c.h.b16 %v1769
        %v1855 = vunpack.c.l.b16 %v1770
        %v1856 = vunpack.c.l.b16 %v1771
        %v1857 = vunpack.c.h.b16 %v1771
        %v1858 = vunpack.c.l.b16 %v1772
        %v1859 = vunpack.c.l.b16 %v1773
        %v1860 = vunpack.c.h.b16 %v1773
        %v1861 = vunpack.c.l.b16 %v1774
        %v1862 = vunpack.c.l.b16 %v1775
        %v1863 = vunpack.c.h.b16 %v1775
        %v1864 = vunpack.c.l.b16 %v1776
        %v1865 = vunpack.c.l.b16 %v1777
        %v1866 = vunpack.c.h.b16 %v1777
        %v1867 = vunpack.c.l.b16 %v1778
        %v1868 = vunpack.c.l.b16 %v1779
        %v1869 = vunpack.c.h.b16 %v1779
        %v1870 = vunpack.c.l.b16 %v1780
        %v1871 = vunpack.c.l.b16 %v1781
        %v1872 = vunpack.c.h.b16 %v1781
        %v1873 = vunpack.c.l.b16 %v1782
        %v1874 = vunpack.c.l.b16 %v1783
        %v1875 = vunpack.c.h.b16 %v1783
        %v1876 = vunpack.c.l.b16 %v1784
        %v1877 = vunpack.c.l.b16 %v1785
        %v1878 = vunpack.c.h.b16 %v1785
        %v1879 = vunpack.c.l.b16 %v1786
        %v1880 = vunpack.c.l.b16 %v1787
        %v1881 = vunpack.c.h.b16 %v1787
        %v1882 = vunpack.c.l.b16 %v1788
        %v1883 = vunpack.c.l.b16 %v1789
        %v1884 = vunpack.c.h.b16 %v1789
        %v1885 = vunpack.c.l.b16 %v1790
        %v1886 = vunpack.c.l.b16 %v1791
        %v1887 = vunpack.c.h.b16 %v1791
        %v1888 = vunpack.c.l.b16 %v1792
        %v1889 = vunpack.c.l.b16 %v1793
        %v1890 = vunpack.c.h.b16 %v1793
        %v1891 = vunpack.c.l.b16 %v1794
        %v1892 = vpack.c.b16 %v1847, %v1844
        %v1893 = vpack.c.b16 %v1848, %v1845
        %v1894 = vpack.c.b16 %v1849, %v1846
        %v1895 = vpack.c.b16 %v1853, %v1850
        %v1896 = vpack.c.b16 %v1854, %v1851
        %v1897 = vpack.c.b16 %v1855, %v1852
        %v1898 = vpack.c.b16 %v1859, %v1856
        %v1899 = vpack.c.b16 %v1860, %v1857
        %v1900 = vpack.c.b16 %v1861, %v1858
        %v1901 = vpack.c.b16 %v1865, %v1862
        %v1902 = vpack.c.b16 %v1866, %v1863
        %v1903 = vpack.c.b16 %v1867, %v1864
        %v1904 = vpack.c.b16 %v1871, %v1868
        %v1905 = vpack.c.b16 %v1872, %v1869
        %v1906 = vpack.c.b16 %v1873, %v1870
        %v1907 = vpack.c.b16 %v1877, %v1874
        %v1908 = vpack.c.b16 %v1878, %v1875
        %v1909 = vpack.c.b16 %v1879, %v1876
        %v1910 = vpack.c.b16 %v1883, %v1880
        %v1911 = vpack.c.b16 %v1884, %v1881
        %v1912 = vpack.c.b16 %v1885, %v1882
        %v1913 = vpack.c.b16 %v1889, %v1886
        %v1914 = vpack.c.b16 %v1890, %v1887
        %v1915 = vpack.c.b16 %v1891, %v1888
        %1940 = vmatprep.subr.bf16.mxu0 %v1893
        %1941 = vmatpush1.bf16.msra.mxu0 %v1892
        %1942 = vmatprep.subr.bf16.mxu0 %v1896
        %1943 = vmatpush1.bf16.msra.mxu0 %v1895
        %1944 = vmatprep.subr.bf16.mxu0 %v1899
        %1945 = vmatpush1.bf16.msra.mxu0 %v1898
        %1946 = vmatprep.subr.bf16.mxu0 %v1902
        %1947 = vmatpush1.bf16.msra.mxu0 %v1901
        %1948 = vmatprep.subr.bf16.mxu0 %v1905
        %1949 = vmatpush1.bf16.msra.mxu0 %v1904
        %1950 = vmatprep.subr.bf16.mxu0 %v1908
        %1951 = vmatpush1.bf16.msra.mxu0 %v1907
        %1952 = vmatprep.subr.bf16.mxu0 %v1911
        %1953 = vmatpush1.bf16.msra.mxu0 %v1910
        %1954 = vmatprep.subr.bf16.mxu0 %v1914
        %1955 = vmatpush1.bf16.msra.mxu0 %v1913
        %1956 = vmatprep.subr.bf16.mxu0 0
        %1957 = vmatpush1.bf16.msra.mxu0 0
        %1958 = vmatprep.subr.bf16.mxu0 0
        %1959 = vmatpush1.bf16.msra.mxu0 0
        %1960 = vmatprep.subr.bf16.mxu0 0
        %1961 = vmatpush1.bf16.msra.mxu0 0
        %1962 = vmatprep.subr.bf16.mxu0 0
        %1963 = vmatpush1.bf16.msra.mxu0 0
        %1964 = vmatprep.subr.bf16.mxu0 0
        %1965 = vmatpush1.bf16.msra.mxu0 0
        %1966 = vmatprep.subr.bf16.mxu0 0
        %1967 = vmatpush1.bf16.msra.mxu0 0
        %1968 = vmatprep.subr.bf16.mxu0 0
        %1969 = vmatpush1.bf16.msra.mxu0 0
        %1970 = vmatprep.subr.bf16.mxu0 0
        %1971 = vmatpush1.bf16.msra.mxu0 0
        %1972 = vmatprep.mubr.bf16.mxu0 0
        %1973 = vmatmul.mubr.bf16.gmra.mrb[0].mxu0 %v1755
        %v1974 = vpop.f32.mrb[0].mxu0
        %v1975 = vadd.f32 %v1800, %v1974
        %v1976 = vpop.f32.mrb[0].mxu0
        %v1977 = vadd.f32 %v1804, %v1976
        %v1978 = vpop.f32.mrb[0].mxu0
        %v1979 = vadd.f32 %v1800, %v1978
        %v1980 = vpop.f32.mrb[0].mxu0
        %v1981 = vadd.f32 %v1804, %v1980
        %1982 = vmatprep.mubr.bf16.mxu0 0
        %1983 = vmatmul.mubr.bf16.gmra.mrb[0].mxu0 %v1756
        %v1984 = vpop.f32.mrb[0].mxu0
        %v1985 = vadd.f32 %v1800, %v1984
        %v1986 = vpop.f32.mrb[0].mxu0
        %v1987 = vadd.f32 %v1804, %v1986
        %v1988 = vpop.f32.mrb[0].mxu0
        %v1989 = vadd.f32 %v1800, %v1988
        %v1990 = vpop.f32.mrb[0].mxu0
        %v1991 = vadd.f32 %v1804, %v1990
        %1992 = vmatprep.mubr.bf16.mxu0 0
        %1993 = vmatmul.mubr.bf16.gmra.mrb[0].mxu0 %v1757
        %v1994 = vpop.f32.mrb[0].mxu0
        %v1995 = vadd.f32 %v1800, %v1994
        %v1996 = vpop.f32.mrb[0].mxu0
        %v1997 = vadd.f32 %v1804, %v1996
        %v1998 = vpop.f32.mrb[0].mxu0
        %v1999 = vadd.f32 %v1800, %v1998
        %v2000 = vpop.f32.mrb[0].mxu0
        %v2001 = vadd.f32 %v1804, %v2000
        %2002 = vmatprep.mubr.bf16.mxu0 0
        %2003 = vmatmul.mubr.bf16.gmra.mrb[0].mxu0 %v1758
        %v2004 = vpop.f32.mrb[0].mxu0
        %v2005 = vadd.f32 %v1800, %v2004
        %v2006 = vpop.f32.mrb[0].mxu0
        %v2007 = vadd.f32 %v1804, %v2006
        %v2008 = vpop.f32.mrb[0].mxu0
        %v2009 = vadd.f32 %v1800, %v2008
        %v2010 = vpop.f32.mrb[0].mxu0
        %v2011 = vadd.f32 %v1804, %v2010
        %2012 = vmatprep.mubr.bf16.mxu0 0
        %2013 = vmatmul.mubr.bf16.gmra.mrb[0].mxu0 %v1759
        %v2014 = vpop.f32.mrb[0].mxu0
        %v2015 = vadd.f32 %v1800, %v2014
        %v2016 = vpop.f32.mrb[0].mxu0
        %v2017 = vadd.f32 %v1804, %v2016
        %v2018 = vpop.f32.mrb[0].mxu0
        %v2019 = vadd.f32 %v1800, %v2018
        %v2020 = vpop.f32.mrb[0].mxu0
        %v2021 = vadd.f32 %v1804, %v2020
        %2022 = vmatprep.mubr.bf16.mxu0 0
        %2023 = vmatmul.mubr.bf16.gmra.mrb[0].mxu0 %v1760
        %v2024 = vpop.f32.mrb[0].mxu0
        %v2025 = vadd.f32 %v1800, %v2024
        %v2026 = vpop.f32.mrb[0].mxu0
        %v2027 = vadd.f32 %v1804, %v2026
        %v2028 = vpop.f32.mrb[0].mxu0
        %v2029 = vadd.f32 %v1800, %v2028
        %v2030 = vpop.f32.mrb[0].mxu0
        %v2031 = vadd.f32 %v1804, %v2030
        %2032 = vmatprep.mubr.bf16.mxu0 0
        %2033 = vmatmul.mubr.bf16.gmra.mrb[0].mxu0 %v1761
        %v2034 = vpop.f32.mrb[0].mxu0
        %v2035 = vadd.f32 %v1800, %v2034
        %v2036 = vpop.f32.mrb[0].mxu0
        %v2037 = vadd.f32 %v1804, %v2036
        %v2038 = vpop.f32.mrb[0].mxu0
        %v2039 = vadd.f32 %v1800, %v2038
        %v2040 = vpop.f32.mrb[0].mxu0
        %v2041 = vadd.f32 %v1804, %v2040
        %2042 = vmatprep.mubr.bf16.mxu0 0
        %2043 = vmatmul.mubr.bf16.gmra.mrb[0].mxu0 %v1762
        %v2044 = vpop.f32.mrb[0].mxu0
        %v2045 = vadd.f32 %v1800, %v2044
        %v2046 = vpop.f32.mrb[0].mxu0
        %v2047 = vadd.f32 %v1804, %v2046
        %v2048 = vpop.f32.mrb[0].mxu0
        %v2049 = vadd.f32 %v1800, %v2048
        %v2050 = vpop.f32.mrb[0].mxu0
        %v2051 = vadd.f32 %v1804, %v2050
        %2052 = vdwg.mxu0
        %2053 = vmatprep.subr.bf16.mxu0 0
        %2054 = vmatpush1.bf16.msra.mxu0 %v1894
        %2055 = vmatprep.subr.bf16.mxu0 0
        %2056 = vmatpush1.bf16.msra.mxu0 %v1897
        %2057 = vmatprep.subr.bf16.mxu0 0
        %2058 = vmatpush1.bf16.msra.mxu0 %v1900
        %2059 = vmatprep.subr.bf16.mxu0 0
        %2060 = vmatpush1.bf16.msra.mxu0 %v1903
        %2061 = vmatprep.subr.bf16.mxu0 0
        %2062 = vmatpush1.bf16.msra.mxu0 %v1906
        %2063 = vmatprep.subr.bf16.mxu0 0
        %2064 = vmatpush1.bf16.msra.mxu0 %v1909
        %2065 = vmatprep.subr.bf16.mxu0 0
        %2066 = vmatpush1.bf16.msra.mxu0 %v1912
        %2067 = vmatprep.subr.bf16.mxu0 0
        %2068 = vmatpush1.bf16.msra.mxu0 %v1915
        %2069 = vmatprep.subr.bf16.mxu0 0
        %2070 = vmatpush1.bf16.msra.mxu0 0
        %2071 = vmatprep.subr.bf16.mxu0 0
        %2072 = vmatpush1.bf16.msra.mxu0 0
        %2073 = vmatprep.subr.bf16.mxu0 0
        %2074 = vmatpush1.bf16.msra.mxu0 0
        %2075 = vmatprep.subr.bf16.mxu0 0
        %2076 = vmatpush1.bf16.msra.mxu0 0
        %2077 = vmatprep.subr.bf16.mxu0 0
        %2078 = vmatpush1.bf16.msra.mxu0 0
        %2079 = vmatprep.subr.bf16.mxu0 0
        %2080 = vmatpush1.bf16.msra.mxu0 0
        %2081 = vmatprep.subr.bf16.mxu0 0
        %2082 = vmatpush1.bf16.msra.mxu0 0
        %2083 = vmatprep.subr.bf16.mxu0 0
        %2084 = vmatpush1.bf16.msra.mxu0 0
        %2085 = vmatprep.mubr.bf16.mxu0 0
        %2086 = vmatmul.mubr.bf16.gmra.mrb[0].mxu0 %v1755
        %v2087 = vpop.f32.mrb[0].mxu0
        %v2088 = vadd.f32 %v1808, %v2087
        %v2089 = vpop.f32.mrb[0].mxu0
        %v2090 = vpop.f32.mrb[0].mxu0
        %v2091 = vadd.f32 %v1808, %v2090
        %v2092 = vpop.f32.mrb[0].mxu0
        %2093 = vmatprep.mubr.bf16.mxu0 0
        %2094 = vmatmul.mubr.bf16.gmra.mrb[0].mxu0 %v1756
        %v2095 = vpop.f32.mrb[0].mxu0
        %v2096 = vadd.f32 %v1808, %v2095
        %v2097 = vpop.f32.mrb[0].mxu0
        %v2098 = vpop.f32.mrb[0].mxu0
        %v2099 = vadd.f32 %v1808, %v2098
        %v2100 = vpop.f32.mrb[0].mxu0
        %2101 = vmatprep.mubr.bf16.mxu0 0
        %2102 = vmatmul.mubr.bf16.gmra.mrb[0].mxu0 %v1757
        %v2103 = vpop.f32.mrb[0].mxu0
        %v2104 = vadd.f32 %v1808, %v2103
        %v2105 = vpop.f32.mrb[0].mxu0
        %v2106 = vpop.f32.mrb[0].mxu0
        %v2107 = vadd.f32 %v1808, %v2106
        %v2108 = vpop.f32.mrb[0].mxu0
        %2109 = vmatprep.mubr.bf16.mxu0 0
        %2110 = vmatmul.mubr.bf16.gmra.mrb[0].mxu0 %v1758
        %v2111 = vpop.f32.mrb[0].mxu0
        %v2112 = vadd.f32 %v1808, %v2111
        %v2113 = vpop.f32.mrb[0].mxu0
        %v2114 = vpop.f32.mrb[0].mxu0
        %v2115 = vadd.f32 %v1808, %v2114
        %v2116 = vpop.f32.mrb[0].mxu0
        %2117 = vmatprep.mubr.bf16.mxu0 0
        %2118 = vmatmul.mubr.bf16.gmra.mrb[0].mxu0 %v1759
        %v2119 = vpop.f32.mrb[0].mxu0
        %v2120 = vadd.f32 %v1808, %v2119
        %v2121 = vpop.f32.mrb[0].mxu0
        %v2122 = vpop.f32.mrb[0].mxu0
        %v2123 = vadd.f32 %v1808, %v2122
        %v2124 = vpop.f32.mrb[0].mxu0
        %2125 = vmatprep.mubr.bf16.mxu0 0
        %2126 = vmatmul.mubr.bf16.gmra.mrb[0].mxu0 %v1760
        %v2127 = vpop.f32.mrb[0].mxu0
        %v2128 = vadd.f32 %v1808, %v2127
        %v2129 = vpop.f32.mrb[0].mxu0
        %v2130 = vpop.f32.mrb[0].mxu0
        %v2131 = vadd.f32 %v1808, %v2130
        %v2132 = vpop.f32.mrb[0].mxu0
        %2133 = vmatprep.mubr.bf16.mxu0 0
        %2134 = vmatmul.mubr.bf16.gmra.mrb[0].mxu0 %v1761
        %v2135 = vpop.f32.mrb[0].mxu0
        %v2136 = vadd.f32 %v1808, %v2135
        %v2137 = vpop.f32.mrb[0].mxu0
        %v2138 = vpop.f32.mrb[0].mxu0
        %v2139 = vadd.f32 %v1808, %v2138
        %v2140 = vpop.f32.mrb[0].mxu0
        %2141 = vmatprep.mubr.bf16.mxu0 0
        %2142 = vmatmul.mubr.bf16.gmra.mrb[0].mxu0 %v1762
        %v2143 = vpop.f32.mrb[0].mxu0
        %v2144 = vadd.f32 %v1808, %v2143
        %v2145 = vpop.f32.mrb[0].mxu0
        %v2146 = vpop.f32.mrb[0].mxu0
        %v2147 = vadd.f32 %v1808, %v2146
        %v2148 = vpop.f32.mrb[0].mxu0
        %2149 = vdwg.mxu0
        %v2150 = vmul.f32 %v1975, 2.0
        %v2151 = vmul.f32 %v1977, 2.0
        %v2152 = vmul.f32 %v2088, 2.0
        %v2153 = vmul.f32 %v1979, 2.0
        %v2154 = vmul.f32 %v1981, 2.0
        %v2155 = vmul.f32 %v2091, 2.0
        %v2156 = vmul.f32 %v1985, 2.0
        %v2157 = vmul.f32 %v1987, 2.0
        %v2158 = vmul.f32 %v2096, 2.0
        %v2159 = vmul.f32 %v1989, 2.0
        %v2160 = vmul.f32 %v1991, 2.0
        %v2161 = vmul.f32 %v2099, 2.0
        %v2162 = vmul.f32 %v1995, 2.0
        %v2163 = vmul.f32 %v1997, 2.0
        %v2164 = vmul.f32 %v2104, 2.0
        %v2165 = vmul.f32 %v1999, 2.0
        %v2166 = vmul.f32 %v2001, 2.0
        %v2167 = vmul.f32 %v2107, 2.0
        %v2168 = vmul.f32 %v2005, 2.0
        %v2169 = vmul.f32 %v2007, 2.0
        %v2170 = vmul.f32 %v2112, 2.0
        %v2171 = vmul.f32 %v2009, 2.0
        %v2172 = vmul.f32 %v2011, 2.0
        %v2173 = vmul.f32 %v2115, 2.0
        %v2174 = vmul.f32 %v2015, 2.0
        %v2175 = vmul.f32 %v2017, 2.0
        %v2176 = vmul.f32 %v2120, 2.0
        %v2177 = vmul.f32 %v2019, 2.0
        %v2178 = vmul.f32 %v2021, 2.0
        %v2179 = vmul.f32 %v2123, 2.0
        %v2180 = vmul.f32 %v2025, 2.0
        %v2181 = vmul.f32 %v2027, 2.0
        %v2182 = vmul.f32 %v2128, 2.0
        %v2183 = vmul.f32 %v2029, 2.0
        %v2184 = vmul.f32 %v2031, 2.0
        %v2185 = vmul.f32 %v2131, 2.0
        %v2186 = vmul.f32 %v2035, 2.0
        %v2187 = vmul.f32 %v2037, 2.0
        %v2188 = vmul.f32 %v2136, 2.0
        %v2189 = vmul.f32 %v2039, 2.0
        %v2190 = vmul.f32 %v2041, 2.0
        %v2191 = vmul.f32 %v2139, 2.0
        %v2192 = vmul.f32 %v2045, 2.0
        %v2193 = vmul.f32 %v2047, 2.0
        %v2194 = vmul.f32 %v2144, 2.0
        %v2195 = vmul.f32 %v2049, 2.0
        %v2196 = vmul.f32 %v2051, 2.0
        %v2197 = vmul.f32 %v2147, 2.0
        %v2198 = vtanh.pop %v2150
        %v2199 = vtanh.pop %v2151
        %v2200 = vtanh.pop %v2152
        %v2201 = vtanh.pop %v2153
        %v2202 = vtanh.pop %v2154
        %v2203 = vtanh.pop %v2155
        %v2204 = vtanh.pop %v2156
        %v2205 = vtanh.pop %v2157
        %v2206 = vtanh.pop %v2158
        %v2207 = vtanh.pop %v2159
        %v2208 = vtanh.pop %v2160
        %v2209 = vtanh.pop %v2161
        %v2210 = vtanh.pop %v2162
        %v2211 = vtanh.pop %v2163
        %v2212 = vtanh.pop %v2164
        %v2213 = vtanh.pop %v2165
        %v2214 = vtanh.pop %v2166
        %v2215 = vtanh.pop %v2167
        %v2216 = vtanh.pop %v2168
        %v2217 = vtanh.pop %v2169
        %v2218 = vtanh.pop %v2170
        %v2219 = vtanh.pop %v2171
        %v2220 = vtanh.pop %v2172
        %v2221 = vtanh.pop %v2173
        %v2222 = vtanh.pop %v2174
        %v2223 = vtanh.pop %v2175
        %v2224 = vtanh.pop %v2176
        %v2225 = vtanh.pop %v2177
        %v2226 = vtanh.pop %v2178
        %v2227 = vtanh.pop %v2179
        %v2228 = vtanh.pop %v2180
        %v2229 = vtanh.pop %v2181
        %v2230 = vtanh.pop %v2182
        %v2231 = vtanh.pop %v2183
        %v2232 = vtanh.pop %v2184
        %v2233 = vtanh.pop %v2185
        %v2234 = vtanh.pop %v2186
        %v2235 = vtanh.pop %v2187
        %v2236 = vtanh.pop %v2188
        %v2237 = vtanh.pop %v2189
        %v2238 = vtanh.pop %v2190
        %v2239 = vtanh.pop %v2191
        %v2240 = vtanh.pop %v2192
        %v2241 = vtanh.pop %v2193
        %v2242 = vtanh.pop %v2194
        %v2243 = vtanh.pop %v2195
        %v2244 = vtanh.pop %v2196
        %v2245 = vtanh.pop %v2197
        %v2246 = vpack.c.bf16 %v2201, %v2198
        %v2247 = vpack.c.bf16 %v2202, %v2199
        %v2248 = vpack.c.bf16 %v2203, %v2200
        %v2249 = vpack.c.bf16 %v2207, %v2204
        %v2250 = vpack.c.bf16 %v2208, %v2205
        %v2251 = vpack.c.bf16 %v2209, %v2206
        %v2252 = vpack.c.bf16 %v2213, %v2210
        %v2253 = vpack.c.bf16 %v2214, %v2211
        %v2254 = vpack.c.bf16 %v2215, %v2212
        %v2255 = vpack.c.bf16 %v2219, %v2216
        %v2256 = vpack.c.bf16 %v2220, %v2217
        %v2257 = vpack.c.bf16 %v2221, %v2218
        %v2258 = vpack.c.bf16 %v2225, %v2222
        %v2259 = vpack.c.bf16 %v2226, %v2223
        %v2260 = vpack.c.bf16 %v2227, %v2224
        %v2261 = vpack.c.bf16 %v2231, %v2228
        %v2262 = vpack.c.bf16 %v2232, %v2229
        %v2263 = vpack.c.bf16 %v2233, %v2230
        %v2264 = vpack.c.bf16 %v2237, %v2234
        %v2265 = vpack.c.bf16 %v2238, %v2235
        %v2266 = vpack.c.bf16 %v2239, %v2236
        %v2267 = vpack.c.bf16 %v2243, %v2240
        %v2268 = vpack.c.bf16 %v2244, %v2241
        %v2269 = vpack.c.bf16 %v2245, %v2242
        %v2270 = vld [vmem:[#allocation7] sm:$0xf]
        %v2271 = vld [vmem:[#allocation7 + $0x4] sm:$0xf]
        %v2272 = vld [vmem:[#allocation7 + $0x8] sm:$0xf]
        %v2273 = vld [vmem:[#allocation7 + $0xc] sm:$0xf]
        %v2274 = vld [vmem:[#allocation7 + $0x10] sm:$0xf]
        %v2275 = vld [vmem:[#allocation7 + $0x14] sm:$0xf]
        %v2276 = vld [vmem:[#allocation7 + $0x18] sm:$0xf]
        %v2277 = vld [vmem:[#allocation7 + $0x1c] sm:$0xf]
        %v2278 = vld [vmem:[#allocation7 + $0x20] sm:$0xf]
        %v2279 = vld [vmem:[#allocation7 + $0x24] sm:$0xf]
        %v2280 = vld [vmem:[#allocation7 + $0x28] sm:$0xf]
        %v2281 = vld [vmem:[#allocation7 + $0x2c] sm:$0xf]
        %v2282 = vld [vmem:[#allocation7 + $0x30] sm:$0xf]
        %v2283 = vld [vmem:[#allocation7 + $0x34] sm:$0xf]
        %v2284 = vld [vmem:[#allocation7 + $0x38] sm:$0xf]
        %v2285 = vld [vmem:[#allocation7 + $0x3c] sm:$0xf]
        %v2286 = vld [vmem:[#allocation7 + $0x40] sm:$0xf]
        %v2287 = vld [vmem:[#allocation7 + $0x44] sm:$0xf]
        %v2288 = vld [vmem:[#allocation7 + $0x48] sm:$0xf]
        %v2289 = vld [vmem:[#allocation7 + $0x4c] sm:$0xf]
        %v2290 = vld [vmem:[#allocation7 + $0x50] sm:$0xf]
        %v2291 = vld [vmem:[#allocation7 + $0x54] sm:$0xf]
        %v2292 = vld [vmem:[#allocation7 + $0x58] sm:$0xf]
        %v2293 = vld [vmem:[#allocation7 + $0x5c] sm:$0xf]
        %v2294 = vld [vmem:[#allocation7 + $0x60] sm:$0xf]
        %v2295 = vld [vmem:[#allocation7 + $0x64] sm:$0xf]
        %v2296 = vld [vmem:[#allocation7 + $0x68] sm:$0xf]
        %v2297 = vld [vmem:[#allocation7 + $0x6c] sm:$0xf]
        %v2298 = vld [vmem:[#allocation7 + $0x70] sm:$0xf]
        %v2299 = vld [vmem:[#allocation7 + $0x74] sm:$0xf]
        %v2300 = vld [vmem:[#allocation7 + $0x78] sm:$0xf]
        %v2301 = vld [vmem:[#allocation7 + $0x7c] sm:$0xf]
        %v2302 = vld [vmem:[#allocation7 + $0x80] sm:$0xf]
        %v2303 = vld [vmem:[#allocation7 + $0x84] sm:$0xf]
        %v2304 = vld [vmem:[#allocation7 + $0x88] sm:$0xf]
        %v2305 = vld [vmem:[#allocation7 + $0x8c] sm:$0xf]
        %v2306 = vld [vmem:[#allocation7 + $0x90] sm:$0xf]
        %v2307 = vld [vmem:[#allocation7 + $0x94] sm:$0xf]
        %v2308 = vld [vmem:[#allocation7 + $0x98] sm:$0xf]
        %v2309 = vld [vmem:[#allocation7 + $0x9c] sm:$0xf]
        %v2310 = vld [vmem:[#allocation7 + $0xa0] sm:$0xf]
        %v2311 = vld [vmem:[#allocation7 + $0xa4] sm:$0xf]
        %v2312 = vld [vmem:[#allocation7 + $0xa8] sm:$0xf]
        %v2313 = vld [vmem:[#allocation7 + $0xac] sm:$0xf]
        %v2314 = vld [vmem:[#allocation7 + $0xb0] sm:$0xf]
        %v2315 = vld [vmem:[#allocation7 + $0xb4] sm:$0xf]
        %v2316 = vld [vmem:[#allocation7 + $0xb8] sm:$0xf]
        %v2317 = vld [vmem:[#allocation7 + $0xbc] sm:$0xf]
        %v2318 = vld [vmem:[%s8] sm:$0x1]
        %v2320 = vlaneseq
        %v2321 = vshrl.u32 %v2320, 7
        %v2322 = vsub.s32 0, %v2321
        %v2323 = vrot.slane %v2318, %v2322
        %v2373 = vunpack.c.l.b16 %v2270
        %v2374 = vunpack.c.l.b16 %v2271
        %v2375 = vunpack.c.l.b16 %v2272
        %v2376 = vunpack.c.l.b16 %v2273
        %v2377 = vunpack.c.l.b16 %v2274
        %v2378 = vunpack.c.l.b16 %v2275
        %v2379 = vunpack.c.l.b16 %v2276
        %v2380 = vunpack.c.l.b16 %v2277
        %v2381 = vunpack.c.l.b16 %v2278
        %v2382 = vunpack.c.l.b16 %v2279
        %v2383 = vunpack.c.l.b16 %v2280
        %v2384 = vunpack.c.l.b16 %v2281
        %v2385 = vunpack.c.l.b16 %v2282
        %v2386 = vunpack.c.l.b16 %v2283
        %v2387 = vunpack.c.l.b16 %v2284
        %v2388 = vunpack.c.l.b16 %v2285
        %v2389 = vunpack.c.l.b16 %v2286
        %v2390 = vunpack.c.l.b16 %v2287
        %v2391 = vunpack.c.l.b16 %v2288
        %v2392 = vunpack.c.l.b16 %v2289
        %v2393 = vunpack.c.l.b16 %v2290
        %v2394 = vunpack.c.l.b16 %v2291
        %v2395 = vunpack.c.l.b16 %v2292
        %v2396 = vunpack.c.l.b16 %v2293
        %v2397 = vunpack.c.l.b16 %v2294
        %v2398 = vunpack.c.l.b16 %v2295
        %v2399 = vunpack.c.l.b16 %v2296
        %v2400 = vunpack.c.l.b16 %v2297
        %v2401 = vunpack.c.l.b16 %v2298
        %v2402 = vunpack.c.l.b16 %v2299
        %v2403 = vunpack.c.l.b16 %v2300
        %v2404 = vunpack.c.l.b16 %v2301
        %v2405 = vunpack.c.l.b16 %v2302
        %v2406 = vunpack.c.l.b16 %v2303
        %v2407 = vunpack.c.l.b16 %v2304
        %v2408 = vunpack.c.l.b16 %v2305
        %v2409 = vunpack.c.l.b16 %v2306
        %v2410 = vunpack.c.l.b16 %v2307
        %v2411 = vunpack.c.l.b16 %v2308
        %v2412 = vunpack.c.l.b16 %v2309
        %v2413 = vunpack.c.l.b16 %v2310
        %v2414 = vunpack.c.l.b16 %v2311
        %v2415 = vunpack.c.l.b16 %v2312
        %v2416 = vunpack.c.l.b16 %v2313
        %v2417 = vunpack.c.l.b16 %v2314
        %v2418 = vunpack.c.l.b16 %v2315
        %v2419 = vunpack.c.l.b16 %v2316
        %v2420 = vunpack.c.l.b16 %v2317
        %v2421 = vpack.c.b16 %v2374, %v2373
        %v2422 = vpack.c.b16 %v2376, %v2375
        %v2423 = vpack.c.b16 %v2378, %v2377
        %v2424 = vpack.c.b16 %v2380, %v2379
        %v2425 = vpack.c.b16 %v2382, %v2381
        %v2426 = vpack.c.b16 %v2384, %v2383
        %v2427 = vpack.c.b16 %v2386, %v2385
        %v2428 = vpack.c.b16 %v2388, %v2387
        %v2429 = vpack.c.b16 %v2390, %v2389
        %v2430 = vpack.c.b16 %v2392, %v2391
        %v2431 = vpack.c.b16 %v2394, %v2393
        %v2432 = vpack.c.b16 %v2396, %v2395
        %v2433 = vpack.c.b16 %v2398, %v2397
        %v2434 = vpack.c.b16 %v2400, %v2399
        %v2435 = vpack.c.b16 %v2402, %v2401
        %v2436 = vpack.c.b16 %v2404, %v2403
        %v2437 = vpack.c.b16 %v2406, %v2405
        %v2438 = vpack.c.b16 %v2408, %v2407
        %v2439 = vpack.c.b16 %v2410, %v2409
        %v2440 = vpack.c.b16 %v2412, %v2411
        %v2441 = vpack.c.b16 %v2414, %v2413
        %v2442 = vpack.c.b16 %v2416, %v2415
        %v2443 = vpack.c.b16 %v2418, %v2417
        %v2444 = vpack.c.b16 %v2420, %v2419
        %2469 = vmatprep.subr.bf16.mxu0 0
        %2470 = vmatpush1.bf16.msra.mxu0 %v2421
        %2471 = vmatprep.subr.bf16.mxu0 0
        %2472 = vmatpush1.bf16.msra.mxu0 %v2422
        %2473 = vmatprep.subr.bf16.mxu0 0
        %2474 = vmatpush1.bf16.msra.mxu0 %v2423
        %2475 = vmatprep.subr.bf16.mxu0 0
        %2476 = vmatpush1.bf16.msra.mxu0 %v2424
        %2477 = vmatprep.subr.bf16.mxu0 0
        %2478 = vmatpush1.bf16.msra.mxu0 %v2425
        %2479 = vmatprep.subr.bf16.mxu0 0
        %2480 = vmatpush1.bf16.msra.mxu0 %v2426
        %2481 = vmatprep.subr.bf16.mxu0 0
        %2482 = vmatpush1.bf16.msra.mxu0 %v2427
        %2483 = vmatprep.subr.bf16.mxu0 0
        %2484 = vmatpush1.bf16.msra.mxu0 %v2428
        %2485 = vmatprep.subr.bf16.mxu0 0
        %2486 = vmatpush1.bf16.msra.mxu0 %v2429
        %2487 = vmatprep.subr.bf16.mxu0 0
        %2488 = vmatpush1.bf16.msra.mxu0 %v2430
        %2489 = vmatprep.subr.bf16.mxu0 0
        %2490 = vmatpush1.bf16.msra.mxu0 %v2431
        %2491 = vmatprep.subr.bf16.mxu0 0
        %2492 = vmatpush1.bf16.msra.mxu0 %v2432
        %2493 = vmatprep.subr.bf16.mxu0 0
        %2494 = vmatpush1.bf16.msra.mxu0 %v2433
        %2495 = vmatprep.subr.bf16.mxu0 0
        %2496 = vmatpush1.bf16.msra.mxu0 %v2434
        %2497 = vmatprep.subr.bf16.mxu0 0
        %2498 = vmatpush1.bf16.msra.mxu0 %v2435
        %2499 = vmatprep.subr.bf16.mxu0 0
        %2500 = vmatpush1.bf16.msra.mxu0 %v2436
        %2501 = vmatprep.mubr.bf16.mxu0 %v2247
        %2502 = vmatmul.mubr.bf16.gmra.mrb[0].mxu0 %v2246
        %v2503 = vpop.f32.mrb[0].mxu0
        %v2504 = vadd.f32 %v2323, %v2503
        %v2505 = vpop.f32.mrb[0].mxu0
        %v2506 = vpop.f32.mrb[0].mxu0
        %v2507 = vadd.f32 %v2323, %v2506
        %v2508 = vpop.f32.mrb[0].mxu0
        %2509 = vmatprep.mubr.bf16.mxu0 %v2250
        %2510 = vmatmul.mubr.bf16.gmra.mrb[0].mxu0 %v2249
        %v2511 = vpop.f32.mrb[0].mxu0
        %v2512 = vadd.f32 %v2323, %v2511
        %v2513 = vpop.f32.mrb[0].mxu0
        %v2514 = vpop.f32.mrb[0].mxu0
        %v2515 = vadd.f32 %v2323, %v2514
        %v2516 = vpop.f32.mrb[0].mxu0
        %2517 = vmatprep.mubr.bf16.mxu0 %v2253
        %2518 = vmatmul.mubr.bf16.gmra.mrb[0].mxu0 %v2252
        %v2519 = vpop.f32.mrb[0].mxu0
        %v2520 = vadd.f32 %v2323, %v2519
        %v2521 = vpop.f32.mrb[0].mxu0
        %v2522 = vpop.f32.mrb[0].mxu0
        %v2523 = vadd.f32 %v2323, %v2522
        %v2524 = vpop.f32.mrb[0].mxu0
        %2525 = vmatprep.mubr.bf16.mxu0 %v2256
        %2526 = vmatmul.mubr.bf16.gmra.mrb[0].mxu0 %v2255
        %v2527 = vpop.f32.mrb[0].mxu0
        %v2528 = vadd.f32 %v2323, %v2527
        %v2529 = vpop.f32.mrb[0].mxu0
        %v2530 = vpop.f32.mrb[0].mxu0
        %v2531 = vadd.f32 %v2323, %v2530
        %v2532 = vpop.f32.mrb[0].mxu0
        %2533 = vmatprep.mubr.bf16.mxu0 %v2259
        %2534 = vmatmul.mubr.bf16.gmra.mrb[0].mxu0 %v2258
        %v2535 = vpop.f32.mrb[0].mxu0
        %v2536 = vadd.f32 %v2323, %v2535
        %v2537 = vpop.f32.mrb[0].mxu0
        %v2538 = vpop.f32.mrb[0].mxu0
        %v2539 = vadd.f32 %v2323, %v2538
        %v2540 = vpop.f32.mrb[0].mxu0
        %2541 = vmatprep.mubr.bf16.mxu0 %v2262
        %2542 = vmatmul.mubr.bf16.gmra.mrb[0].mxu0 %v2261
        %v2543 = vpop.f32.mrb[0].mxu0
        %v2544 = vadd.f32 %v2323, %v2543
        %v2545 = vpop.f32.mrb[0].mxu0
        %v2546 = vpop.f32.mrb[0].mxu0
        %v2547 = vadd.f32 %v2323, %v2546
        %v2548 = vpop.f32.mrb[0].mxu0
        %2549 = vmatprep.mubr.bf16.mxu0 %v2265
        %2550 = vmatmul.mubr.bf16.gmra.mrb[0].mxu0 %v2264
        %v2551 = vpop.f32.mrb[0].mxu0
        %v2552 = vadd.f32 %v2323, %v2551
        %v2553 = vpop.f32.mrb[0].mxu0
        %v2554 = vpop.f32.mrb[0].mxu0
        %v2555 = vadd.f32 %v2323, %v2554
        %v2556 = vpop.f32.mrb[0].mxu0
        %2557 = vmatprep.mubr.bf16.mxu0 %v2268
        %2558 = vmatmul.mubr.bf16.gmra.mrb[0].mxu0 %v2267
        %v2559 = vpop.f32.mrb[0].mxu0
        %v2560 = vadd.f32 %v2323, %v2559
        %v2561 = vpop.f32.mrb[0].mxu0
        %v2562 = vpop.f32.mrb[0].mxu0
        %v2563 = vadd.f32 %v2323, %v2562
        %v2564 = vpop.f32.mrb[0].mxu0
        %2565 = vdwg.mxu0
        %2566 = vmatprep.subr.bf16.mxu0 0
        %2567 = vmatpush1.bf16.msra.mxu0 %v2437
        %2568 = vmatprep.subr.bf16.mxu0 0
        %2569 = vmatpush1.bf16.msra.mxu0 %v2438
        %2570 = vmatprep.subr.bf16.mxu0 0
        %2571 = vmatpush1.bf16.msra.mxu0 %v2439
        %2572 = vmatprep.subr.bf16.mxu0 0
        %2573 = vmatpush1.bf16.msra.mxu0 %v2440
        %2574 = vmatprep.subr.bf16.mxu0 0
        %2575 = vmatpush1.bf16.msra.mxu0 %v2441
        %2576 = vmatprep.subr.bf16.mxu0 0
        %2577 = vmatpush1.bf16.msra.mxu0 %v2442
        %2578 = vmatprep.subr.bf16.mxu0 0
        %2579 = vmatpush1.bf16.msra.mxu0 %v2443
        %2580 = vmatprep.subr.bf16.mxu0 0
        %2581 = vmatpush1.bf16.msra.mxu0 %v2444
        %2582 = vmatprep.subr.bf16.mxu0 0
        %2583 = vmatpush1.bf16.msra.mxu0 0
        %2584 = vmatprep.subr.bf16.mxu0 0
        %2585 = vmatpush1.bf16.msra.mxu0 0
        %2586 = vmatprep.subr.bf16.mxu0 0
        %2587 = vmatpush1.bf16.msra.mxu0 0
        %2588 = vmatprep.subr.bf16.mxu0 0
        %2589 = vmatpush1.bf16.msra.mxu0 0
        %2590 = vmatprep.subr.bf16.mxu0 0
        %2591 = vmatpush1.bf16.msra.mxu0 0
        %2592 = vmatprep.subr.bf16.mxu0 0
        %2593 = vmatpush1.bf16.msra.mxu0 0
        %2594 = vmatprep.subr.bf16.mxu0 0
        %2595 = vmatpush1.bf16.msra.mxu0 0
        %2596 = vmatprep.subr.bf16.mxu0 0
        %2597 = vmatpush1.bf16.msra.mxu0 0
        %2598 = vmatprep.mubr.bf16.mxu0 0
        %2599 = vmatmul.mubr.bf16.gmra.mrb[0].mxu0 %v2248
        %v2600 = vpop.f32.mrb[0].mxu0
        %v2601 = vadd.f32 %v2504, %v2600
        %v2602 = vpop.f32.mrb[0].mxu0
        %v2603 = vpop.f32.mrb[0].mxu0
        %v2604 = vadd.f32 %v2507, %v2603
        %v2605 = vpop.f32.mrb[0].mxu0
        %2606 = vmatprep.mubr.bf16.mxu0 0
        %2607 = vmatmul.mubr.bf16.gmra.mrb[0].mxu0 %v2251
        %v2608 = vpop.f32.mrb[0].mxu0
        %v2609 = vadd.f32 %v2512, %v2608
        %v2610 = vpop.f32.mrb[0].mxu0
        %v2611 = vpop.f32.mrb[0].mxu0
        %v2612 = vadd.f32 %v2515, %v2611
        %v2613 = vpop.f32.mrb[0].mxu0
        %2614 = vmatprep.mubr.bf16.mxu0 0
        %2615 = vmatmul.mubr.bf16.gmra.mrb[0].mxu0 %v2254
        %v2616 = vpop.f32.mrb[0].mxu0
        %v2617 = vadd.f32 %v2520, %v2616
        %v2618 = vpop.f32.mrb[0].mxu0
        %v2619 = vpop.f32.mrb[0].mxu0
        %v2620 = vadd.f32 %v2523, %v2619
        %v2621 = vpop.f32.mrb[0].mxu0
        %2622 = vmatprep.mubr.bf16.mxu0 0
        %2623 = vmatmul.mubr.bf16.gmra.mrb[0].mxu0 %v2257
        %v2624 = vpop.f32.mrb[0].mxu0
        %v2625 = vadd.f32 %v2528, %v2624
        %v2626 = vpop.f32.mrb[0].mxu0
        %v2627 = vpop.f32.mrb[0].mxu0
        %v2628 = vadd.f32 %v2531, %v2627
        %v2629 = vpop.f32.mrb[0].mxu0
        %2630 = vmatprep.mubr.bf16.mxu0 0
        %2631 = vmatmul.mubr.bf16.gmra.mrb[0].mxu0 %v2260
        %v2632 = vpop.f32.mrb[0].mxu0
        %v2633 = vadd.f32 %v2536, %v2632
        %v2634 = vpop.f32.mrb[0].mxu0
        %v2635 = vpop.f32.mrb[0].mxu0
        %v2636 = vadd.f32 %v2539, %v2635
        %v2637 = vpop.f32.mrb[0].mxu0
        %2638 = vmatprep.mubr.bf16.mxu0 0
        %2639 = vmatmul.mubr.bf16.gmra.mrb[0].mxu0 %v2263
        %v2640 = vpop.f32.mrb[0].mxu0
        %v2641 = vadd.f32 %v2544, %v2640
        %v2642 = vpop.f32.mrb[0].mxu0
        %v2643 = vpop.f32.mrb[0].mxu0
        %v2644 = vadd.f32 %v2547, %v2643
        %v2645 = vpop.f32.mrb[0].mxu0
        %2646 = vmatprep.mubr.bf16.mxu0 0
        %2647 = vmatmul.mubr.bf16.gmra.mrb[0].mxu0 %v2266
        %v2648 = vpop.f32.mrb[0].mxu0
        %v2649 = vadd.f32 %v2552, %v2648
        %v2650 = vpop.f32.mrb[0].mxu0
        %v2651 = vpop.f32.mrb[0].mxu0
        %v2652 = vadd.f32 %v2555, %v2651
        %v2653 = vpop.f32.mrb[0].mxu0
        %2654 = vmatprep.mubr.bf16.mxu0 0
        %2655 = vmatmul.mubr.bf16.gmra.mrb[0].mxu0 %v2269
        %v2656 = vpop.f32.mrb[0].mxu0
        %v2657 = vadd.f32 %v2560, %v2656
        %v2658 = vpop.f32.mrb[0].mxu0
        %v2659 = vpop.f32.mrb[0].mxu0
        %v2660 = vadd.f32 %v2563, %v2659
        %v2661 = vpop.f32.mrb[0].mxu0
        %2662 = vdwg.mxu0
        %v2663 = vadd.f32 %v2601, %v1739
        %v2664 = vadd.f32 %v2604, %v1740
        %v2665 = vadd.f32 %v2609, %v1741
        %v2666 = vadd.f32 %v2612, %v1742
        %v2667 = vadd.f32 %v2617, %v1743
        %v2668 = vadd.f32 %v2620, %v1744
        %v2669 = vadd.f32 %v2625, %v1745
        %v2670 = vadd.f32 %v2628, %v1746
        %v2671 = vadd.f32 %v2633, %v1747
        %v2672 = vadd.f32 %v2636, %v1748
        %v2673 = vadd.f32 %v2641, %v1749
        %v2674 = vadd.f32 %v2644, %v1750
        %v2675 = vadd.f32 %v2649, %v1751
        %v2676 = vadd.f32 %v2652, %v1752
        %v2677 = vadd.f32 %v2657, %v1753
        %v2678 = vadd.f32 %v2660, %v1754
        %v2679 = vmul.f32 %v2663, 2.0
        %v2680 = vmul.f32 %v2664, 2.0
        %v2681 = vmul.f32 %v2665, 2.0
        %v2682 = vmul.f32 %v2666, 2.0
        %v2683 = vmul.f32 %v2667, 2.0
        %v2684 = vmul.f32 %v2668, 2.0
        %v2685 = vmul.f32 %v2669, 2.0
        %v2686 = vmul.f32 %v2670, 2.0
        %v2687 = vmul.f32 %v2671, 2.0
        %v2688 = vmul.f32 %v2672, 2.0
        %v2689 = vmul.f32 %v2673, 2.0
        %v2690 = vmul.f32 %v2674, 2.0
        %v2691 = vmul.f32 %v2675, 2.0
        %v2692 = vmul.f32 %v2676, 2.0
        %v2693 = vmul.f32 %v2677, 2.0
        %v2694 = vmul.f32 %v2678, 2.0
        %v2695 = vtanh.pop %v2679
        %v2696 = vtanh.pop %v2680
        %v2697 = vtanh.pop %v2681
        %v2698 = vtanh.pop %v2682
        %v2699 = vtanh.pop %v2683
        %v2700 = vtanh.pop %v2684
        %v2701 = vtanh.pop %v2685
        %v2702 = vtanh.pop %v2686
        %v2703 = vtanh.pop %v2687
        %v2704 = vtanh.pop %v2688
        %v2705 = vtanh.pop %v2689
        %v2706 = vtanh.pop %v2690
        %v2707 = vtanh.pop %v2691
        %v2708 = vtanh.pop %v2692
        %v2709 = vtanh.pop %v2693
        %v2710 = vtanh.pop %v2694
        %2711 = vst [vmem:[%s369] sm:$0xff] %v2695
        %2712 = vst [vmem:[%s369 + $0x8] sm:$0xff] %v2696
        %2713 = vst [vmem:[%s369 + $0x10] sm:$0xff] %v2697
        %2714 = vst [vmem:[%s369 + $0x18] sm:$0xff] %v2698
        %2715 = vst [vmem:[%s369 + $0x20] sm:$0xff] %v2699
        %2716 = vst [vmem:[%s369 + $0x28] sm:$0xff] %v2700
        %2717 = vst [vmem:[%s369 + $0x30] sm:$0xff] %v2701
        %2718 = vst [vmem:[%s369 + $0x38] sm:$0xff] %v2702
        %2719 = vst [vmem:[%s369 + $0x40] sm:$0xff] %v2703
        %2720 = vst [vmem:[%s369 + $0x48] sm:$0xff] %v2704
        %2721 = vst [vmem:[%s369 + $0x50] sm:$0xff] %v2705
        %2722 = vst [vmem:[%s369 + $0x58] sm:$0xff] %v2706
        %2723 = vst [vmem:[%s369 + $0x60] sm:$0xff] %v2707
        %2724 = vst [vmem:[%s369 + $0x68] sm:$0xff] %v2708
        %2725 = vst [vmem:[%s369 + $0x70] sm:$0xff] %v2709
        %2726 = vst [vmem:[%s369 + $0x78] sm:$0xff] %v2710
        %s2727 = sand.u32 %s227, 1
        %s2728 = scalar_lea.sflag [#allocation4], %s2727
        %s2729 = sand.u32 %s227, 1
        %s2730 = smul.addr %s2729, 128
        %s2731 = scalar_lea.vmem [#allocation8], %s2730
        // Predicated region
        $region69: #{tpu_custom_call.1} parent=55 // pred_check
          %p2732 = pneg %p237
        $region70: #{tpu_custom_call.1} parent=55 // pred_check_branch
          %2734 = sbr.rel (%p2732) target = $region72
        $region71: #{tpu_custom_call.1} parent=55 // pred_region
          %s2736 = ssub.s32 2048, 2048
          %2737 = vsyncadd %s2728, %s2736
          %s2738 = smul.addr %s25, 16
          %s2739 = smul.addr %s2738, 128
          %s2740 = scalar_lea.hbm %s9, %s2739
          %s2741 = sshll.u32 %s2731, 4
          %s2742 = int_to_ptr.vmem [resolvable:$true] %s2741
          %2747 = dma.vmem_to_hbm [thread:$0]  %s2742, 2048, %s2740, %s2728, 128, 128, 8
        $region72: #{tpu_custom_call.1} parent=55 // pred_fallthru
          _
      $region56: #{tpu_custom_call.1} parent=5 // pred_fallthru
        _
      %p2748 = scmp.le.s32.totalorder 2, %s20
      // Predicated region
      $region73: #{tpu_custom_call.1} parent=5 // pred_check
        %p2749 = pneg %p2748
      $region74: #{tpu_custom_call.1} parent=5 // pred_check_branch
        %2751 = sbr.rel (%p2749) target = $region76
      $region75: #{tpu_custom_call.1} parent=5 // pred_region
        %s2752 = ssub.s32 %s20, 2
        // Predicated region
        $region77: #{tpu_custom_call.1} parent=75 // pred_check
          %p2753 = pneg %p243
        $region78: #{tpu_custom_call.1} parent=75 // pred_check_branch
          %2755 = sbr.rel (%p2753) target = $region80
        $region79: #{tpu_custom_call.1} parent=75 // pred_region
          %s2756 = sand.u32 %s228, 1
          %s2757 = scalar_lea.sflag [#allocation4], %s2756
          %s2758 = sand.u32 %s228, 1
          %s2759 = smul.addr %s2758, 128
          %s2760 = scalar_lea.vmem [#allocation8], %s2759
          %2761 = dma.done %s2757, 2048
        $region80: #{tpu_custom_call.1} parent=75 // pred_fallthru
          _
      $region76: #{tpu_custom_call.1} parent=5 // pred_fallthru
        _
    $region6: #{tpu_custom_call.1} parent=1 // loop_footer
      %s24 = sadd.s32 1, %s20
    $region7: #{tpu_custom_call.1} parent=1 // loop_footer_branch
      %19 = sbr.rel target = $region3
    $region8: #{tpu_custom_call.1} parent=1 // loop_exit
      _
    %2762 = vsyncpa [#allocation3], 1
    %s2763 = scalar_lea.sflag [#allocation3], 1
    %2764 = vsyncpa %s2763, 1
    %2765 = vsyncpa [#allocation6], 1
    %2766 = vsyncpa [#allocation4], 1
    %s2767 = scalar_lea.sflag [#allocation4], 1
    %2768 = vsyncpa %s2767, 1

</llo_original>
